<compile_context>
chip_gen: v5e
topology: v5e:2x2
jax: 0.10.0
libtpu: 0.0.40
codegen_flags: <defaults>
</compile_context>

<pallas_src>
import functools

import numpy as np
import jax
import jax.numpy as jnp
from jax.experimental import pallas as pl
from jax.experimental.pallas import tpu as pltpu


def _ceil_to(x, m):
    return -(-x // m) * m


# ----------------------------- anchor helpers (numpy glue) -------------------
def generate_anchor_base(base_size=16, ratios=(0.5, 1, 2), anchor_scales=(4, 16, 32)):
    anchor_base = np.zeros((len(ratios) * len(anchor_scales), 4), dtype=np.float32)
    for i in range(len(ratios)):
        for j in range(len(anchor_scales)):
            h = base_size * anchor_scales[j] * np.sqrt(ratios[i])
            w = base_size * anchor_scales[j] * np.sqrt(1.0 / ratios[i])
            idx = i * len(anchor_scales) + j
            anchor_base[idx, 0] = -h / 2.0
            anchor_base[idx, 1] = -w / 2.0
            anchor_base[idx, 2] = h / 2.0
            anchor_base[idx, 3] = w / 2.0
    return anchor_base


def _enumerate_shifted_anchor(anchor_base, feat_stride, height, width):
    shift_x = np.arange(0, width * feat_stride, feat_stride)
    shift_y = np.arange(0, height * feat_stride, feat_stride)
    shift_x, shift_y = np.meshgrid(shift_x, shift_y)
    shift = np.stack((shift_x.ravel(), shift_y.ravel(),
                      shift_x.ravel(), shift_y.ravel()), axis=1).astype(np.float32)
    A = anchor_base.shape[0]
    K = shift.shape[0]
    anchor = anchor_base.reshape((1, A, 4)) + shift.reshape((K, 1, 4))
    return anchor.reshape((K * A, 4)).astype(np.float32)


# ----------------------------- Buffered(1) support probe ----------------------
_BUFFERED1_SUPPORT = None


def _buffered1_supported():
    """Probe once whether pipeline_mode=pl.Buffered(1) (single-buffered
    grid-invariant operands) is usable with this Pallas build."""
    global _BUFFERED1_SUPPORT
    if _BUFFERED1_SUPPORT is None:
        try:
            def k(w_ref, x_ref, o_ref):
                o_ref[...] = x_ref[...] + w_ref[...]

            f = pl.pallas_call(
                k, grid=(2,),
                in_specs=[pl.BlockSpec((8, 128), lambda i: (0, 0),
                                       pipeline_mode=pl.Buffered(1)),
                          pl.BlockSpec((8, 128), lambda i: (i, 0))],
                out_specs=pl.BlockSpec((8, 128), lambda i: (i, 0)),
                out_shape=jax.ShapeDtypeStruct((16, 128), jnp.float32))
            w = jnp.ones((8, 128), jnp.float32)
            x = jnp.arange(16 * 128, dtype=jnp.float32).reshape(16, 128)
            got = np.asarray(f(w, x))
            _BUFFERED1_SUPPORT = bool(np.allclose(got, np.asarray(x) + 1.0))
        except Exception:
            _BUFFERED1_SUPPORT = False
    return _BUFFERED1_SUPPORT


# ----------------------------- Pallas kernel ---------------------------------
def _rpn_head_kernel(prev_ref, x_ref, next_ref, yx_ref,
                     w1_ref, b1_ref, wh_ref, bh_ref, o_ref, col_ref,
                     *, H, W, halo, cin, tile_m):
    """One (image, lane-tile) grid step: 3x3 conv + ReLU + fused loc|score heads.

    Layout: channels on sublanes, row-major H*W spatial positions on lanes.
      prev_ref/next_ref : (Cin, halo)      halo-edge views of the same activation
      x_ref             : (Cin, tile_m)    raw bf16 activation tile
      yx_ref            : (2, tile_m)      int32 per-column (y, x) coordinates
      w1_ref            : (Cmid, 9*Cin)    bf16 flattened 3x3 weight (tap-major)
      b1_ref            : (Cmid, 1)        f32
      wh_ref            : (Cout_pad, Cmid) bf16 rows = [loc(4A) | score(2A) | 0]
      bh_ref            : (Cout_pad, 1)    f32
      o_ref             : (Cout_pad, tile_m) f32
      col_ref           : (9*Cin, tile_m)  bf16 scratch (in-kernel im2col)
    """
    # [halo | tile | halo] lane window; lane i represents global position
    # tile_start - halo + i.  All out-of-image reads are masked below.
    win = jnp.concatenate([prev_ref[...], x_ref[...], next_ref[...]], axis=1)
    y = yx_ref[0:1, :]
    x = yx_ref[1:2, :]
    for dy in range(3):
        yy = y + (dy - 1)
        ym = (yy >= 0) & (yy < H)
        for dx in range(3):
            xx = x + (dx - 1)
            m = ym & (xx >= 0) & (xx < W)
            off = (dy - 1) * W + (dx - 1)
            tap = win[:, halo + off: halo + off + tile_m]
            t = dy * 3 + dx
            col_ref[t * cin:(t + 1) * cin, :] = jnp.where(m, tap, jnp.zeros_like(tap))

    # 3x3 "same" conv as one im2col matmul (K = 9*Cin), f32 accumulation.
    h = jnp.dot(w1_ref[...], col_ref[...], preferred_element_type=jnp.float32)
    h = jnp.maximum(h + b1_ref[...], 0.0)
    # Fused 1x1 heads: one matmul, one lane-dense f32 writeback.
    out = jnp.dot(wh_ref[...], h.astype(wh_ref.dtype),
                  preferred_element_type=jnp.float32)
    o_ref[...] = out + bh_ref[...]


def _build_level_call(*, n, cin, cmid, cout_pad, hw_pad, tile_m, halo, H, W,
                      single_buffer_weights):
    r = tile_m // halo
    n_halo_blocks = hw_pad // halo
    grid = (n, hw_pad // tile_m)

    def const_spec(shape):
        idx = lambda ni, j: (0,) * len(shape)
        if single_buffer_weights:
            # Grid-invariant operand: a second pipeline buffer is pure waste.
            return pl.BlockSpec(shape, idx, pipeline_mode=pl.Buffered(1))
        return pl.BlockSpec(shape, idx)

    in_specs = [
        # previous / current / next lane windows of the SAME activation array.
        pl.BlockSpec((None, cin, halo),
                     lambda ni, j: (ni, 0, jnp.maximum(j * r - 1, 0))),
        pl.BlockSpec((None, cin, tile_m), lambda ni, j: (ni, 0, j)),
        pl.BlockSpec((None, cin, halo),
                     lambda ni, j: (ni, 0, jnp.minimum(j * r + r, n_halo_blocks - 1))),
        pl.BlockSpec((2, tile_m), lambda ni, j: (0, j)),        # (y, x) coords
        const_spec((cmid, 9 * cin)),                            # conv1 weight (resident)
        const_spec((cmid, 1)),                                  # conv1 bias
        const_spec((cout_pad, cmid)),                           # fused loc|score weight
        const_spec((cout_pad, 1)),                              # fused bias
    ]
    out_spec = pl.BlockSpec((None, cout_pad, tile_m), lambda ni, j: (ni, 0, j))

    # Explicit VMEM budget (review: v5e default scoped limit ~16 MiB; v7x has
    # only 64 MiB physical per TensorCore).
    bf, f4 = 2, 4
    wbuf = 1 if single_buffer_weights else 2
    est = (2 * cin * tile_m * bf                      # x tile (double-buffered)
           + 2 * 2 * cin * halo * bf                  # halo edges
           + 2 * 8 * tile_m * f4                      # coords (sublane padded)
           + wbuf * (cmid * 9 * cin + cout_pad * cmid) * bf
           + wbuf * (cmid + cout_pad) * 128 * f4      # biases (lane padded)
           + 2 * cout_pad * tile_m * f4               # output (double-buffered)
           + 9 * cin * tile_m * bf                    # im2col scratch
           + cin * (tile_m + 2 * halo) * bf           # window temp
           + 2 * cmid * tile_m * f4)                  # hidden activations / temps
    vmem_limit = int(min(max(2 * est + (8 << 20), 32 << 20), 64 << 20))

    kernel = functools.partial(_rpn_head_kernel, H=H, W=W, halo=halo,
                               cin=cin, tile_m=tile_m)
    return pl.pallas_call(
        kernel,
        grid=grid,
        in_specs=in_specs,
        out_specs=out_spec,
        out_shape=jax.ShapeDtypeStruct((n, cout_pad, hw_pad), jnp.float32),
        scratch_shapes=[pltpu.VMEM((9 * cin, tile_m), jnp.bfloat16)],
        compiler_params=pltpu.CompilerParams(
            dimension_semantics=("parallel", "parallel"),
            vmem_limit_bytes=vmem_limit),
    )


# ----------------------------- module wrapper ---------------------------------
class RPNHeadPallas:
    """JAX/Pallas equivalent of resnet50_fpn_RPNhead.forward (minus NMS proposals)."""

    def __init__(self, in_channels=16, mid_channels=32, ratios=(0.5, 1, 2),
                 anchor_scales=(4, 16, 32), feat_stride=16, mode="training",
                 seed=0, tile_m=1024):
        self.anchor_base = generate_anchor_base(anchor_scales=anchor_scales, ratios=ratios)
        A = self.anchor_base.shape[0]          # 9 anchors
        self.n_anchor = A
        self.in_channels = in_channels
        self.mid_channels = mid_channels
        self.feat_stride = feat_stride
        self.mode = mode
        assert tile_m % 128 == 0
        self.tile_m = tile_m                   # max lane-tile width (adapted per level)
        self._single_buffer_weights = _buffered1_supported()

        # normal_init(m, 0, 0.01): weights ~ N(0, 0.01), biases zero.
        std = 0.01
        k1, k2, k3 = jax.random.split(jax.random.PRNGKey(seed), 3)

        # conv1 master in PyTorch layout (Cmid, Cin, 3, 3), f32.  Kernel uses a
        # bf16 (Cmid, 9*Cin) flattening with column index (dy*3 + dx)*Cin + cin,
        # matching the in-kernel tap order.
        self.w_conv1 = jax.random.normal(
            k1, (mid_channels, in_channels, 3, 3), jnp.float32) * std
        self.w1_flat = jnp.transpose(self.w_conv1, (0, 2, 3, 1)).reshape(
            mid_channels, 9 * in_channels).astype(jnp.bfloat16)
        self.b1 = jnp.zeros((mid_channels, 1), jnp.float32)

        # 1x1 heads in PyTorch output-channel order:
        #   loc:   channel 4*a + d   -> view(n, -1, 4)
        #   score: channel 2*a + c   -> view(n, -1, 2)
        self.w_loc = jax.random.normal(k3, (4 * A, mid_channels), jnp.float32) * std
        self.w_score = jax.random.normal(k2, (2 * A, mid_channels), jnp.float32) * std
        c_out = 6 * A
        self.c_out = c_out
        self.c_out_pad = _ceil_to(c_out, 16)   # 16-row alignment (bf16 sublane packing)
        w_head = jnp.concatenate([self.w_loc, self.w_score], axis=0)
        self.w_head = jnp.pad(
            w_head, ((0, self.c_out_pad - c_out), (0, 0))).astype(jnp.bfloat16)
        self.b_head = jnp.zeros((self.c_out_pad, 1), jnp.float32)

        self._forward = jax.jit(self._forward_impl)

    # ---- jitted dense forward: per-level pallas_call (in-kernel taps) --------
    def _forward_impl(self, w1_flat, b1, w_head, b_head, x_tuple):
        A = self.n_anchor
        rpn_locs, rpn_scores = [], []
        for p in x_tuple:
            n, cin, h, w = p.shape
            assert cin == self.in_channels
            hw = h * w
            halo = _ceil_to(w + 1, 128)        # covers the +/-(W+1) tap offsets
            tile = max(halo, min(self.tile_m, _ceil_to(hw, 128)))
            tile = _ceil_to(tile, halo)
            # Keep the per-step working set well inside VMEM on every generation.
            while tile > halo and \
                    (9 * cin + 2 * cin + 2 * self.c_out_pad) * tile * 4 > (24 << 20):
                tile = max(halo, (tile // halo // 2) * halo)
            hw_pad = _ceil_to(hw, tile)

            x = p.astype(jnp.bfloat16).reshape(n, cin, hw)
            if hw_pad != hw:
                x = jnp.pad(x, ((0, 0), (0, 0), (0, hw_pad - hw)))
            cols = np.arange(hw_pad)
            yx = jnp.asarray(np.stack([cols // w, cols % w]).astype(np.int32))

            call = _build_level_call(
                n=n, cin=cin, cmid=self.mid_channels, cout_pad=self.c_out_pad,
                hw_pad=hw_pad, tile_m=tile, halo=halo, H=h, W=w,
                single_buffer_weights=self._single_buffer_weights)
            # Same activation array passed three times (curr + two halo views).
            slab = call(x, x, x, yx, w1_flat, b1, w_head, b_head)  # (n, Cout_pad, hw_pad)

            sl = jnp.transpose(slab[:, :, :hw], (0, 2, 1))         # (n, hw, Cout_pad)
            rpn_locs.append(sl[:, :, 0:4 * A].reshape(n, hw * A, 4))
            rpn_scores.append(sl[:, :, 4 * A:6 * A].reshape(n, hw * A, 2))
        return rpn_locs, rpn_scores

    def __call__(self, x_list, img_size, scale=1.0):
        x_tuple = tuple(jnp.asarray(p, jnp.float32) for p in x_list)
        rpn_locs, rpn_scores = self._forward(self.w1_flat, self.b1,
                                             self.w_head, self.b_head, x_tuple)

        anchors = []
        for p in x_list:
            h, w = p.shape[2], p.shape[3]
            anchor_k = _enumerate_shifted_anchor(np.array(self.anchor_base),
                                                 self.feat_stride, h, w)
            anchors.append(jnp.asarray(anchor_k)[None, :, :].astype(jnp.float32))

        # TODO(synk): ProposalCreator (loc2bbox + clip + size filter + argsort +
        # NMS + random top-up) has data-dependent shapes and no clean Pallas/TPU
        # equivalent; rois / roi_indices (and the fg-softmax that only feeds it)
        # are not computed.
        rois = None
        roi_indices = None
        return list(rpn_locs), list(rpn_scores), rois, roi_indices, anchors


# ----------------------------- pure-XLA reference (for the check) -------------
def _reference_forward(head, x_list):
    """XLA conv reference with the same bf16 rounding points as the kernel."""
    dn = ("NCHW", "OIHW", "NCHW")
    rd = lambda a: a.astype(jnp.bfloat16).astype(jnp.float32)
    w1 = rd(head.w_conv1)
    wl = rd(head.w_loc)[:, :, None, None]
    ws = rd(head.w_score)[:, :, None, None]
    locs, scores = [], []
    for p in x_list:
        n = p.shape[0]
        h = jax.lax.conv_general_dilated(rd(p.astype(jnp.float32)), w1, (1, 1), "SAME",
                                         dimension_numbers=dn,
                                         precision=jax.lax.Precision.HIGHEST)
        h = rd(jnp.maximum(h, 0.0))    # conv1 bias is zero-initialized
        loc = jax.lax.conv_general_dilated(h, wl, (1, 1), "VALID", dimension_numbers=dn,
                                           precision=jax.lax.Precision.HIGHEST)
        sco = jax.lax.conv_general_dilated(h, ws, (1, 1), "VALID", dimension_numbers=dn,
                                           precision=jax.lax.Precision.HIGHEST)
        locs.append(jnp.transpose(loc, (0, 2, 3, 1)).reshape(n, -1, 4))
        scores.append(jnp.transpose(sco, (0, 2, 3, 1)).reshape(n, -1, 2))
    return locs, scores


# ----------------------------- demo / smoke test ------------------------------
if __name__ == "__main__":
    key = jax.random.PRNGKey(0)
    k1, k2 = jax.random.split(key)

    N, Cin = 2, 16
    # Two FPN levels (small shapes), PyTorch NCHW convention.
    x_list = [
        jax.random.normal(k1, (N, Cin, 16, 16), jnp.float32),
        jax.random.normal(k2, (N, Cin, 8, 8), jnp.float32),
    ]
    img_size = (256, 256)

    head = RPNHeadPallas(in_channels=Cin, mid_channels=32)
    rpn_locs, rpn_scores, rois, roi_indices, anchors = head(x_list, img_size)
    jax.block_until_ready((rpn_locs, rpn_scores, anchors))

    # Shape sanity (9 anchors per location), matching the PyTorch views.
    assert rpn_locs[0].shape == (N, 16 * 16 * 9, 4)
    assert rpn_scores[0].shape == (N, 16 * 16 * 9, 2)
    assert rpn_locs[1].shape == (N, 8 * 8 * 9, 4)
    assert rpn_scores[1].shape == (N, 8 * 8 * 9, 2)
    assert anchors[1].shape == (1, 8 * 8 * 9, 4)

    # Numerical check against a bf16-faithful pure-XLA conv reference.
    ref_locs, ref_scores = _reference_forward(head, x_list)
    for got, ref in zip(rpn_locs, ref_locs):
        np.testing.assert_allclose(np.asarray(got), np.asarray(ref),
                                   rtol=2e-2, atol=1e-3)
    for got, ref in zip(rpn_scores, ref_scores):
        np.testing.assert_allclose(np.asarray(got), np.asarray(ref),
                                   rtol=2e-2, atol=1e-3)

    print("KERNEL_OK")
</pallas_src>

<mosaic_0001>
module attributes {stable_mosaic.version = 11 : i64} {
  func.func @k(%arg0: i32, %arg1: memref<8x128xf32, #tpu.memory_space<vmem>>, %arg2: memref<8x128xf32, #tpu.memory_space<vmem>>, %arg3: memref<8x128xf32, #tpu.memory_space<vmem>>) attributes {dimension_semantics = [#tpu.dimension_semantics<arbitrary>], iteration_bounds = array<i64: 2>, scalar_prefetch = 0 : i64, scratch_operands = 0 : i64, tpu.core_type = #tpu.core_type<tc>, window_params = [{pipeline_mode = #tpu.pipeline_mode<synchronous>, transform_indices = @transform_0, window_bounds = array<i64: 8, 128>}, {transform_indices = @transform_1, window_bounds = array<i64: 8, 128>}, {transform_indices = @transform_2, window_bounds = array<i64: 8, 128>}]} {
    %c0 = arith.constant 0 : index
    %c0_0 = arith.constant 0 : index
    %0 = vector.load %arg2[%c0, %c0_0] : memref<8x128xf32, #tpu.memory_space<vmem>>, vector<8x128xf32>
    %c0_1 = arith.constant 0 : index
    %c0_2 = arith.constant 0 : index
    %1 = vector.load %arg1[%c0_1, %c0_2] : memref<8x128xf32, #tpu.memory_space<vmem>>, vector<8x128xf32>
    %2 = arith.addf %0, %1 : vector<8x128xf32>
    %c0_3 = arith.constant 0 : index
    %c0_4 = arith.constant 0 : index
    %3 = vector.load %arg3[%c0_3, %c0_4] : memref<8x128xf32, #tpu.memory_space<vmem>>, vector<8x128xf32>
    tpu.vector_store %arg3[%c0_3, %c0_4], %2 {strides = array<i32>} : memref<8x128xf32, #tpu.memory_space<vmem>>, vector<8x128xf32>,
    return
  }
  func.func @transform_0(%arg0: i32) -> (i32, i32) {
    %c0_i32 = arith.constant 0 : i32
    %c0_i32_0 = arith.constant 0 : i32
    %c0_i32_1 = arith.constant 0 : i32
    return %c0_i32, %c0_i32_0 : i32, i32
  }
  func.func @transform_1(%arg0: i32) -> (i32, i32) {
    %c0_i32 = arith.constant 0 : i32
    %c0_i32_0 = arith.constant 0 : i32
    return %arg0, %c0_i32 : i32, i32
  }
  func.func @transform_2(%arg0: i32) -> (i32, i32) {
    %c0_i32 = arith.constant 0 : i32
    %c0_i32_0 = arith.constant 0 : i32
    return %arg0, %c0_i32 : i32, i32
  }
}

module attributes {stable_mosaic.version = 11 : i64} {
  func.func @_rpn_head_kernel(%arg0: i32, %arg1: i32, %arg2: memref<1x16x128xbf16, #tpu.memory_space<vmem>>, %arg3: memref<1x16x256xbf16, #tpu.memory_space<vmem>>, %arg4: memref<1x16x128xbf16, #tpu.memory_space<vmem>>, %arg5: memref<2x256xi32, #tpu.memory_space<vmem>>, %arg6: memref<32x144xbf16, #tpu.memory_space<vmem>>, %arg7: memref<32x1xf32, #tpu.memory_space<vmem>>, %arg8: memref<64x32xbf16, #tpu.memory_space<vmem>>, %arg9: memref<64x1xf32, #tpu.memory_space<vmem>>, %arg10: memref<1x64x256xf32, #tpu.memory_space<vmem>>, %arg11: memref<144x256xbf16, #tpu.memory_space<vmem>>) attributes {dimension_semantics = [#tpu.dimension_semantics<parallel>, #tpu.dimension_semantics<parallel>], iteration_bounds = array<i64: 2, 1>, scalar_prefetch = 0 : i64, scratch_operands = 1 : i64, tpu.core_type = #tpu.core_type<tc>, window_params = [{transform_indices = @transform_0, window_bounds = array<i64: 1, 16, 128>}, {transform_indices = @transform_1, window_bounds = array<i64: 1, 16, 256>}, {transform_indices = @transform_2, window_bounds = array<i64: 1, 16, 128>}, {transform_indices = @transform_3, window_bounds = array<i64: 2, 256>}, {pipeline_mode = #tpu.pipeline_mode<synchronous>, transform_indices = @transform_4, window_bounds = array<i64: 32, 144>}, {pipeline_mode = #tpu.pipeline_mode<synchronous>, transform_indices = @transform_5, window_bounds = array<i64: 32, 1>}, {pipeline_mode = #tpu.pipeline_mode<synchronous>, transform_indices = @transform_6, window_bounds = array<i64: 64, 32>}, {pipeline_mode = #tpu.pipeline_mode<synchronous>, transform_indices = @transform_7, window_bounds = array<i64: 64, 1>}, {transform_indices = @transform_8, window_bounds = array<i64: 1, 64, 256>}]} {
    %c0 = arith.constant 0 : index
    %c0_0 = arith.constant 0 : index
    %c0_1 = arith.constant 0 : index
    %0 = vector.load %arg2[%c0, %c0_0, %c0_1] : memref<1x16x128xbf16, #tpu.memory_space<vmem>>, vector<1x16x128xbf16>
    %1 = vector.shape_cast %0 : vector<1x16x128xbf16> to vector<16x128xbf16>
    %c0_2 = arith.constant 0 : index
    %c0_3 = arith.constant 0 : index
    %c0_4 = arith.constant 0 : index
    %2 = vector.load %arg3[%c0_2, %c0_3, %c0_4] : memref<1x16x256xbf16, #tpu.memory_space<vmem>>, vector<1x16x256xbf16>
    %3 = vector.shape_cast %2 : vector<1x16x256xbf16> to vector<16x256xbf16>
    %c0_5 = arith.constant 0 : index
    %c0_6 = arith.constant 0 : index
    %c0_7 = arith.constant 0 : index
    %4 = vector.load %arg4[%c0_5, %c0_6, %c0_7] : memref<1x16x128xbf16, #tpu.memory_space<vmem>>, vector<1x16x128xbf16>
    %5 = vector.shape_cast %4 : vector<1x16x128xbf16> to vector<16x128xbf16>
    %6 = tpu.concatenate %1, %3, %5 in 1 : vector<16x128xbf16>, vector<16x256xbf16>, vector<16x128xbf16> -> vector<16x512xbf16>
    %c0_8 = arith.constant 0 : index
    %c0_9 = arith.constant 0 : index
    %7 = vector.load %arg5[%c0_8, %c0_9] : memref<2x256xi32, #tpu.memory_space<vmem>>, vector<1x256xi32>
    %c1 = arith.constant 1 : index
    %c0_10 = arith.constant 0 : index
    %8 = vector.load %arg5[%c1, %c0_10] : memref<2x256xi32, #tpu.memory_space<vmem>>, vector<1x256xi32>
    %c-1_i32 = arith.constant -1 : i32
    %9 = vector.broadcast %c-1_i32 : i32 to vector<1x256xi32>
    %10 = arith.addi %7, %9 : vector<1x256xi32>
    %c0_i32 = arith.constant 0 : i32
    %11 = vector.broadcast %c0_i32 : i32 to vector<1x256xi32>
    %12 = arith.cmpi sge, %10, %11 : vector<1x256xi32>
    %c16_i32 = arith.constant 16 : i32
    %13 = vector.broadcast %c16_i32 : i32 to vector<1x256xi32>
    %14 = arith.cmpi slt, %10, %13 : vector<1x256xi32>
    %15 = arith.andi %12, %14 : vector<1x256xi1>
    %c-1_i32_11 = arith.constant -1 : i32
    %16 = vector.broadcast %c-1_i32_11 : i32 to vector<1x256xi32>
    %17 = arith.addi %8, %16 : vector<1x256xi32>
    %c0_i32_12 = arith.constant 0 : i32
    %18 = vector.broadcast %c0_i32_12 : i32 to vector<1x256xi32>
    %19 = arith.cmpi sge, %17, %18 : vector<1x256xi32>
    %20 = arith.andi %15, %19 : vector<1x256xi1>
    %c16_i32_13 = arith.constant 16 : i32
    %21 = vector.broadcast %c16_i32_13 : i32 to vector<1x256xi32>
    %22 = arith.cmpi slt, %17, %21 : vector<1x256xi32>
    %23 = arith.andi %20, %22 : vector<1x256xi1>
    %24 = vector.extract_strided_slice %6 {offsets = [0, 111], sizes = [16, 256], strides = [1, 1]} : vector<16x512xbf16> to vector<16x256xbf16>
    %cst = arith.constant 0.000000e+00 : bf16
    %25 = vector.broadcast %cst : bf16 to vector<16x256xbf16>
    %26 = vector.shape_cast %23 : vector<1x256xi1> to vector<1x256xi1>
    %27 = vector.broadcast %26 : vector<1x256xi1> to vector<16x256xi1>
    %28 = arith.select %27, %24, %25 : vector<16x256xi1>, vector<16x256xbf16>
    %c0_14 = arith.constant 0 : index
    %c0_15 = arith.constant 0 : index
    %29 = vector.load %arg11[%c0_14, %c0_15] : memref<144x256xbf16, #tpu.memory_space<vmem>>, vector<16x256xbf16>
    tpu.vector_store %arg11[%c0_14, %c0_15], %28 {strides = array<i32>} : memref<144x256xbf16, #tpu.memory_space<vmem>>, vector<16x256xbf16>,
    %c0_i32_16 = arith.constant 0 : i32
    %30 = vector.broadcast %c0_i32_16 : i32 to vector<1x256xi32>
    %31 = arith.addi %8, %30 : vector<1x256xi32>
    %c0_i32_17 = arith.constant 0 : i32
    %32 = vector.broadcast %c0_i32_17 : i32 to vector<1x256xi32>
    %33 = arith.cmpi sge, %31, %32 : vector<1x256xi32>
    %34 = arith.andi %15, %33 : vector<1x256xi1>
    %c16_i32_18 = arith.constant 16 : i32
    %35 = vector.broadcast %c16_i32_18 : i32 to vector<1x256xi32>
    %36 = arith.cmpi slt, %31, %35 : vector<1x256xi32>
    %37 = arith.andi %34, %36 : vector<1x256xi1>
    %38 = vector.extract_strided_slice %6 {offsets = [0, 112], sizes = [16, 256], strides = [1, 1]} : vector<16x512xbf16> to vector<16x256xbf16>
    %cst_19 = arith.constant 0.000000e+00 : bf16
    %39 = vector.broadcast %cst_19 : bf16 to vector<16x256xbf16>
    %40 = vector.shape_cast %37 : vector<1x256xi1> to vector<1x256xi1>
    %41 = vector.broadcast %40 : vector<1x256xi1> to vector<16x256xi1>
    %42 = arith.select %41, %38, %39 : vector<16x256xi1>, vector<16x256xbf16>
    %c16 = arith.constant 16 : index
    %c0_20 = arith.constant 0 : index
    %43 = vector.load %arg11[%c16, %c0_20] : memref<144x256xbf16, #tpu.memory_space<vmem>>, vector<16x256xbf16>
    tpu.vector_store %arg11[%c16, %c0_20], %42 {strides = array<i32>} : memref<144x256xbf16, #tpu.memory_space<vmem>>, vector<16x256xbf16>,
    %c1_i32 = arith.constant 1 : i32
    %44 = vector.broadcast %c1_i32 : i32 to vector<1x256xi32>
    %45 = arith.addi %8, %44 : vector<1x256xi32>
    %c0_i32_21 = arith.constant 0 : i32
    %46 = vector.broadcast %c0_i32_21 : i32 to vector<1x256xi32>
    %47 = arith.cmpi sge, %45, %46 : vector<1x256xi32>
    %48 = arith.andi %15, %47 : vector<1x256xi1>
    %c16_i32_22 = arith.constant 16 : i32
    %49 = vector.broadcast %c16_i32_22 : i32 to vector<1x256xi32>
    %50 = arith.cmpi slt, %45, %49 : vector<1x256xi32>
    %51 = arith.andi %48, %50 : vector<1x256xi1>
    %52 = vector.extract_strided_slice %6 {offsets = [0, 113], sizes = [16, 256], strides = [1, 1]} : vector<16x512xbf16> to vector<16x256xbf16>
    %cst_23 = arith.constant 0.000000e+00 : bf16
    %53 = vector.broadcast %cst_23 : bf16 to vector<16x256xbf16>
    %54 = vector.shape_cast %51 : vector<1x256xi1> to vector<1x256xi1>
    %55 = vector.broadcast %54 : vector<1x256xi1> to vector<16x256xi1>
    %56 = arith.select %55, %52, %53 : vector<16x256xi1>, vector<16x256xbf16>
    %c32 = arith.constant 32 : index
    %c0_24 = arith.constant 0 : index
    %57 = vector.load %arg11[%c32, %c0_24] : memref<144x256xbf16, #tpu.memory_space<vmem>>, vector<16x256xbf16>
    tpu.vector_store %arg11[%c32, %c0_24], %56 {strides = array<i32>} : memref<144x256xbf16, #tpu.memory_space<vmem>>, vector<16x256xbf16>,
    %c0_i32_25 = arith.constant 0 : i32
    %58 = vector.broadcast %c0_i32_25 : i32 to vector<1x256xi32>
    %59 = arith.addi %7, %58 : vector<1x256xi32>
    %c0_i32_26 = arith.constant 0 : i32
    %60 = vector.broadcast %c0_i32_26 : i32 to vector<1x256xi32>
    %61 = arith.cmpi sge, %59, %60 : vector<1x256xi32>
    %c16_i32_27 = arith.constant 16 : i32
    %62 = vector.broadcast %c16_i32_27 : i32 to vector<1x256xi32>
    %63 = arith.cmpi slt, %59, %62 : vector<1x256xi32>
    %64 = arith.andi %61, %63 : vector<1x256xi1>
    %c-1_i32_28 = arith.constant -1 : i32
    %65 = vector.broadcast %c-1_i32_28 : i32 to vector<1x256xi32>
    %66 = arith.addi %8, %65 : vector<1x256xi32>
    %c0_i32_29 = arith.constant 0 : i32
    %67 = vector.broadcast %c0_i32_29 : i32 to vector<1x256xi32>
    %68 = arith.cmpi sge, %66, %67 : vector<1x256xi32>
    %69 = arith.andi %64, %68 : vector<1x256xi1>
    %c16_i32_30 = arith.constant 16 : i32
    %70 = vector.broadcast %c16_i32_30 : i32 to vector<1x256xi32>
    %71 = arith.cmpi slt, %66, %70 : vector<1x256xi32>
    %72 = arith.andi %69, %71 : vector<1x256xi1>
    %73 = vector.extract_strided_slice %6 {offsets = [0, 127], sizes = [16, 256], strides = [1, 1]} : vector<16x512xbf16> to vector<16x256xbf16>
    %cst_31 = arith.constant 0.000000e+00 : bf16
    %74 = vector.broadcast %cst_31 : bf16 to vector<16x256xbf16>
    %75 = vector.shape_cast %72 : vector<1x256xi1> to vector<1x256xi1>
    %76 = vector.broadcast %75 : vector<1x256xi1> to vector<16x256xi1>
    %77 = arith.select %76, %73, %74 : vector<16x256xi1>, vector<16x256xbf16>
    %c48 = arith.constant 48 : index
    %c0_32 = arith.constant 0 : index
    %78 = vector.load %arg11[%c48, %c0_32] : memref<144x256xbf16, #tpu.memory_space<vmem>>, vector<16x256xbf16>
    tpu.vector_store %arg11[%c48, %c0_32], %77 {strides = array<i32>} : memref<144x256xbf16, #tpu.memory_space<vmem>>, vector<16x256xbf16>,
    %c0_i32_33 = arith.constant 0 : i32
    %79 = vector.broadcast %c0_i32_33 : i32 to vector<1x256xi32>
    %80 = arith.addi %8, %79 : vector<1x256xi32>
    %c0_i32_34 = arith.constant 0 : i32
    %81 = vector.broadcast %c0_i32_34 : i32 to vector<1x256xi32>
    %82 = arith.cmpi sge, %80, %81 : vector<1x256xi32>
    %83 = arith.andi %64, %82 : vector<1x256xi1>
    %c16_i32_35 = arith.constant 16 : i32
    %84 = vector.broadcast %c16_i32_35 : i32 to vector<1x256xi32>
    %85 = arith.cmpi slt, %80, %84 : vector<1x256xi32>
    %86 = arith.andi %83, %85 : vector<1x256xi1>
    %87 = vector.extract_strided_slice %6 {offsets = [0, 128], sizes = [16, 256], strides = [1, 1]} : vector<16x512xbf16> to vector<16x256xbf16>
    %cst_36 = arith.constant 0.000000e+00 : bf16
    %88 = vector.broadcast %cst_36 : bf16 to vector<16x256xbf16>
    %89 = vector.shape_cast %86 : vector<1x256xi1> to vector<1x256xi1>
    %90 = vector.broadcast %89 : vector<1x256xi1> to vector<16x256xi1>
    %91 = arith.select %90, %87, %88 : vector<16x256xi1>, vector<16x256xbf16>
    %c64 = arith.constant 64 : index
    %c0_37 = arith.constant 0 : index
    %92 = vector.load %arg11[%c64, %c0_37] : memref<144x256xbf16, #tpu.memory_space<vmem>>, vector<16x256xbf16>
    tpu.vector_store %arg11[%c64, %c0_37], %91 {strides = array<i32>} : memref<144x256xbf16, #tpu.memory_space<vmem>>, vector<16x256xbf16>,
    %c1_i32_38 = arith.constant 1 : i32
    %93 = vector.broadcast %c1_i32_38 : i32 to vector<1x256xi32>
    %94 = arith.addi %8, %93 : vector<1x256xi32>
    %c0_i32_39 = arith.constant 0 : i32
    %95 = vector.broadcast %c0_i32_39 : i32 to vector<1x256xi32>
    %96 = arith.cmpi sge, %94, %95 : vector<1x256xi32>
    %97 = arith.andi %64, %96 : vector<1x256xi1>
    %c16_i32_40 = arith.constant 16 : i32
    %98 = vector.broadcast %c16_i32_40 : i32 to vector<1x256xi32>
    %99 = arith.cmpi slt, %94, %98 : vector<1x256xi32>
    %100 = arith.andi %97, %99 : vector<1x256xi1>
    %101 = vector.extract_strided_slice %6 {offsets = [0, 129], sizes = [16, 256], strides = [1, 1]} : vector<16x512xbf16> to vector<16x256xbf16>
    %cst_41 = arith.constant 0.000000e+00 : bf16
    %102 = vector.broadcast %cst_41 : bf16 to vector<16x256xbf16>
    %103 = vector.shape_cast %100 : vector<1x256xi1> to vector<1x256xi1>
    %104 = vector.broadcast %103 : vector<1x256xi1> to vector<16x256xi1>
    %105 = arith.select %104, %101, %102 : vector<16x256xi1>, vector<16x256xbf16>
    %c80 = arith.constant 80 : index
    %c0_42 = arith.constant 0 : index
    %106 = vector.load %arg11[%c80, %c0_42] : memref<144x256xbf16, #tpu.memory_space<vmem>>, vector<16x256xbf16>
    tpu.vector_store %arg11[%c80, %c0_42], %105 {strides = array<i32>} : memref<144x256xbf16, #tpu.memory_space<vmem>>, vector<16x256xbf16>,
    %c1_i32_43 = arith.constant 1 : i32
    %107 = vector.broadcast %c1_i32_43 : i32 to vector<1x256xi32>
    %108 = arith.addi %7, %107 : vector<1x256xi32>
    %c0_i32_44 = arith.constant 0 : i32
    %109 = vector.broadcast %c0_i32_44 : i32 to vector<1x256xi32>
    %110 = arith.cmpi sge, %108, %109 : vector<1x256xi32>
    %c16_i32_45 = arith.constant 16 : i32
    %111 = vector.broadcast %c16_i32_45 : i32 to vector<1x256xi32>
    %112 = arith.cmpi slt, %108, %111 : vector<1x256xi32>
    %113 = arith.andi %110, %112 : vector<1x256xi1>
    %c-1_i32_46 = arith.constant -1 : i32
    %114 = vector.broadcast %c-1_i32_46 : i32 to vector<1x256xi32>
    %115 = arith.addi %8, %114 : vector<1x256xi32>
    %c0_i32_47 = arith.constant 0 : i32
    %116 = vector.broadcast %c0_i32_47 : i32 to vector<1x256xi32>
    %117 = arith.cmpi sge, %115, %116 : vector<1x256xi32>
    %118 = arith.andi %113, %117 : vector<1x256xi1>
    %c16_i32_48 = arith.constant 16 : i32
    %119 = vector.broadcast %c16_i32_48 : i32 to vector<1x256xi32>
    %120 = arith.cmpi slt, %115, %119 : vector<1x256xi32>
    %121 = arith.andi %118, %120 : vector<1x256xi1>
    %122 = vector.extract_strided_slice %6 {offsets = [0, 143], sizes = [16, 256], strides = [1, 1]} : vector<16x512xbf16> to vector<16x256xbf16>
    %cst_49 = arith.constant 0.000000e+00 : bf16
    %123 = vector.broadcast %cst_49 : bf16 to vector<16x256xbf16>
    %124 = vector.shape_cast %121 : vector<1x256xi1> to vector<1x256xi1>
    %125 = vector.broadcast %124 : vector<1x256xi1> to vector<16x256xi1>
    %126 = arith.select %125, %122, %123 : vector<16x256xi1>, vector<16x256xbf16>
    %c96 = arith.constant 96 : index
    %c0_50 = arith.constant 0 : index
    %127 = vector.load %arg11[%c96, %c0_50] : memref<144x256xbf16, #tpu.memory_space<vmem>>, vector<16x256xbf16>
    tpu.vector_store %arg11[%c96, %c0_50], %126 {strides = array<i32>} : memref<144x256xbf16, #tpu.memory_space<vmem>>, vector<16x256xbf16>,
    %c0_i32_51 = arith.constant 0 : i32
    %128 = vector.broadcast %c0_i32_51 : i32 to vector<1x256xi32>
    %129 = arith.addi %8, %128 : vector<1x256xi32>
    %c0_i32_52 = arith.constant 0 : i32
    %130 = vector.broadcast %c0_i32_52 : i32 to vector<1x256xi32>
    %131 = arith.cmpi sge, %129, %130 : vector<1x256xi32>
    %132 = arith.andi %113, %131 : vector<1x256xi1>
    %c16_i32_53 = arith.constant 16 : i32
    %133 = vector.broadcast %c16_i32_53 : i32 to vector<1x256xi32>
    %134 = arith.cmpi slt, %129, %133 : vector<1x256xi32>
    %135 = arith.andi %132, %134 : vector<1x256xi1>
    %136 = vector.extract_strided_slice %6 {offsets = [0, 144], sizes = [16, 256], strides = [1, 1]} : vector<16x512xbf16> to vector<16x256xbf16>
    %cst_54 = arith.constant 0.000000e+00 : bf16
    %137 = vector.broadcast %cst_54 : bf16 to vector<16x256xbf16>
    %138 = vector.shape_cast %135 : vector<1x256xi1> to vector<1x256xi1>
    %139 = vector.broadcast %138 : vector<1x256xi1> to vector<16x256xi1>
    %140 = arith.select %139, %136, %137 : vector<16x256xi1>, vector<16x256xbf16>
    %c112 = arith.constant 112 : index
    %c0_55 = arith.constant 0 : index
    %141 = vector.load %arg11[%c112, %c0_55] : memref<144x256xbf16, #tpu.memory_space<vmem>>, vector<16x256xbf16>
    tpu.vector_store %arg11[%c112, %c0_55], %140 {strides = array<i32>} : memref<144x256xbf16, #tpu.memory_space<vmem>>, vector<16x256xbf16>,
    %c1_i32_56 = arith.constant 1 : i32
    %142 = vector.broadcast %c1_i32_56 : i32 to vector<1x256xi32>
    %143 = arith.addi %8, %142 : vector<1x256xi32>
    %c0_i32_57 = arith.constant 0 : i32
    %144 = vector.broadcast %c0_i32_57 : i32 to vector<1x256xi32>
    %145 = arith.cmpi sge, %143, %144 : vector<1x256xi32>
    %146 = arith.andi %113, %145 : vector<1x256xi1>
    %c16_i32_58 = arith.constant 16 : i32
    %147 = vector.broadcast %c16_i32_58 : i32 to vector<1x256xi32>
    %148 = arith.cmpi slt, %143, %147 : vector<1x256xi32>
    %149 = arith.andi %146, %148 : vector<1x256xi1>
    %150 = vector.extract_strided_slice %6 {offsets = [0, 145], sizes = [16, 256], strides = [1, 1]} : vector<16x512xbf16> to vector<16x256xbf16>
    %cst_59 = arith.constant 0.000000e+00 : bf16
    %151 = vector.broadcast %cst_59 : bf16 to vector<16x256xbf16>
    %152 = vector.shape_cast %149 : vector<1x256xi1> to vector<1x256xi1>
    %153 = vector.broadcast %152 : vector<1x256xi1> to vector<16x256xi1>
    %154 = arith.select %153, %150, %151 : vector<16x256xi1>, vector<16x256xbf16>
    %c128 = arith.constant 128 : index
    %c0_60 = arith.constant 0 : index
    %155 = vector.load %arg11[%c128, %c0_60] : memref<144x256xbf16, #tpu.memory_space<vmem>>, vector<16x256xbf16>
    tpu.vector_store %arg11[%c128, %c0_60], %154 {strides = array<i32>} : memref<144x256xbf16, #tpu.memory_space<vmem>>, vector<16x256xbf16>,
    %c0_61 = arith.constant 0 : index
    %c0_62 = arith.constant 0 : index
    %156 = vector.load %arg6[%c0_61, %c0_62] : memref<32x144xbf16, #tpu.memory_space<vmem>>, vector<32x144xbf16>
    %c0_63 = arith.constant 0 : index
    %c0_64 = arith.constant 0 : index
    %157 = vector.load %arg11[%c0_63, %c0_64] : memref<144x256xbf16, #tpu.memory_space<vmem>>, vector<144x256xbf16>
    %cst_65 = arith.constant dense<0.000000e+00> : vector<32x256xf32>
    %158 = tpu.matmul %156, %157, %cst_65 {dimension_numbers = #tpu.dot_dimension_numbers<[1], [0], [0], [1], [0, 0, 1, 1], [], []>} : vector<32x144xbf16>, vector<144x256xbf16>, vector<32x256xf32> -> vector<32x256xf32>
    %c0_66 = arith.constant 0 : index
    %c0_67 = arith.constant 0 : index
    %159 = vector.load %arg7[%c0_66, %c0_67] : memref<32x1xf32, #tpu.memory_space<vmem>>, vector<32x1xf32>
    %160 = vector.broadcast %159 : vector<32x1xf32> to vector<32x256xf32>
    %161 = arith.addf %158, %160 : vector<32x256xf32>
    %cst_68 = arith.constant 0.000000e+00 : f32
    %162 = vector.broadcast %cst_68 : f32 to vector<32x256xf32>
    %163 = arith.maximumf %161, %162 : vector<32x256xf32>
    %c0_69 = arith.constant 0 : index
    %c0_70 = arith.constant 0 : index
    %164 = vector.load %arg8[%c0_69, %c0_70] : memref<64x32xbf16, #tpu.memory_space<vmem>>, vector<64x32xbf16>
    %165 = arith.truncf %163 : vector<32x256xf32> to vector<32x256xbf16>
    %cst_71 = arith.constant dense<0.000000e+00> : vector<64x256xf32>
    %166 = tpu.matmul %164, %165, %cst_71 {dimension_numbers = #tpu.dot_dimension_numbers<[1], [0], [0], [1], [0, 0, 1, 1], [], []>} : vector<64x32xbf16>, vector<32x256xbf16>, vector<64x256xf32> -> vector<64x256xf32>
    %c0_72 = arith.constant 0 : index
    %c0_73 = arith.constant 0 : index
    %167 = vector.load %arg9[%c0_72, %c0_73] : memref<64x1xf32, #tpu.memory_space<vmem>>, vector<64x1xf32>
    %168 = vector.broadcast %167 : vector<64x1xf32> to vector<64x256xf32>
    %169 = arith.addf %166, %168 : vector<64x256xf32>
    %c0_74 = arith.constant 0 : index
    %c0_75 = arith.constant 0 : index
    %c0_76 = arith.constant 0 : index
    %170 = vector.load %arg10[%c0_74, %c0_75, %c0_76] : memref<1x64x256xf32, #tpu.memory_space<vmem>>, vector<1x64x256xf32>
    %171 = vector.shape_cast %170 : vector<1x64x256xf32> to vector<64x256xf32>
    %172 = vector.shape_cast %169 : vector<64x256xf32> to vector<1x64x256xf32>
    tpu.vector_store %arg10[%c0_74, %c0_75, %c0_76], %172 {strides = array<i32>} : memref<1x64x256xf32, #tpu.memory_space<vmem>>, vector<1x64x256xf32>,
    return
  }
  func.func @transform_0(%arg0: i32, %arg1: i32) -> (i32, i32, i32) {
    %c2_i32 = arith.constant 2 : i32
    %0 = arith.muli %arg1, %c2_i32 : i32
    %c1_i32 = arith.constant 1 : i32
    %1 = arith.subi %0, %c1_i32 : i32
    %c0_i32 = arith.constant 0 : i32
    %2 = arith.maxsi %1, %c0_i32 : i32
    %c0_i32_0 = arith.constant 0 : i32
    %c0_i32_1 = arith.constant 0 : i32
    return %arg0, %c0_i32_0, %2 : i32, i32, i32
  }
  func.func @transform_1(%arg0: i32, %arg1: i32) -> (i32, i32, i32) {
    %c0_i32 = arith.constant 0 : i32
    %c0_i32_0 = arith.constant 0 : i32
    return %arg0, %c0_i32, %arg1 : i32, i32, i32
  }
  func.func @transform_2(%arg0: i32, %arg1: i32) -> (i32, i32, i32) {
    %c2_i32 = arith.constant 2 : i32
    %0 = arith.muli %arg1, %c2_i32 : i32
    %c2_i32_0 = arith.constant 2 : i32
    %1 = arith.addi %0, %c2_i32_0 : i32
    %c1_i32 = arith.constant 1 : i32
    %2 = arith.minsi %1, %c1_i32 : i32
    %c0_i32 = arith.constant 0 : i32
    %c0_i32_1 = arith.constant 0 : i32
    return %arg0, %c0_i32, %2 : i32, i32, i32
  }
  func.func @transform_3(%arg0: i32, %arg1: i32) -> (i32, i32) {
    %c0_i32 = arith.constant 0 : i32
    %c0_i32_0 = arith.constant 0 : i32
    return %c0_i32, %arg1 : i32, i32
  }
  func.func @transform_4(%arg0: i32, %arg1: i32) -> (i32, i32) {
    %c0_i32 = arith.constant 0 : i32
    %c0_i32_0 = arith.constant 0 : i32
    %c0_i32_1 = arith.constant 0 : i32
    return %c0_i32, %c0_i32_0 : i32, i32
  }
  func.func @transform_5(%arg0: i32, %arg1: i32) -> (i32, i32) {
    %c0_i32 = arith.constant 0 : i32
    %c0_i32_0 = arith.constant 0 : i32
    %c0_i32_1 = arith.constant 0 : i32
    return %c0_i32, %c0_i32_0 : i32, i32
  }
  func.func @transform_6(%arg0: i32, %arg1: i32) -> (i32, i32) {
    %c0_i32 = arith.constant 0 : i32
    %c0_i32_0 = arith.constant 0 : i32
    %c0_i32_1 = arith.constant 0 : i32
    return %c0_i32, %c0_i32_0 : i32, i32
  }
  func.func @transform_7(%arg0: i32, %arg1: i32) -> (i32, i32) {
    %c0_i32 = arith.constant 0 : i32
    %c0_i32_0 = arith.constant 0 : i32
    %c0_i32_1 = arith.constant 0 : i32
    return %c0_i32, %c0_i32_0 : i32, i32
  }
  func.func @transform_8(%arg0: i32, %arg1: i32) -> (i32, i32, i32) {
    %c0_i32 = arith.constant 0 : i32
    %c0_i32_0 = arith.constant 0 : i32
    return %arg0, %c0_i32, %arg1 : i32, i32, i32
  }
}

module attributes {stable_mosaic.version = 11 : i64} {
  func.func @_rpn_head_kernel(%arg0: i32, %arg1: i32, %arg2: memref<1x16x128xbf16, #tpu.memory_space<vmem>>, %arg3: memref<1x16x128xbf16, #tpu.memory_space<vmem>>, %arg4: memref<1x16x128xbf16, #tpu.memory_space<vmem>>, %arg5: memref<2x128xi32, #tpu.memory_space<vmem>>, %arg6: memref<32x144xbf16, #tpu.memory_space<vmem>>, %arg7: memref<32x1xf32, #tpu.memory_space<vmem>>, %arg8: memref<64x32xbf16, #tpu.memory_space<vmem>>, %arg9: memref<64x1xf32, #tpu.memory_space<vmem>>, %arg10: memref<1x64x128xf32, #tpu.memory_space<vmem>>, %arg11: memref<144x128xbf16, #tpu.memory_space<vmem>>) attributes {dimension_semantics = [#tpu.dimension_semantics<parallel>, #tpu.dimension_semantics<parallel>], iteration_bounds = array<i64: 2, 1>, scalar_prefetch = 0 : i64, scratch_operands = 1 : i64, tpu.core_type = #tpu.core_type<tc>, window_params = [{transform_indices = @transform_0, window_bounds = array<i64: 1, 16, 128>}, {transform_indices = @transform_1, window_bounds = array<i64: 1, 16, 128>}, {transform_indices = @transform_2, window_bounds = array<i64: 1, 16, 128>}, {transform_indices = @transform_3, window_bounds = array<i64: 2, 128>}, {pipeline_mode = #tpu.pipeline_mode<synchronous>, transform_indices = @transform_4, window_bounds = array<i64: 32, 144>}, {pipeline_mode = #tpu.pipeline_mode<synchronous>, transform_indices = @transform_5, window_bounds = array<i64: 32, 1>}, {pipeline_mode = #tpu.pipeline_mode<synchronous>, transform_indices = @transform_6, window_bounds = array<i64: 64, 32>}, {pipeline_mode = #tpu.pipeline_mode<synchronous>, transform_indices = @transform_7, window_bounds = array<i64: 64, 1>}, {transform_indices = @transform_8, window_bounds = array<i64: 1, 64, 128>}]} {
    %c0 = arith.constant 0 : index
    %c0_0 = arith.constant 0 : index
    %c0_1 = arith.constant 0 : index
    %0 = vector.load %arg2[%c0, %c0_0, %c0_1] : memref<1x16x128xbf16, #tpu.memory_space<vmem>>, vector<1x16x128xbf16>
    %1 = vector.shape_cast %0 : vector<1x16x128xbf16> to vector<16x128xbf16>
    %c0_2 = arith.constant 0 : index
    %c0_3 = arith.constant 0 : index
    %c0_4 = arith.constant 0 : index
    %2 = vector.load %arg3[%c0_2, %c0_3, %c0_4] : memref<1x16x128xbf16, #tpu.memory_space<vmem>>, vector<1x16x128xbf16>
    %3 = vector.shape_cast %2 : vector<1x16x128xbf16> to vector<16x128xbf16>
    %c0_5 = arith.constant 0 : index
    %c0_6 = arith.constant 0 : index
    %c0_7 = arith.constant 0 : index
    %4 = vector.load %arg4[%c0_5, %c0_6, %c0_7] : memref<1x16x128xbf16, #tpu.memory_space<vmem>>, vector<1x16x128xbf16>
    %5 = vector.shape_cast %4 : vector<1x16x128xbf16> to vector<16x128xbf16>
    %6 = tpu.concatenate %1, %3, %5 in 1 : vector<16x128xbf16>, vector<16x128xbf16>, vector<16x128xbf16> -> vector<16x384xbf16>
    %c0_8 = arith.constant 0 : index
    %c0_9 = arith.constant 0 : index
    %7 = vector.load %arg5[%c0_8, %c0_9] : memref<2x128xi32, #tpu.memory_space<vmem>>, vector<1x128xi32>
    %c1 = arith.constant 1 : index
    %c0_10 = arith.constant 0 : index
    %8 = vector.load %arg5[%c1, %c0_10] : memref<2x128xi32, #tpu.memory_space<vmem>>, vector<1x128xi32>
    %c-1_i32 = arith.constant -1 : i32
    %9 = vector.broadcast %c-1_i32 : i32 to vector<1x128xi32>
    %10 = arith.addi %7, %9 : vector<1x128xi32>
    %c0_i32 = arith.constant 0 : i32
    %11 = vector.broadcast %c0_i32 : i32 to vector<1x128xi32>
    %12 = arith.cmpi sge, %10, %11 : vector<1x128xi32>
    %c8_i32 = arith.constant 8 : i32
    %13 = vector.broadcast %c8_i32 : i32 to vector<1x128xi32>
    %14 = arith.cmpi slt, %10, %13 : vector<1x128xi32>
    %15 = arith.andi %12, %14 : vector<1x128xi1>
    %c-1_i32_11 = arith.constant -1 : i32
    %16 = vector.broadcast %c-1_i32_11 : i32 to vector<1x128xi32>
    %17 = arith.addi %8, %16 : vector<1x128xi32>
    %c0_i32_12 = arith.constant 0 : i32
    %18 = vector.broadcast %c0_i32_12 : i32 to vector<1x128xi32>
    %19 = arith.cmpi sge, %17, %18 : vector<1x128xi32>
    %20 = arith.andi %15, %19 : vector<1x128xi1>
    %c8_i32_13 = arith.constant 8 : i32
    %21 = vector.broadcast %c8_i32_13 : i32 to vector<1x128xi32>
    %22 = arith.cmpi slt, %17, %21 : vector<1x128xi32>
    %23 = arith.andi %20, %22 : vector<1x128xi1>
    %24 = vector.extract_strided_slice %6 {offsets = [0, 119], sizes = [16, 128], strides = [1, 1]} : vector<16x384xbf16> to vector<16x128xbf16>
    %cst = arith.constant 0.000000e+00 : bf16
    %25 = vector.broadcast %cst : bf16 to vector<16x128xbf16>
    %26 = vector.shape_cast %23 : vector<1x128xi1> to vector<1x128xi1>
    %27 = vector.broadcast %26 : vector<1x128xi1> to vector<16x128xi1>
    %28 = arith.select %27, %24, %25 : vector<16x128xi1>, vector<16x128xbf16>
    %c0_14 = arith.constant 0 : index
    %c0_15 = arith.constant 0 : index
    %29 = vector.load %arg11[%c0_14, %c0_15] : memref<144x128xbf16, #tpu.memory_space<vmem>>, vector<16x128xbf16>
    tpu.vector_store %arg11[%c0_14, %c0_15], %28 {strides = array<i32>} : memref<144x128xbf16, #tpu.memory_space<vmem>>, vector<16x128xbf16>,
    %c0_i32_16 = arith.constant 0 : i32
    %30 = vector.broadcast %c0_i32_16 : i32 to vector<1x128xi32>
    %31 = arith.addi %8, %30 : vector<1x128xi32>
    %c0_i32_17 = arith.constant 0 : i32
    %32 = vector.broadcast %c0_i32_17 : i32 to vector<1x128xi32>
    %33 = arith.cmpi sge, %31, %32 : vector<1x128xi32>
    %34 = arith.andi %15, %33 : vector<1x128xi1>
    %c8_i32_18 = arith.constant 8 : i32
    %35 = vector.broadcast %c8_i32_18 : i32 to vector<1x128xi32>
    %36 = arith.cmpi slt, %31, %35 : vector<1x128xi32>
    %37 = arith.andi %34, %36 : vector<1x128xi1>
    %38 = vector.extract_strided_slice %6 {offsets = [0, 120], sizes = [16, 128], strides = [1, 1]} : vector<16x384xbf16> to vector<16x128xbf16>
    %cst_19 = arith.constant 0.000000e+00 : bf16
    %39 = vector.broadcast %cst_19 : bf16 to vector<16x128xbf16>
    %40 = vector.shape_cast %37 : vector<1x128xi1> to vector<1x128xi1>
    %41 = vector.broadcast %40 : vector<1x128xi1> to vector<16x128xi1>
    %42 = arith.select %41, %38, %39 : vector<16x128xi1>, vector<16x128xbf16>
    %c16 = arith.constant 16 : index
    %c0_20 = arith.constant 0 : index
    %43 = vector.load %arg11[%c16, %c0_20] : memref<144x128xbf16, #tpu.memory_space<vmem>>, vector<16x128xbf16>
    tpu.vector_store %arg11[%c16, %c0_20], %42 {strides = array<i32>} : memref<144x128xbf16, #tpu.memory_space<vmem>>, vector<16x128xbf16>,
    %c1_i32 = arith.constant 1 : i32
    %44 = vector.broadcast %c1_i32 : i32 to vector<1x128xi32>
    %45 = arith.addi %8, %44 : vector<1x128xi32>
    %c0_i32_21 = arith.constant 0 : i32
    %46 = vector.broadcast %c0_i32_21 : i32 to vector<1x128xi32>
    %47 = arith.cmpi sge, %45, %46 : vector<1x128xi32>
    %48 = arith.andi %15, %47 : vector<1x128xi1>
    %c8_i32_22 = arith.constant 8 : i32
    %49 = vector.broadcast %c8_i32_22 : i32 to vector<1x128xi32>
    %50 = arith.cmpi slt, %45, %49 : vector<1x128xi32>
    %51 = arith.andi %48, %50 : vector<1x128xi1>
    %52 = vector.extract_strided_slice %6 {offsets = [0, 121], sizes = [16, 128], strides = [1, 1]} : vector<16x384xbf16> to vector<16x128xbf16>
    %cst_23 = arith.constant 0.000000e+00 : bf16
    %53 = vector.broadcast %cst_23 : bf16 to vector<16x128xbf16>
    %54 = vector.shape_cast %51 : vector<1x128xi1> to vector<1x128xi1>
    %55 = vector.broadcast %54 : vector<1x128xi1> to vector<16x128xi1>
    %56 = arith.select %55, %52, %53 : vector<16x128xi1>, vector<16x128xbf16>
    %c32 = arith.constant 32 : index
    %c0_24 = arith.constant 0 : index
    %57 = vector.load %arg11[%c32, %c0_24] : memref<144x128xbf16, #tpu.memory_space<vmem>>, vector<16x128xbf16>
    tpu.vector_store %arg11[%c32, %c0_24], %56 {strides = array<i32>} : memref<144x128xbf16, #tpu.memory_space<vmem>>, vector<16x128xbf16>,
    %c0_i32_25 = arith.constant 0 : i32
    %58 = vector.broadcast %c0_i32_25 : i32 to vector<1x128xi32>
    %59 = arith.addi %7, %58 : vector<1x128xi32>
    %c0_i32_26 = arith.constant 0 : i32
    %60 = vector.broadcast %c0_i32_26 : i32 to vector<1x128xi32>
    %61 = arith.cmpi sge, %59, %60 : vector<1x128xi32>
    %c8_i32_27 = arith.constant 8 : i32
    %62 = vector.broadcast %c8_i32_27 : i32 to vector<1x128xi32>
    %63 = arith.cmpi slt, %59, %62 : vector<1x128xi32>
    %64 = arith.andi %61, %63 : vector<1x128xi1>
    %c-1_i32_28 = arith.constant -1 : i32
    %65 = vector.broadcast %c-1_i32_28 : i32 to vector<1x128xi32>
    %66 = arith.addi %8, %65 : vector<1x128xi32>
    %c0_i32_29 = arith.constant 0 : i32
    %67 = vector.broadcast %c0_i32_29 : i32 to vector<1x128xi32>
    %68 = arith.cmpi sge, %66, %67 : vector<1x128xi32>
    %69 = arith.andi %64, %68 : vector<1x128xi1>
    %c8_i32_30 = arith.constant 8 : i32
    %70 = vector.broadcast %c8_i32_30 : i32 to vector<1x128xi32>
    %71 = arith.cmpi slt, %66, %70 : vector<1x128xi32>
    %72 = arith.andi %69, %71 : vector<1x128xi1>
    %73 = vector.extract_strided_slice %6 {offsets = [0, 127], sizes = [16, 128], strides = [1, 1]} : vector<16x384xbf16> to vector<16x128xbf16>
    %cst_31 = arith.constant 0.000000e+00 : bf16
    %74 = vector.broadcast %cst_31 : bf16 to vector<16x128xbf16>
    %75 = vector.shape_cast %72 : vector<1x128xi1> to vector<1x128xi1>
    %76 = vector.broadcast %75 : vector<1x128xi1> to vector<16x128xi1>
    %77 = arith.select %76, %73, %74 : vector<16x128xi1>, vector<16x128xbf16>
    %c48 = arith.constant 48 : index
    %c0_32 = arith.constant 0 : index
    %78 = vector.load %arg11[%c48, %c0_32] : memref<144x128xbf16, #tpu.memory_space<vmem>>, vector<16x128xbf16>
    tpu.vector_store %arg11[%c48, %c0_32], %77 {strides = array<i32>} : memref<144x128xbf16, #tpu.memory_space<vmem>>, vector<16x128xbf16>,
    %c0_i32_33 = arith.constant 0 : i32
    %79 = vector.broadcast %c0_i32_33 : i32 to vector<1x128xi32>
    %80 = arith.addi %8, %79 : vector<1x128xi32>
    %c0_i32_34 = arith.constant 0 : i32
    %81 = vector.broadcast %c0_i32_34 : i32 to vector<1x128xi32>
    %82 = arith.cmpi sge, %80, %81 : vector<1x128xi32>
    %83 = arith.andi %64, %82 : vector<1x128xi1>
    %c8_i32_35 = arith.constant 8 : i32
    %84 = vector.broadcast %c8_i32_35 : i32 to vector<1x128xi32>
    %85 = arith.cmpi slt, %80, %84 : vector<1x128xi32>
    %86 = arith.andi %83, %85 : vector<1x128xi1>
    %87 = vector.extract_strided_slice %6 {offsets = [0, 128], sizes = [16, 128], strides = [1, 1]} : vector<16x384xbf16> to vector<16x128xbf16>
    %cst_36 = arith.constant 0.000000e+00 : bf16
    %88 = vector.broadcast %cst_36 : bf16 to vector<16x128xbf16>
    %89 = vector.shape_cast %86 : vector<1x128xi1> to vector<1x128xi1>
    %90 = vector.broadcast %89 : vector<1x128xi1> to vector<16x128xi1>
    %91 = arith.select %90, %87, %88 : vector<16x128xi1>, vector<16x128xbf16>
    %c64 = arith.constant 64 : index
    %c0_37 = arith.constant 0 : index
    %92 = vector.load %arg11[%c64, %c0_37] : memref<144x128xbf16, #tpu.memory_space<vmem>>, vector<16x128xbf16>
    tpu.vector_store %arg11[%c64, %c0_37], %91 {strides = array<i32>} : memref<144x128xbf16, #tpu.memory_space<vmem>>, vector<16x128xbf16>,
    %c1_i32_38 = arith.constant 1 : i32
    %93 = vector.broadcast %c1_i32_38 : i32 to vector<1x128xi32>
    %94 = arith.addi %8, %93 : vector<1x128xi32>
    %c0_i32_39 = arith.constant 0 : i32
    %95 = vector.broadcast %c0_i32_39 : i32 to vector<1x128xi32>
    %96 = arith.cmpi sge, %94, %95 : vector<1x128xi32>
    %97 = arith.andi %64, %96 : vector<1x128xi1>
    %c8_i32_40 = arith.constant 8 : i32
    %98 = vector.broadcast %c8_i32_40 : i32 to vector<1x128xi32>
    %99 = arith.cmpi slt, %94, %98 : vector<1x128xi32>
    %100 = arith.andi %97, %99 : vector<1x128xi1>
    %101 = vector.extract_strided_slice %6 {offsets = [0, 129], sizes = [16, 128], strides = [1, 1]} : vector<16x384xbf16> to vector<16x128xbf16>
    %cst_41 = arith.constant 0.000000e+00 : bf16
    %102 = vector.broadcast %cst_41 : bf16 to vector<16x128xbf16>
    %103 = vector.shape_cast %100 : vector<1x128xi1> to vector<1x128xi1>
    %104 = vector.broadcast %103 : vector<1x128xi1> to vector<16x128xi1>
    %105 = arith.select %104, %101, %102 : vector<16x128xi1>, vector<16x128xbf16>
    %c80 = arith.constant 80 : index
    %c0_42 = arith.constant 0 : index
    %106 = vector.load %arg11[%c80, %c0_42] : memref<144x128xbf16, #tpu.memory_space<vmem>>, vector<16x128xbf16>
    tpu.vector_store %arg11[%c80, %c0_42], %105 {strides = array<i32>} : memref<144x128xbf16, #tpu.memory_space<vmem>>, vector<16x128xbf16>,
    %c1_i32_43 = arith.constant 1 : i32
    %107 = vector.broadcast %c1_i32_43 : i32 to vector<1x128xi32>
    %108 = arith.addi %7, %107 : vector<1x128xi32>
    %c0_i32_44 = arith.constant 0 : i32
    %109 = vector.broadcast %c0_i32_44 : i32 to vector<1x128xi32>
    %110 = arith.cmpi sge, %108, %109 : vector<1x128xi32>
    %c8_i32_45 = arith.constant 8 : i32
    %111 = vector.broadcast %c8_i32_45 : i32 to vector<1x128xi32>
    %112 = arith.cmpi slt, %108, %111 : vector<1x128xi32>
    %113 = arith.andi %110, %112 : vector<1x128xi1>
    %c-1_i32_46 = arith.constant -1 : i32
    %114 = vector.broadcast %c-1_i32_46 : i32 to vector<1x128xi32>
    %115 = arith.addi %8, %114 : vector<1x128xi32>
    %c0_i32_47 = arith.constant 0 : i32
    %116 = vector.broadcast %c0_i32_47 : i32 to vector<1x128xi32>
    %117 = arith.cmpi sge, %115, %116 : vector<1x128xi32>
    %118 = arith.andi %113, %117 : vector<1x128xi1>
    %c8_i32_48 = arith.constant 8 : i32
    %119 = vector.broadcast %c8_i32_48 : i32 to vector<1x128xi32>
    %120 = arith.cmpi slt, %115, %119 : vector<1x128xi32>
    %121 = arith.andi %118, %120 : vector<1x128xi1>
    %122 = vector.extract_strided_slice %6 {offsets = [0, 135], sizes = [16, 128], strides = [1, 1]} : vector<16x384xbf16> to vector<16x128xbf16>
    %cst_49 = arith.constant 0.000000e+00 : bf16
    %123 = vector.broadcast %cst_49 : bf16 to vector<16x128xbf16>
    %124 = vector.shape_cast %121 : vector<1x128xi1> to vector<1x128xi1>
    %125 = vector.broadcast %124 : vector<1x128xi1> to vector<16x128xi1>
    %126 = arith.select %125, %122, %123 : vector<16x128xi1>, vector<16x128xbf16>
    %c96 = arith.constant 96 : index
    %c0_50 = arith.constant 0 : index
    %127 = vector.load %arg11[%c96, %c0_50] : memref<144x128xbf16, #tpu.memory_space<vmem>>, vector<16x128xbf16>
    tpu.vector_store %arg11[%c96, %c0_50], %126 {strides = array<i32>} : memref<144x128xbf16, #tpu.memory_space<vmem>>, vector<16x128xbf16>,
    %c0_i32_51 = arith.constant 0 : i32
    %128 = vector.broadcast %c0_i32_51 : i32 to vector<1x128xi32>
    %129 = arith.addi %8, %128 : vector<1x128xi32>
    %c0_i32_52 = arith.constant 0 : i32
    %130 = vector.broadcast %c0_i32_52 : i32 to vector<1x128xi32>
    %131 = arith.cmpi sge, %129, %130 : vector<1x128xi32>
    %132 = arith.andi %113, %131 : vector<1x128xi1>
    %c8_i32_53 = arith.constant 8 : i32
    %133 = vector.broadcast %c8_i32_53 : i32 to vector<1x128xi32>
    %134 = arith.cmpi slt, %129, %133 : vector<1x128xi32>
    %135 = arith.andi %132, %134 : vector<1x128xi1>
    %136 = vector.extract_strided_slice %6 {offsets = [0, 136], sizes = [16, 128], strides = [1, 1]} : vector<16x384xbf16> to vector<16x128xbf16>
    %cst_54 = arith.constant 0.000000e+00 : bf16
    %137 = vector.broadcast %cst_54 : bf16 to vector<16x128xbf16>
    %138 = vector.shape_cast %135 : vector<1x128xi1> to vector<1x128xi1>
    %139 = vector.broadcast %138 : vector<1x128xi1> to vector<16x128xi1>
    %140 = arith.select %139, %136, %137 : vector<16x128xi1>, vector<16x128xbf16>
    %c112 = arith.constant 112 : index
    %c0_55 = arith.constant 0 : index
    %141 = vector.load %arg11[%c112, %c0_55] : memref<144x128xbf16, #tpu.memory_space<vmem>>, vector<16x128xbf16>
    tpu.vector_store %arg11[%c112, %c0_55], %140 {strides = array<i32>} : memref<144x128xbf16, #tpu.memory_space<vmem>>, vector<16x128xbf16>,
    %c1_i32_56 = arith.constant 1 : i32
    %142 = vector.broadcast %c1_i32_56 : i32 to vector<1x128xi32>
    %143 = arith.addi %8, %142 : vector<1x128xi32>
    %c0_i32_57 = arith.constant 0 : i32
    %144 = vector.broadcast %c0_i32_57 : i32 to vector<1x128xi32>
    %145 = arith.cmpi sge, %143, %144 : vector<1x128xi32>
    %146 = arith.andi %113, %145 : vector<1x128xi1>
    %c8_i32_58 = arith.constant 8 : i32
    %147 = vector.broadcast %c8_i32_58 : i32 to vector<1x128xi32>
    %148 = arith.cmpi slt, %143, %147 : vector<1x128xi32>
    %149 = arith.andi %146, %148 : vector<1x128xi1>
    %150 = vector.extract_strided_slice %6 {offsets = [0, 137], sizes = [16, 128], strides = [1, 1]} : vector<16x384xbf16> to vector<16x128xbf16>
    %cst_59 = arith.constant 0.000000e+00 : bf16
    %151 = vector.broadcast %cst_59 : bf16 to vector<16x128xbf16>
    %152 = vector.shape_cast %149 : vector<1x128xi1> to vector<1x128xi1>
    %153 = vector.broadcast %152 : vector<1x128xi1> to vector<16x128xi1>
    %154 = arith.select %153, %150, %151 : vector<16x128xi1>, vector<16x128xbf16>
    %c128 = arith.constant 128 : index
    %c0_60 = arith.constant 0 : index
    %155 = vector.load %arg11[%c128, %c0_60] : memref<144x128xbf16, #tpu.memory_space<vmem>>, vector<16x128xbf16>
    tpu.vector_store %arg11[%c128, %c0_60], %154 {strides = array<i32>} : memref<144x128xbf16, #tpu.memory_space<vmem>>, vector<16x128xbf16>,
    %c0_61 = arith.constant 0 : index
    %c0_62 = arith.constant 0 : index
    %156 = vector.load %arg6[%c0_61, %c0_62] : memref<32x144xbf16, #tpu.memory_space<vmem>>, vector<32x144xbf16>
    %c0_63 = arith.constant 0 : index
    %c0_64 = arith.constant 0 : index
    %157 = vector.load %arg11[%c0_63, %c0_64] : memref<144x128xbf16, #tpu.memory_space<vmem>>, vector<144x128xbf16>
    %cst_65 = arith.constant dense<0.000000e+00> : vector<32x128xf32>
    %158 = tpu.matmul %156, %157, %cst_65 {dimension_numbers = #tpu.dot_dimension_numbers<[1], [0], [0], [1], [0, 0, 1, 1], [], []>} : vector<32x144xbf16>, vector<144x128xbf16>, vector<32x128xf32> -> vector<32x128xf32>
    %c0_66 = arith.constant 0 : index
    %c0_67 = arith.constant 0 : index
    %159 = vector.load %arg7[%c0_66, %c0_67] : memref<32x1xf32, #tpu.memory_space<vmem>>, vector<32x1xf32>
    %160 = vector.broadcast %159 : vector<32x1xf32> to vector<32x128xf32>
    %161 = arith.addf %158, %160 : vector<32x128xf32>
    %cst_68 = arith.constant 0.000000e+00 : f32
    %162 = vector.broadcast %cst_68 : f32 to vector<32x128xf32>
    %163 = arith.maximumf %161, %162 : vector<32x128xf32>
    %c0_69 = arith.constant 0 : index
    %c0_70 = arith.constant 0 : index
    %164 = vector.load %arg8[%c0_69, %c0_70] : memref<64x32xbf16, #tpu.memory_space<vmem>>, vector<64x32xbf16>
    %165 = arith.truncf %163 : vector<32x128xf32> to vector<32x128xbf16>
    %cst_71 = arith.constant dense<0.000000e+00> : vector<64x128xf32>
    %166 = tpu.matmul %164, %165, %cst_71 {dimension_numbers = #tpu.dot_dimension_numbers<[1], [0], [0], [1], [0, 0, 1, 1], [], []>} : vector<64x32xbf16>, vector<32x128xbf16>, vector<64x128xf32> -> vector<64x128xf32>
    %c0_72 = arith.constant 0 : index
    %c0_73 = arith.constant 0 : index
    %167 = vector.load %arg9[%c0_72, %c0_73] : memref<64x1xf32, #tpu.memory_space<vmem>>, vector<64x1xf32>
    %168 = vector.broadcast %167 : vector<64x1xf32> to vector<64x128xf32>
    %169 = arith.addf %166, %168 : vector<64x128xf32>
    %c0_74 = arith.constant 0 : index
    %c0_75 = arith.constant 0 : index
    %c0_76 = arith.constant 0 : index
    %170 = vector.load %arg10[%c0_74, %c0_75, %c0_76] : memref<1x64x128xf32, #tpu.memory_space<vmem>>, vector<1x64x128xf32>
    %171 = vector.shape_cast %170 : vector<1x64x128xf32> to vector<64x128xf32>
    %172 = vector.shape_cast %169 : vector<64x128xf32> to vector<1x64x128xf32>
    tpu.vector_store %arg10[%c0_74, %c0_75, %c0_76], %172 {strides = array<i32>} : memref<1x64x128xf32, #tpu.memory_space<vmem>>, vector<1x64x128xf32>,
    return
  }
  func.func @transform_0(%arg0: i32, %arg1: i32) -> (i32, i32, i32) {
    %c1_i32 = arith.constant 1 : i32
    %0 = arith.muli %arg1, %c1_i32 : i32
    %c1_i32_0 = arith.constant 1 : i32
    %1 = arith.subi %0, %c1_i32_0 : i32
    %c0_i32 = arith.constant 0 : i32
    %2 = arith.maxsi %1, %c0_i32 : i32
    %c0_i32_1 = arith.constant 0 : i32
    %c0_i32_2 = arith.constant 0 : i32
    return %arg0, %c0_i32_1, %2 : i32, i32, i32
  }
  func.func @transform_1(%arg0: i32, %arg1: i32) -> (i32, i32, i32) {
    %c0_i32 = arith.constant 0 : i32
    %c0_i32_0 = arith.constant 0 : i32
    return %arg0, %c0_i32, %arg1 : i32, i32, i32
  }
  func.func @transform_2(%arg0: i32, %arg1: i32) -> (i32, i32, i32) {
    %c1_i32 = arith.constant 1 : i32
    %0 = arith.muli %arg1, %c1_i32 : i32
    %c1_i32_0 = arith.constant 1 : i32
    %1 = arith.addi %0, %c1_i32_0 : i32
    %c0_i32 = arith.constant 0 : i32
    %2 = arith.minsi %1, %c0_i32 : i32
    %c0_i32_1 = arith.constant 0 : i32
    %c0_i32_2 = arith.constant 0 : i32
    return %arg0, %c0_i32_1, %2 : i32, i32, i32
  }
  func.func @transform_3(%arg0: i32, %arg1: i32) -> (i32, i32) {
    %c0_i32 = arith.constant 0 : i32
    %c0_i32_0 = arith.constant 0 : i32
    return %c0_i32, %arg1 : i32, i32
  }
  func.func @transform_4(%arg0: i32, %arg1: i32) -> (i32, i32) {
    %c0_i32 = arith.constant 0 : i32
    %c0_i32_0 = arith.constant 0 : i32
    %c0_i32_1 = arith.constant 0 : i32
    return %c0_i32, %c0_i32_0 : i32, i32
  }
  func.func @transform_5(%arg0: i32, %arg1: i32) -> (i32, i32) {
    %c0_i32 = arith.constant 0 : i32
    %c0_i32_0 = arith.constant 0 : i32
    %c0_i32_1 = arith.constant 0 : i32
    return %c0_i32, %c0_i32_0 : i32, i32
  }
  func.func @transform_6(%arg0: i32, %arg1: i32) -> (i32, i32) {
    %c0_i32 = arith.constant 0 : i32
    %c0_i32_0 = arith.constant 0 : i32
    %c0_i32_1 = arith.constant 0 : i32
    return %c0_i32, %c0_i32_0 : i32, i32
  }
  func.func @transform_7(%arg0: i32, %arg1: i32) -> (i32, i32) {
    %c0_i32 = arith.constant 0 : i32
    %c0_i32_0 = arith.constant 0 : i32
    %c0_i32_1 = arith.constant 0 : i32
    return %c0_i32, %c0_i32_0 : i32, i32
  }
  func.func @transform_8(%arg0: i32, %arg1: i32) -> (i32, i32, i32) {
    %c0_i32 = arith.constant 0 : i32
    %c0_i32_0 = arith.constant 0 : i32
    return %arg0, %c0_i32, %arg1 : i32, i32, i32
  }
}

</mosaic_0001>

<llo_original>
// kernel: tpu_custom_call.1
$region0: #{tpu_custom_call.1}
  #allocation0 [shape = 'u32[]', space=smem, size = 0x4, offset = 0x4, fixed_abs, tag = 'smem constant byte address 0x4 - core index']
  #allocation1 [shape = 'u32[72,128]{1,0:T(1,128)}', space=vmem, size = 0x9000, scoped, tag = 'internal scratch']
  %s0 = inlined_call_operand.hbm [shape: f32[8,128], index: 0, kind: input, shape index: {}]
  %s1 = inlined_call_operand.hbm [shape: f32[16,128], index: 1, kind: input, shape index: {}]
  %s2 = inlined_call_operand.hbm [shape: f32[16,128], index: 2, kind: output, shape index: {}]
  %s3 = sld [smem:[#allocation0]]
  $region49: #{tpu_custom_call.1} parent=0
    _
  %s5 = ssub.s32 1, %s3
  %s6 = scalar_select 0, %s5, %s3
  $region1: #{tpu_custom_call.1} parent=0
    #allocation2 [shape = 'u8[4096]{0}', space=vmem, size = 0x1000, scoped, tag = 'input window, operand 0, single buffered']
    #allocation3 [shape = 's32[2]{0}', space=sflag, size = 0x8, scoped, tag = 'scoped memory for tpu_custom_call.1']
    #allocation4 [shape = 's32[2]{0}', space=sflag, size = 0x8, scoped, tag = 'scoped memory for tpu_custom_call.1']
    #allocation5 [shape = 'u8[8192]{0}', space=vmem, size = 0x2000, scoped, tag = 'input window, operand 1']
    #allocation6 [shape = 's32[2]{0}', space=sflag, size = 0x8, scoped, tag = 'scoped memory for tpu_custom_call.1']
    #allocation7 [shape = 'u8[8192]{0}', space=vmem, size = 0x2000, scoped, tag = 'output window, operand 0']
    %7 = vsyncpa [#allocation3], 0
    %8 = vsyncpa [#allocation6], 0
    %s9 = scalar_lea.sflag [#allocation6], 1
    %10 = vsyncpa %s9, 0
    %11 = vsyncpa [#allocation4], 0
    %s12 = scalar_lea.sflag [#allocation4], 1
    %13 = vsyncpa %s12, 0
    loop: start=0, step=1, limit=4
    $region2: #{tpu_custom_call.1} parent=1 // loop_pre_header
      _
    $region3: #{tpu_custom_call.1} parent=1 // loop_header
      %s15 = sphi 0, %s19
      %p16 = scmp.ge.s32.totalorder %s15, 4
      %s23 = sphi 0, %s23
      %s25 = sphi 0, %s23
      %s26 = sphi 0, %s25
      %s40 = sphi 0, %s26
      %s46 = sphi 0, %s48
      %s49 = sphi 0, %s46
      %s50 = sphi 0, %s49
      %s66 = sphi 0, %s50
      %s72 = sphi 0, %s74
      %s75 = sphi 0, %s72
      %s76 = sphi 0, %s75
      %s92 = sphi 0, %s76
    $region4: #{tpu_custom_call.1} parent=1 // loop_header_branch
      %18 = sbr.rel (%p16) target = $region8
    $region5: #{tpu_custom_call.1} parent=1 // loop_body
      %s20 = ssub.s32 %s15, 1
      %s21 = ssub.s32 %s15, 2
      %s22 = sadd.s32 %s15, 1
      %s24 = sadd.s32 %s23, 1
      %p27 = scmp.eq.s32.totalorder %s15, 1
      %p28 = scmp.ne.s32.totalorder %s23, %s25
      %p29 = scmp.eq.s32.totalorder %s15, 0
      %p30 = por %p28, %p29
      %p31 = scmp.ne.s32.totalorder %s23, %s25
      %p32 = scmp.eq.s32.totalorder %s20, 1
      %p33 = por %p31, %p32
      %p34 = scmp.ne.s32.totalorder %s25, %s26
      %p35 = scmp.eq.s32.totalorder %s20, 0
      %p36 = por %p34, %p35
      %p37 = scmp.ne.s32.totalorder %s25, %s26
      %p38 = scmp.eq.s32.totalorder %s21, 1
      %p39 = por %p37, %p38
      %p41 = scmp.ne.s32.totalorder %s26, %s40
      %p42 = scmp.eq.s32.totalorder %s21, 0
      %p43 = por %p41, %p42
      %s44 = ssub.s32 %s15, %s22
      %p45 = scmp.eq.s32.totalorder %s44, 0
      %s47 = sadd.s32 %s46, 1
      %s48 = scalar_select %p45, %s46, %s47
      %p51 = pneg %p45
      %p52 = scmp.eq.s32.totalorder %s15, 1
      %p53 = por %p51, %p52
      %p54 = scmp.ne.s32.totalorder %s46, %s49
      %p55 = scmp.eq.s32.totalorder %s15, 0
      %p56 = por %p54, %p55
      %p57 = scmp.ne.s32.totalorder %s46, %s49
      %p58 = scmp.eq.s32.totalorder %s20, 1
      %p59 = por %p57, %p58
      %p60 = scmp.ne.s32.totalorder %s49, %s50
      %p61 = scmp.eq.s32.totalorder %s20, 0
      %p62 = por %p60, %p61
      %p63 = scmp.ne.s32.totalorder %s49, %s50
      %p64 = scmp.eq.s32.totalorder %s21, 1
      %p65 = por %p63, %p64
      %p67 = scmp.ne.s32.totalorder %s50, %s66
      %p68 = scmp.eq.s32.totalorder %s21, 0
      %p69 = por %p67, %p68
      %s70 = ssub.s32 %s15, %s22
      %p71 = scmp.eq.s32.totalorder %s70, 0
      %s73 = sadd.s32 %s72, 1
      %s74 = scalar_select %p71, %s72, %s73
      %p77 = pneg %p71
      %p78 = scmp.eq.s32.totalorder %s15, 1
      %p79 = por %p77, %p78
      %p80 = scmp.ne.s32.totalorder %s72, %s75
      %p81 = scmp.eq.s32.totalorder %s15, 0
      %p82 = por %p80, %p81
      %p83 = scmp.ne.s32.totalorder %s72, %s75
      %p84 = scmp.eq.s32.totalorder %s20, 1
      %p85 = por %p83, %p84
      %p86 = scmp.ne.s32.totalorder %s75, %s76
      %p87 = scmp.eq.s32.totalorder %s20, 0
      %p88 = por %p86, %p87
      %p89 = scmp.ne.s32.totalorder %s75, %s76
      %p90 = scmp.eq.s32.totalorder %s21, 1
      %p91 = por %p89, %p90
      %p93 = scmp.ne.s32.totalorder %s76, %s92
      %p94 = scmp.eq.s32.totalorder %s21, 0
      %p95 = por %p93, %p94
      %p96 = scmp.le.s32.totalorder 1, %s15
      %p97 = scmp.lt.s32.totalorder %s15, 3
      %p98 = pnand %p96, %p97
      %p99 = pneg %p98
      // Predicated region
      $region9: #{tpu_custom_call.1} parent=5 // pred_check
        _
      $region10: #{tpu_custom_call.1} parent=5 // pred_check_branch
        %101 = sbr.rel (%p98) target = $region12
      $region11: #{tpu_custom_call.1} parent=5 // pred_region
        %s102 = ssub.s32 %s15, 1
        // Predicated region
        $region13: #{tpu_custom_call.1} parent=11 // pred_check
          %p103 = pneg %p36
        $region14: #{tpu_custom_call.1} parent=11 // pred_check_branch
          %105 = sbr.rel (%p103) target = $region16
        $region15: #{tpu_custom_call.1} parent=11 // pred_region
          %107 = vsyncadd [#allocation3], 0
          %s109 = sshll.u32 %s0, 4
          %s110 = int_to_ptr.hbm [resolvable:$true] %s109
          %s111 = sshll.u32 [#allocation2], 4
          %s112 = int_to_ptr.vmem [resolvable:$true] %s111
          %114 = dma.hbm_to_vmem [thread:$0]  %s110, 128, %s112, [#allocation3]
        $region16: #{tpu_custom_call.1} parent=11 // pred_fallthru
          _
      $region12: #{tpu_custom_call.1} parent=5 // pred_fallthru
        _
      %p115 = scmp.lt.s32.totalorder %s15, 2
      // Predicated region
      $region17: #{tpu_custom_call.1} parent=5 // pred_check
        %p116 = pneg %p115
      $region18: #{tpu_custom_call.1} parent=5 // pred_check_branch
        %118 = sbr.rel (%p116) target = $region20
      $region19: #{tpu_custom_call.1} parent=5 // pred_region
        // Predicated region
        $region21: #{tpu_custom_call.1} parent=19 // pred_check
          %p119 = pneg %p56
        $region22: #{tpu_custom_call.1} parent=19 // pred_check_branch
          %121 = sbr.rel (%p119) target = $region24
        $region23: #{tpu_custom_call.1} parent=19 // pred_region
          %s122 = sand.u32 %s46, 1
          %s123 = scalar_lea.sflag [#allocation6], %s122
          %s124 = sand.u32 %s46, 1
          %s125 = smul.addr %s124, 8
          %s126 = scalar_lea.vmem [#allocation5], %s125
          %128 = vsyncadd %s123, 0
          %s129 = smul.addr %s15, 8
          %s130 = scalar_lea.hbm %s1, %s129
          %s132 = sshll.u32 %s130, 4
          %s133 = int_to_ptr.hbm [resolvable:$true] %s132
          %s134 = sshll.u32 %s126, 4
          %s135 = int_to_ptr.vmem [resolvable:$true] %s134
          %137 = dma.hbm_to_vmem [thread:$0]  %s133, 128, %s135, %s123
        $region24: #{tpu_custom_call.1} parent=19 // pred_fallthru
          _
      $region20: #{tpu_custom_call.1} parent=5 // pred_fallthru
        _
      %p138 = scmp.le.s32.totalorder 1, %s15
      %p139 = scmp.lt.s32.totalorder %s15, 3
      %p140 = pnand %p138, %p139
      %p141 = pneg %p140
      // Predicated region
      $region25: #{tpu_custom_call.1} parent=5 // pred_check
        _
      $region26: #{tpu_custom_call.1} parent=5 // pred_check_branch
        %143 = sbr.rel (%p140) target = $region28
      $region27: #{tpu_custom_call.1} parent=5 // pred_region
        %s144 = ssub.s32 %s15, 1
        // Predicated region
        $region29: #{tpu_custom_call.1} parent=27 // pred_check
          %p145 = pneg %p36
        $region30: #{tpu_custom_call.1} parent=27 // pred_check_branch
          %147 = sbr.rel (%p145) target = $region32
        $region31: #{tpu_custom_call.1} parent=27 // pred_region
          %149 = dma.done [#allocation3], 128
        $region32: #{tpu_custom_call.1} parent=27 // pred_fallthru
          _
        %s150 = sand.u32 %s49, 1
        %s151 = scalar_lea.sflag [#allocation6], %s150
        %s152 = sand.u32 %s49, 1
        %s153 = smul.addr %s152, 8
        %s154 = scalar_lea.vmem [#allocation5], %s153
        // Predicated region
        $region33: #{tpu_custom_call.1} parent=27 // pred_check
          %p155 = pneg %p62
        $region34: #{tpu_custom_call.1} parent=27 // pred_check_branch
          %157 = sbr.rel (%p155) target = $region36
        $region35: #{tpu_custom_call.1} parent=27 // pred_region
          %159 = dma.done %s151, 128
        $region36: #{tpu_custom_call.1} parent=27 // pred_fallthru
          _
        %p160 = pneg %p36
        %p161 = pneg %p33
        %s162 = sand.u32 %s49, 1
        %s163 = scalar_lea.sflag [#allocation6], %s162
        %s164 = sand.u32 %s49, 1
        %s165 = smul.addr %s164, 8
        %s166 = scalar_lea.vmem [#allocation5], %s165
        %p167 = pneg %p62
        %p168 = pneg %p59
        %p169 = pneg %p88
        %p170 = pneg %p85
        %s171 = sand.u32 %s75, 1
        %s172 = scalar_lea.sflag [#allocation4], %s171
        %s173 = sand.u32 %s75, 1
        %s174 = smul.addr %s173, 8
        %s175 = scalar_lea.vmem [#allocation7], %s174
        %v176 = vld [vmem:[%s154] sm:$0xff]
        %v177 = vld [vmem:[#allocation2] sm:$0xff]
        %v178 = vadd.f32 %v176, %v177
        %179 = vst [vmem:[%s175] sm:$0xff] %v178
        %s180 = sand.u32 %s75, 1
        %s181 = scalar_lea.sflag [#allocation4], %s180
        %s182 = sand.u32 %s75, 1
        %s183 = smul.addr %s182, 8
        %s184 = scalar_lea.vmem [#allocation7], %s183
        // Predicated region
        $region37: #{tpu_custom_call.1} parent=27 // pred_check
          %p185 = pneg %p85
        $region38: #{tpu_custom_call.1} parent=27 // pred_check_branch
          %187 = sbr.rel (%p185) target = $region40
        $region39: #{tpu_custom_call.1} parent=27 // pred_region
          %189 = vsyncadd %s181, 0
          %s190 = smul.addr %s20, 8
          %s191 = scalar_lea.hbm %s2, %s190
          %s193 = sshll.u32 %s184, 4
          %s194 = int_to_ptr.vmem [resolvable:$true] %s193
          %s195 = sshll.u32 %s191, 4
          %s196 = int_to_ptr.hbm [resolvable:$true] %s195
          %198 = dma.vmem_to_hbm [thread:$0]  %s194, 128, %s196, %s181
        $region40: #{tpu_custom_call.1} parent=27 // pred_fallthru
          _
      $region28: #{tpu_custom_call.1} parent=5 // pred_fallthru
        _
      %p199 = scmp.le.s32.totalorder 2, %s15
      // Predicated region
      $region41: #{tpu_custom_call.1} parent=5 // pred_check
        %p200 = pneg %p199
      $region42: #{tpu_custom_call.1} parent=5 // pred_check_branch
        %202 = sbr.rel (%p200) target = $region44
      $region43: #{tpu_custom_call.1} parent=5 // pred_region
        %s203 = ssub.s32 %s15, 2
        // Predicated region
        $region45: #{tpu_custom_call.1} parent=43 // pred_check
          %p204 = pneg %p91
        $region46: #{tpu_custom_call.1} parent=43 // pred_check_branch
          %206 = sbr.rel (%p204) target = $region48
        $region47: #{tpu_custom_call.1} parent=43 // pred_region
          %s207 = sand.u32 %s76, 1
          %s208 = scalar_lea.sflag [#allocation4], %s207
          %s209 = sand.u32 %s76, 1
          %s210 = smul.addr %s209, 8
          %s211 = scalar_lea.vmem [#allocation7], %s210
          %213 = dma.done %s208, 128
        $region48: #{tpu_custom_call.1} parent=43 // pred_fallthru
          _
      $region44: #{tpu_custom_call.1} parent=5 // pred_fallthru
        _
    $region6: #{tpu_custom_call.1} parent=1 // loop_footer
      %s19 = sadd.s32 1, %s15
    $region7: #{tpu_custom_call.1} parent=1 // loop_footer_branch
      %14 = sbr.rel target = $region3
    $region8: #{tpu_custom_call.1} parent=1 // loop_exit
      _
    %214 = vsyncpa [#allocation3], 1
    %s215 = scalar_lea.sflag [#allocation3], 1
    %216 = vsyncpa %s215, 1
    %217 = vsyncpa [#allocation6], 1
    %s218 = scalar_lea.sflag [#allocation6], 1
    %219 = vsyncpa %s218, 1
    %220 = vsyncpa [#allocation4], 1
    %s221 = scalar_lea.sflag [#allocation4], 1
    %222 = vsyncpa %s221, 1

// kernel: _forward_impl.2
$region0: #{_forward_impl.2}
  #allocation0 [shape = 'u32[]', space=smem, size = 0x4, offset = 0x4, fixed_abs, tag = 'smem constant byte address 0x4 - core index']
  #allocation1 [shape = 'u32[72,128]{1,0:T(1,128)}', space=vmem, size = 0x9000, scoped, tag = 'internal scratch']
  #allocation2 [shape = 'bf16[144,256]{1,0:T(8,128)(2,1)}', space=vmem, size = 0x12000, scoped, tag = 'scratch operand']
  %s0 = inlined_call_operand.vmem [shape: bf16[2,16,256], index: 0, kind: input, shape index: {}, may-alias: {0,1,2}]
  %s1 = inlined_call_operand.vmem [shape: bf16[2,16,256], index: 1, kind: input, shape index: {}, may-alias: {0,1,2}]
  %s2 = inlined_call_operand.vmem [shape: bf16[2,16,256], index: 2, kind: input, shape index: {}, may-alias: {0,1,2}]
  %s3 = inlined_call_operand.hbm [shape: s32[2,256], index: 3, kind: input, shape index: {}]
  %s4 = inlined_call_operand.hbm [shape: bf16[32,144], index: 4, kind: input, shape index: {}]
  %s5 = inlined_call_operand.vmem [shape: f32[32,1], index: 5, kind: input, shape index: {}]
  %s6 = inlined_call_operand.vmem [shape: bf16[64,32], index: 6, kind: input, shape index: {}]
  %s7 = inlined_call_operand.vmem [shape: f32[64,1], index: 7, kind: input, shape index: {}]
  %s8 = inlined_call_operand.vmem [shape: f32[2,64,256], index: 8, kind: output, shape index: {}]
  %s9 = sld [smem:[#allocation0]]
  $region155: #{_forward_impl.2} parent=0
    _
  %s11 = ssub.s32 1, %s9
  %s12 = scalar_select 0, %s11, %s9
  $region1: #{_forward_impl.2} parent=0
    #allocation3 [shape = 'u8[8192]{0}', space=vmem, size = 0x2000, scoped, tag = 'input window, operand 0']
    #allocation4 [shape = 'u8[8192]{0}', space=vmem, size = 0x2000, scoped, tag = 'input window, operand 2']
    #allocation5 [shape = 'u8[2048]{0}', space=vmem, size = 0x800, scoped, tag = 'input window, operand 3, single buffered']
    #allocation6 [shape = 's32[2]{0}', space=sflag, size = 0x8, scoped, tag = 'scoped memory for _forward_impl.2']
    #allocation7 [shape = 'u8[16384]{0}', space=vmem, size = 0x4000, scoped, tag = 'input window, operand 4, single buffered']
    #allocation8 [shape = 's32[1]{0}', space=sflag, size = 0x4, scoped, tag = 'scoped memory for _forward_impl.2']
    %13 = vsyncpa [#allocation6], 0
    %14 = vsyncpa [#allocation8], 0
    loop: start=0, step=1, limit=4
    $region2: #{_forward_impl.2} parent=1 // loop_pre_header
      _
    $region3: #{_forward_impl.2} parent=1 // loop_header
      %s16 = sphi 0, %s20
      %p17 = scmp.ge.s32.totalorder %s16, 4
      %s23 = sphi 0, %s35
      %s24 = sphi 0, %s31
      %s25 = sphi 0, %s23
      %s26 = sphi 0, %s24
      %s27 = sphi 0, %s25
      %s28 = sphi 0, %s26
      %s48 = sphi 0, %s50
      %s51 = sphi 0, %s48
      %s52 = sphi 0, %s51
      %s68 = sphi 0, %s52
      %s76 = sphi 0, %s78
      %s79 = sphi 0, %s76
      %s80 = sphi 0, %s79
      %s96 = sphi 0, %s80
      %s112 = sphi 0, %s114
      %s115 = sphi 0, %s112
      %s116 = sphi 0, %s115
      %s132 = sphi 0, %s116
      %s138 = sphi 0, %s140
      %s141 = sphi 0, %s138
      %s142 = sphi 0, %s141
      %s158 = sphi 0, %s142
      %s162 = sphi 0, %s162
      %s164 = sphi 0, %s162
      %s165 = sphi 0, %s164
      %s179 = sphi 0, %s165
      %s183 = sphi 0, %s183
      %s185 = sphi 0, %s183
      %s186 = sphi 0, %s185
      %s200 = sphi 0, %s186
      %s204 = sphi 0, %s204
      %s206 = sphi 0, %s204
      %s207 = sphi 0, %s206
      %s221 = sphi 0, %s207
      %s225 = sphi 0, %s225
      %s227 = sphi 0, %s225
      %s228 = sphi 0, %s227
      %s242 = sphi 0, %s228
      %s250 = sphi 0, %s252
      %s253 = sphi 0, %s250
      %s254 = sphi 0, %s253
      %s270 = sphi 0, %s254
    $region4: #{_forward_impl.2} parent=1 // loop_header_branch
      %19 = sbr.rel (%p17) target = $region8
    $region5: #{_forward_impl.2} parent=1 // loop_body
      %s21 = ssub.s32 %s16, 1
      %s22 = ssub.s32 %s16, 2
      %s29 = sadd.s32 1, %s24
      %p30 = scmp.ge.s32.totalorder %s29, 1
      %s31 = scalar_select %p30, 0, %s29
      %s32 = sadd.s32 1, %s23
      %s33 = scalar_select %p30, %s32, %s23
      %p34 = scmp.ge.s32.totalorder %s33, 2
      %s35 = scalar_select %p34, 0, %s33
      %s36 = smul.u32 %s24, 2
      %s37 = ssub.s32 %s36, 1
      %p38 = scmp.gt.s32.totalorder %s37, 0
      %s39 = scalar_select %p38, %s37, 0
      %s40 = smul.u32 %s31, 2
      %s41 = ssub.s32 %s40, 1
      %p42 = scmp.gt.s32.totalorder %s41, 0
      %s43 = scalar_select %p42, %s41, 0
      %s44 = ssub.s32 %s23, %s35
      %s45 = ssub.s32 %s39, %s43
      %s46 = sor.u32 %s44, %s45
      %p47 = scmp.eq.s32.totalorder %s46, 0
      %s49 = sadd.s32 %s48, 1
      %s50 = scalar_select %p47, %s48, %s49
      %p53 = pneg %p47
      %p54 = scmp.eq.s32.totalorder %s16, 1
      %p55 = por %p53, %p54
      %p56 = scmp.ne.s32.totalorder %s48, %s51
      %p57 = scmp.eq.s32.totalorder %s16, 0
      %p58 = por %p56, %p57
      %p59 = scmp.ne.s32.totalorder %s48, %s51
      %p60 = scmp.eq.s32.totalorder %s21, 1
      %p61 = por %p59, %p60
      %p62 = scmp.ne.s32.totalorder %s51, %s52
      %p63 = scmp.eq.s32.totalorder %s21, 0
      %p64 = por %p62, %p63
      %p65 = scmp.ne.s32.totalorder %s51, %s52
      %p66 = scmp.eq.s32.totalorder %s22, 1
      %p67 = por %p65, %p66
      %p69 = scmp.ne.s32.totalorder %s52, %s68
      %p70 = scmp.eq.s32.totalorder %s22, 0
      %p71 = por %p69, %p70
      %s72 = ssub.s32 %s23, %s35
      %s73 = ssub.s32 %s24, %s31
      %s74 = sor.u32 %s72, %s73
      %p75 = scmp.eq.s32.totalorder %s74, 0
      %s77 = sadd.s32 %s76, 1
      %s78 = scalar_select %p75, %s76, %s77
      %p81 = pneg %p75
      %p82 = scmp.eq.s32.totalorder %s16, 1
      %p83 = por %p81, %p82
      %p84 = scmp.ne.s32.totalorder %s76, %s79
      %p85 = scmp.eq.s32.totalorder %s16, 0
      %p86 = por %p84, %p85
      %p87 = scmp.ne.s32.totalorder %s76, %s79
      %p88 = scmp.eq.s32.totalorder %s21, 1
      %p89 = por %p87, %p88
      %p90 = scmp.ne.s32.totalorder %s79, %s80
      %p91 = scmp.eq.s32.totalorder %s21, 0
      %p92 = por %p90, %p91
      %p93 = scmp.ne.s32.totalorder %s79, %s80
      %p94 = scmp.eq.s32.totalorder %s22, 1
      %p95 = por %p93, %p94
      %p97 = scmp.ne.s32.totalorder %s80, %s96
      %p98 = scmp.eq.s32.totalorder %s22, 0
      %p99 = por %p97, %p98
      %s100 = smul.u32 %s24, 2
      %s101 = sadd.s32 %s100, 2
      %p102 = scmp.lt.s32.totalorder %s101, 1
      %s103 = scalar_select %p102, %s101, 1
      %s104 = smul.u32 %s31, 2
      %s105 = sadd.s32 %s104, 2
      %p106 = scmp.lt.s32.totalorder %s105, 1
      %s107 = scalar_select %p106, %s105, 1
      %s108 = ssub.s32 %s23, %s35
      %s109 = ssub.s32 %s103, %s107
      %s110 = sor.u32 %s108, %s109
      %p111 = scmp.eq.s32.totalorder %s110, 0
      %s113 = sadd.s32 %s112, 1
      %s114 = scalar_select %p111, %s112, %s113
      %p117 = pneg %p111
      %p118 = scmp.eq.s32.totalorder %s16, 1
      %p119 = por %p117, %p118
      %p120 = scmp.ne.s32.totalorder %s112, %s115
      %p121 = scmp.eq.s32.totalorder %s16, 0
      %p122 = por %p120, %p121
      %p123 = scmp.ne.s32.totalorder %s112, %s115
      %p124 = scmp.eq.s32.totalorder %s21, 1
      %p125 = por %p123, %p124
      %p126 = scmp.ne.s32.totalorder %s115, %s116
      %p127 = scmp.eq.s32.totalorder %s21, 0
      %p128 = por %p126, %p127
      %p129 = scmp.ne.s32.totalorder %s115, %s116
      %p130 = scmp.eq.s32.totalorder %s22, 1
      %p131 = por %p129, %p130
      %p133 = scmp.ne.s32.totalorder %s116, %s132
      %p134 = scmp.eq.s32.totalorder %s22, 0
      %p135 = por %p133, %p134
      %s136 = ssub.s32 %s24, %s31
      %p137 = scmp.eq.s32.totalorder %s136, 0
      %s139 = sadd.s32 %s138, 1
      %s140 = scalar_select %p137, %s138, %s139
      %p143 = pneg %p137
      %p144 = scmp.eq.s32.totalorder %s16, 1
      %p145 = por %p143, %p144
      %p146 = scmp.ne.s32.totalorder %s138, %s141
      %p147 = scmp.eq.s32.totalorder %s16, 0
      %p148 = por %p146, %p147
      %p149 = scmp.ne.s32.totalorder %s138, %s141
      %p150 = scmp.eq.s32.totalorder %s21, 1
      %p151 = por %p149, %p150
      %p152 = scmp.ne.s32.totalorder %s141, %s142
      %p153 = scmp.eq.s32.totalorder %s21, 0
      %p154 = por %p152, %p153
      %p155 = scmp.ne.s32.totalorder %s141, %s142
      %p156 = scmp.eq.s32.totalorder %s22, 1
      %p157 = por %p155, %p156
      %p159 = scmp.ne.s32.totalorder %s142, %s158
      %p160 = scmp.eq.s32.totalorder %s22, 0
      %p161 = por %p159, %p160
      %s163 = sadd.s32 %s162, 1
      %p166 = scmp.eq.s32.totalorder %s16, 1
      %p167 = scmp.ne.s32.totalorder %s162, %s164
      %p168 = scmp.eq.s32.totalorder %s16, 0
      %p169 = por %p167, %p168
      %p170 = scmp.ne.s32.totalorder %s162, %s164
      %p171 = scmp.eq.s32.totalorder %s21, 1
      %p172 = por %p170, %p171
      %p173 = scmp.ne.s32.totalorder %s164, %s165
      %p174 = scmp.eq.s32.totalorder %s21, 0
      %p175 = por %p173, %p174
      %p176 = scmp.ne.s32.totalorder %s164, %s165
      %p177 = scmp.eq.s32.totalorder %s22, 1
      %p178 = por %p176, %p177
      %p180 = scmp.ne.s32.totalorder %s165, %s179
      %p181 = scmp.eq.s32.totalorder %s22, 0
      %p182 = por %p180, %p181
      %s184 = sadd.s32 %s183, 1
      %p187 = scmp.eq.s32.totalorder %s16, 1
      %p188 = scmp.ne.s32.totalorder %s183, %s185
      %p189 = scmp.eq.s32.totalorder %s16, 0
      %p190 = por %p188, %p189
      %p191 = scmp.ne.s32.totalorder %s183, %s185
      %p192 = scmp.eq.s32.totalorder %s21, 1
      %p193 = por %p191, %p192
      %p194 = scmp.ne.s32.totalorder %s185, %s186
      %p195 = scmp.eq.s32.totalorder %s21, 0
      %p196 = por %p194, %p195
      %p197 = scmp.ne.s32.totalorder %s185, %s186
      %p198 = scmp.eq.s32.totalorder %s22, 1
      %p199 = por %p197, %p198
      %p201 = scmp.ne.s32.totalorder %s186, %s200
      %p202 = scmp.eq.s32.totalorder %s22, 0
      %p203 = por %p201, %p202
      %s205 = sadd.s32 %s204, 1
      %p208 = scmp.eq.s32.totalorder %s16, 1
      %p209 = scmp.ne.s32.totalorder %s204, %s206
      %p210 = scmp.eq.s32.totalorder %s16, 0
      %p211 = por %p209, %p210
      %p212 = scmp.ne.s32.totalorder %s204, %s206
      %p213 = scmp.eq.s32.totalorder %s21, 1
      %p214 = por %p212, %p213
      %p215 = scmp.ne.s32.totalorder %s206, %s207
      %p216 = scmp.eq.s32.totalorder %s21, 0
      %p217 = por %p215, %p216
      %p218 = scmp.ne.s32.totalorder %s206, %s207
      %p219 = scmp.eq.s32.totalorder %s22, 1
      %p220 = por %p218, %p219
      %p222 = scmp.ne.s32.totalorder %s207, %s221
      %p223 = scmp.eq.s32.totalorder %s22, 0
      %p224 = por %p222, %p223
      %s226 = sadd.s32 %s225, 1
      %p229 = scmp.eq.s32.totalorder %s16, 1
      %p230 = scmp.ne.s32.totalorder %s225, %s227
      %p231 = scmp.eq.s32.totalorder %s16, 0
      %p232 = por %p230, %p231
      %p233 = scmp.ne.s32.totalorder %s225, %s227
      %p234 = scmp.eq.s32.totalorder %s21, 1
      %p235 = por %p233, %p234
      %p236 = scmp.ne.s32.totalorder %s227, %s228
      %p237 = scmp.eq.s32.totalorder %s21, 0
      %p238 = por %p236, %p237
      %p239 = scmp.ne.s32.totalorder %s227, %s228
      %p240 = scmp.eq.s32.totalorder %s22, 1
      %p241 = por %p239, %p240
      %p243 = scmp.ne.s32.totalorder %s228, %s242
      %p244 = scmp.eq.s32.totalorder %s22, 0
      %p245 = por %p243, %p244
      %s246 = ssub.s32 %s23, %s35
      %s247 = ssub.s32 %s24, %s31
      %s248 = sor.u32 %s246, %s247
      %p249 = scmp.eq.s32.totalorder %s248, 0
      %s251 = sadd.s32 %s250, 1
      %s252 = scalar_select %p249, %s250, %s251
      %p255 = pneg %p249
      %p256 = scmp.eq.s32.totalorder %s16, 1
      %p257 = por %p255, %p256
      %p258 = scmp.ne.s32.totalorder %s250, %s253
      %p259 = scmp.eq.s32.totalorder %s16, 0
      %p260 = por %p258, %p259
      %p261 = scmp.ne.s32.totalorder %s250, %s253
      %p262 = scmp.eq.s32.totalorder %s21, 1
      %p263 = por %p261, %p262
      %p264 = scmp.ne.s32.totalorder %s253, %s254
      %p265 = scmp.eq.s32.totalorder %s21, 0
      %p266 = por %p264, %p265
      %p267 = scmp.ne.s32.totalorder %s253, %s254
      %p268 = scmp.eq.s32.totalorder %s22, 1
      %p269 = por %p267, %p268
      %p271 = scmp.ne.s32.totalorder %s254, %s270
      %p272 = scmp.eq.s32.totalorder %s22, 0
      %p273 = por %p271, %p272
      %p274 = scmp.le.s32.totalorder 1, %s16
      %p275 = scmp.lt.s32.totalorder %s16, 3
      %p276 = pnand %p274, %p275
      %p277 = pneg %p276
      // Predicated region
      $region9: #{_forward_impl.2} parent=5 // pred_check
        _
      $region10: #{_forward_impl.2} parent=5 // pred_check_branch
        %279 = sbr.rel (%p276) target = $region12
      $region11: #{_forward_impl.2} parent=5 // pred_region
        %s280 = ssub.s32 %s16, 1
        // Predicated region
        $region13: #{_forward_impl.2} parent=11 // pred_check
          %p281 = pneg %p154
        $region14: #{_forward_impl.2} parent=11 // pred_check_branch
          %283 = sbr.rel (%p281) target = $region16
        $region15: #{_forward_impl.2} parent=11 // pred_region
          %s284 = smul.u32 2, %s26
          %286 = vsyncadd [#allocation6], 0
          %s287 = smul.addr %s284, 2
          %s288 = scalar_lea.hbm %s3, %s287
          %s290 = sshll.u32 %s288, 4
          %s291 = int_to_ptr.hbm [resolvable:$true] %s290
          %s292 = sshll.u32 [#allocation5], 4
          %s293 = int_to_ptr.vmem [resolvable:$true] %s292
          %295 = dma.hbm_to_vmem [thread:$0]  %s291, 64, %s293, [#allocation6]
        $region16: #{_forward_impl.2} parent=11 // pred_fallthru
          _
        // Predicated region
        $region17: #{_forward_impl.2} parent=11 // pred_check
          %p296 = pneg %p175
        $region18: #{_forward_impl.2} parent=11 // pred_check_branch
          %298 = sbr.rel (%p296) target = $region20
        $region19: #{_forward_impl.2} parent=11 // pred_region
          %300 = vsyncadd [#allocation8], 0
          %s301 = sshll.u32 %s4, 4
          %s302 = int_to_ptr.hbm [resolvable:$true] %s301
          %s303 = sshll.u32 [#allocation7], 4
          %s304 = int_to_ptr.vmem [resolvable:$true] %s303
          %309 = dma.hbm_to_vmem [thread:$0]  %s302, 512, %s304, [#allocation8], 128, 128, 8
        $region20: #{_forward_impl.2} parent=11 // pred_fallthru
          _
        // Predicated region
        $region21: #{_forward_impl.2} parent=11 // pred_check
          %p310 = pneg %p196
        $region22: #{_forward_impl.2} parent=11 // pred_check_branch
          %312 = sbr.rel (%p310) target = $region24
        $region23: #{_forward_impl.2} parent=11 // pred_region
          _
        $region24: #{_forward_impl.2} parent=11 // pred_fallthru
          _
        // Predicated region
        $region25: #{_forward_impl.2} parent=11 // pred_check
          %p313 = pneg %p217
        $region26: #{_forward_impl.2} parent=11 // pred_check_branch
          %315 = sbr.rel (%p313) target = $region28
        $region27: #{_forward_impl.2} parent=11 // pred_region
          _
        $region28: #{_forward_impl.2} parent=11 // pred_fallthru
          _
        // Predicated region
        $region29: #{_forward_impl.2} parent=11 // pred_check
          %p316 = pneg %p238
        $region30: #{_forward_impl.2} parent=11 // pred_check_branch
          %318 = sbr.rel (%p316) target = $region32
        $region31: #{_forward_impl.2} parent=11 // pred_region
          _
        $region32: #{_forward_impl.2} parent=11 // pred_fallthru
          _
      $region12: #{_forward_impl.2} parent=5 // pred_fallthru
        _
      %p319 = scmp.lt.s32.totalorder %s16, 2
      // Predicated region
      $region33: #{_forward_impl.2} parent=5 // pred_check
        %p320 = pneg %p319
      $region34: #{_forward_impl.2} parent=5 // pred_check_branch
        %322 = sbr.rel (%p320) target = $region36
      $region35: #{_forward_impl.2} parent=5 // pred_region
        // Predicated region
        $region37: #{_forward_impl.2} parent=35 // pred_check
          %p323 = pneg %p58
        $region38: #{_forward_impl.2} parent=35 // pred_check_branch
          %325 = sbr.rel (%p323) target = $region40
        $region39: #{_forward_impl.2} parent=35 // pred_region
          %s326 = sand.u32 %s48, 1
          %s327 = sand.u32 %s48, 1
          %s328 = smul.addr %s327, 8
          %s329 = scalar_lea.vmem [#allocation3], %s328
          %s330 = smul.u32 %s24, 2
          %s331 = ssub.s32 %s330, 1
          %p332 = scmp.gt.s32.totalorder %s331, 0
          %s333 = scalar_select %p332, %s331, 0
          %s334 = smul.addr %s23, 4
          %s335 = sadd.s32 %s333, %s334
          %s336 = smul.addr %s335, 4
          %s337 = scalar_lea.vmem %s0, %s336
          // Predicated region
          $region41: #{_forward_impl.2} parent=39 // pred_check
            _
          $region42: #{_forward_impl.2} parent=39 // pred_check_branch
            %339 = sbr.rel (0) target = $region44
          $region43: #{_forward_impl.2} parent=39 // pred_region
            // Predicated region
            $region45: #{_forward_impl.2} parent=43 // pred_check
              _
            $region46: #{_forward_impl.2} parent=43 // pred_check_branch
              %341 = sbr.rel target = $region48
            $region47: #{_forward_impl.2} parent=43 // pred_region
              // Predicated region
              $region60: #{_forward_impl.2} parent=47 // pred_check
                _
              $region61: #{_forward_impl.2} parent=47 // pred_check_branch
                %359 = sbr.rel (0) target = $region63
              $region62: #{_forward_impl.2} parent=47 // pred_region
                loop: start=0, step=1, limit=1
                $region64: #{_forward_impl.2} parent=62 // loop_pre_header
                  _
                $region65: #{_forward_impl.2} parent=62 // loop_header
                  %s361 = sphi 0, %s365
                  %p362 = scmp.ge.s32.totalorder %s361, 1
                  %s366 = sphi %s337, %s337
                  %s367 = sphi %s329, %s329
                $region66: #{_forward_impl.2} parent=62 // loop_header_branch
                  %364 = sbr.rel (%p362) target = $region70
                $region67: #{_forward_impl.2} parent=62 // loop_body
                  _
                $region68: #{_forward_impl.2} parent=62 // loop_footer
                  %s365 = sadd.s32 1, %s361
                $region69: #{_forward_impl.2} parent=62 // loop_footer_branch
                  %360 = sbr.rel target = $region65
                $region70: #{_forward_impl.2} parent=62 // loop_exit
                  _
                %s369 = ssub.s32 16, 1
                loop: start=0, step=1, limit=1
                $region71: #{_forward_impl.2} parent=62 // loop_pre_header
                  _
                $region72: #{_forward_impl.2} parent=62 // loop_header
                  %s371 = sphi 0, %s375
                  %p372 = scmp.ge.s32.totalorder %s371, 1
                  %s376 = sphi %s337, %s337
                  %s377 = sphi %s329, %s329
                $region73: #{_forward_impl.2} parent=62 // loop_header_branch
                  %374 = sbr.rel (%p372) target = $region77
                $region74: #{_forward_impl.2} parent=62 // loop_body
                  %v378 = vld [vmem:[%s376] sm:%s369]
                  %379 = vst [vmem:[%s377] sm:%s369] %v378
                  %v380 = vld [vmem:[%s376 + $0x8] sm:%s369]
                  %381 = vst [vmem:[%s377 + $0x4] sm:%s369] %v380
                $region75: #{_forward_impl.2} parent=62 // loop_footer
                  %s375 = sadd.s32 1, %s371
                $region76: #{_forward_impl.2} parent=62 // loop_footer_branch
                  %370 = sbr.rel target = $region72
                $region77: #{_forward_impl.2} parent=62 // loop_exit
                  _
              $region63: #{_forward_impl.2} parent=47 // pred_fallthru
                _
            $region48: #{_forward_impl.2} parent=43 // pred_fallthru
              _
            // Predicated region
            $region49: #{_forward_impl.2} parent=43 // pred_check
              _
            $region50: #{_forward_impl.2} parent=43 // pred_check_branch
              %343 = sbr.rel (0) target = $region52
            $region51: #{_forward_impl.2} parent=43 // pred_region
              %s345 = ssub.s32 16, 1
              loop: start=0, step=1, limit=1
              $region53: #{_forward_impl.2} parent=51 // loop_pre_header
                _
              $region54: #{_forward_impl.2} parent=51 // loop_header
                %s347 = sphi 0, %s351
                %p348 = scmp.ge.s32.totalorder %s347, 1
                %s352 = sphi %s337, %s337
                %s353 = sphi %s329, %s329
              $region55: #{_forward_impl.2} parent=51 // loop_header_branch
                %350 = sbr.rel (%p348) target = $region59
              $region56: #{_forward_impl.2} parent=51 // loop_body
                %v354 = vld [vmem:[%s352] sm:%s345]
                %355 = vst [vmem:[%s353] sm:%s345] %v354
                %v356 = vld [vmem:[%s352 + $0x8] sm:%s345]
                %357 = vst [vmem:[%s353 + $0x4] sm:%s345] %v356
              $region57: #{_forward_impl.2} parent=51 // loop_footer
                %s351 = sadd.s32 1, %s347
              $region58: #{_forward_impl.2} parent=51 // loop_footer_branch
                %346 = sbr.rel target = $region54
              $region59: #{_forward_impl.2} parent=51 // loop_exit
                _
            $region52: #{_forward_impl.2} parent=43 // pred_fallthru
              _
          $region44: #{_forward_impl.2} parent=39 // pred_fallthru
            _
          %382 = vnop
        $region40: #{_forward_impl.2} parent=35 // pred_fallthru
          _
        // Predicated region
        $region78: #{_forward_impl.2} parent=35 // pred_check
          %p383 = pneg %p86
        $region79: #{_forward_impl.2} parent=35 // pred_check_branch
          %385 = sbr.rel (%p383) target = $region81
        $region80: #{_forward_impl.2} parent=35 // pred_region
          %s386 = smul.u32 2, %s24
          %p387 = scmp.lt.s32.totalorder %s23, 1
          %s388 = scalar_select %p387, %s23, 1
          %p389 = scmp.lt.s32.totalorder %s386, 1
          %s390 = scalar_select %p389, %s386, 1
          %s391 = smul.addr %s388, 4
          %s392 = sadd.s32 %s390, %s391
          %s393 = smul.addr %s392, 4
          %s394 = scalar_lea.vmem %s1, %s393
          %s395 = smul.u32 2, %s24
        $region81: #{_forward_impl.2} parent=35 // pred_fallthru
          _
        // Predicated region
        $region82: #{_forward_impl.2} parent=35 // pred_check
          %p396 = pneg %p122
        $region83: #{_forward_impl.2} parent=35 // pred_check_branch
          %398 = sbr.rel (%p396) target = $region85
        $region84: #{_forward_impl.2} parent=35 // pred_region
          %s399 = sand.u32 %s112, 1
          %s400 = sand.u32 %s112, 1
          %s401 = smul.addr %s400, 8
          %s402 = scalar_lea.vmem [#allocation4], %s401
          %s403 = smul.u32 %s24, 2
          %s404 = sadd.s32 %s403, 2
          %p405 = scmp.lt.s32.totalorder %s404, 1
          %s406 = scalar_select %p405, %s404, 1
          %s407 = smul.addr %s23, 4
          %s408 = sadd.s32 %s406, %s407
          %s409 = smul.addr %s408, 4
          %s410 = scalar_lea.vmem %s2, %s409
          // Predicated region
          $region86: #{_forward_impl.2} parent=84 // pred_check
            _
          $region87: #{_forward_impl.2} parent=84 // pred_check_branch
            %412 = sbr.rel (0) target = $region89
          $region88: #{_forward_impl.2} parent=84 // pred_region
            // Predicated region
            $region90: #{_forward_impl.2} parent=88 // pred_check
              _
            $region91: #{_forward_impl.2} parent=88 // pred_check_branch
              %414 = sbr.rel target = $region93
            $region92: #{_forward_impl.2} parent=88 // pred_region
              // Predicated region
              $region105: #{_forward_impl.2} parent=92 // pred_check
                _
              $region106: #{_forward_impl.2} parent=92 // pred_check_branch
                %432 = sbr.rel (0) target = $region108
              $region107: #{_forward_impl.2} parent=92 // pred_region
                loop: start=0, step=1, limit=1
                $region109: #{_forward_impl.2} parent=107 // loop_pre_header
                  _
                $region110: #{_forward_impl.2} parent=107 // loop_header
                  %s434 = sphi 0, %s438
                  %p435 = scmp.ge.s32.totalorder %s434, 1
                  %s439 = sphi %s410, %s410
                  %s440 = sphi %s402, %s402
                $region111: #{_forward_impl.2} parent=107 // loop_header_branch
                  %437 = sbr.rel (%p435) target = $region115
                $region112: #{_forward_impl.2} parent=107 // loop_body
                  _
                $region113: #{_forward_impl.2} parent=107 // loop_footer
                  %s438 = sadd.s32 1, %s434
                $region114: #{_forward_impl.2} parent=107 // loop_footer_branch
                  %433 = sbr.rel target = $region110
                $region115: #{_forward_impl.2} parent=107 // loop_exit
                  _
                %s442 = ssub.s32 16, 1
                loop: start=0, step=1, limit=1
                $region116: #{_forward_impl.2} parent=107 // loop_pre_header
                  _
                $region117: #{_forward_impl.2} parent=107 // loop_header
                  %s444 = sphi 0, %s448
                  %p445 = scmp.ge.s32.totalorder %s444, 1
                  %s449 = sphi %s410, %s410
                  %s450 = sphi %s402, %s402
                $region118: #{_forward_impl.2} parent=107 // loop_header_branch
                  %447 = sbr.rel (%p445) target = $region122
                $region119: #{_forward_impl.2} parent=107 // loop_body
                  %v451 = vld [vmem:[%s449] sm:%s442]
                  %452 = vst [vmem:[%s450] sm:%s442] %v451
                  %v453 = vld [vmem:[%s449 + $0x8] sm:%s442]
                  %454 = vst [vmem:[%s450 + $0x4] sm:%s442] %v453
                $region120: #{_forward_impl.2} parent=107 // loop_footer
                  %s448 = sadd.s32 1, %s444
                $region121: #{_forward_impl.2} parent=107 // loop_footer_branch
                  %443 = sbr.rel target = $region117
                $region122: #{_forward_impl.2} parent=107 // loop_exit
                  _
              $region108: #{_forward_impl.2} parent=92 // pred_fallthru
                _
            $region93: #{_forward_impl.2} parent=88 // pred_fallthru
              _
            // Predicated region
            $region94: #{_forward_impl.2} parent=88 // pred_check
              _
            $region95: #{_forward_impl.2} parent=88 // pred_check_branch
              %416 = sbr.rel (0) target = $region97
            $region96: #{_forward_impl.2} parent=88 // pred_region
              %s418 = ssub.s32 16, 1
              loop: start=0, step=1, limit=1
              $region98: #{_forward_impl.2} parent=96 // loop_pre_header
                _
              $region99: #{_forward_impl.2} parent=96 // loop_header
                %s420 = sphi 0, %s424
                %p421 = scmp.ge.s32.totalorder %s420, 1
                %s425 = sphi %s410, %s410
                %s426 = sphi %s402, %s402
              $region100: #{_forward_impl.2} parent=96 // loop_header_branch
                %423 = sbr.rel (%p421) target = $region104
              $region101: #{_forward_impl.2} parent=96 // loop_body
                %v427 = vld [vmem:[%s425] sm:%s418]
                %428 = vst [vmem:[%s426] sm:%s418] %v427
                %v429 = vld [vmem:[%s425 + $0x8] sm:%s418]
                %430 = vst [vmem:[%s426 + $0x4] sm:%s418] %v429
              $region102: #{_forward_impl.2} parent=96 // loop_footer
                %s424 = sadd.s32 1, %s420
              $region103: #{_forward_impl.2} parent=96 // loop_footer_branch
                %419 = sbr.rel target = $region99
              $region104: #{_forward_impl.2} parent=96 // loop_exit
                _
            $region97: #{_forward_impl.2} parent=88 // pred_fallthru
              _
          $region89: #{_forward_impl.2} parent=84 // pred_fallthru
            _
          %455 = vnop
        $region85: #{_forward_impl.2} parent=35 // pred_fallthru
          _
      $region36: #{_forward_impl.2} parent=5 // pred_fallthru
        _
      %p456 = scmp.le.s32.totalorder 1, %s16
      %p457 = scmp.lt.s32.totalorder %s16, 3
      %p458 = pnand %p456, %p457
      %p459 = pneg %p458
      // Predicated region
      $region123: #{_forward_impl.2} parent=5 // pred_check
        _
      $region124: #{_forward_impl.2} parent=5 // pred_check_branch
        %461 = sbr.rel (%p458) target = $region126
      $region125: #{_forward_impl.2} parent=5 // pred_region
        %s462 = ssub.s32 %s16, 1
        %s463 = sand.u32 %s51, 1
        %s464 = sand.u32 %s51, 1
        %s465 = smul.addr %s464, 8
        %s466 = scalar_lea.vmem [#allocation3], %s465
        // Predicated region
        $region127: #{_forward_impl.2} parent=125 // pred_check
          %p467 = pneg %p64
        $region128: #{_forward_impl.2} parent=125 // pred_check_branch
          %469 = sbr.rel (%p467) target = $region130
        $region129: #{_forward_impl.2} parent=125 // pred_region
          _
        $region130: #{_forward_impl.2} parent=125 // pred_fallthru
          _
        %s470 = sand.u32 %s115, 1
        %s471 = sand.u32 %s115, 1
        %s472 = smul.addr %s471, 8
        %s473 = scalar_lea.vmem [#allocation4], %s472
        // Predicated region
        $region131: #{_forward_impl.2} parent=125 // pred_check
          %p474 = pneg %p128
        $region132: #{_forward_impl.2} parent=125 // pred_check_branch
          %476 = sbr.rel (%p474) target = $region134
        $region133: #{_forward_impl.2} parent=125 // pred_region
          _
        $region134: #{_forward_impl.2} parent=125 // pred_fallthru
          _
        // Predicated region
        $region135: #{_forward_impl.2} parent=125 // pred_check
          %p477 = pneg %p154
        $region136: #{_forward_impl.2} parent=125 // pred_check_branch
          %479 = sbr.rel (%p477) target = $region138
        $region137: #{_forward_impl.2} parent=125 // pred_region
          %481 = dma.done [#allocation6], 64
        $region138: #{_forward_impl.2} parent=125 // pred_fallthru
          _
        // Predicated region
        $region139: #{_forward_impl.2} parent=125 // pred_check
          %p482 = pneg %p175
        $region140: #{_forward_impl.2} parent=125 // pred_check_branch
          %484 = sbr.rel (%p482) target = $region142
        $region141: #{_forward_impl.2} parent=125 // pred_region
          %486 = dma.done [#allocation8], 512
        $region142: #{_forward_impl.2} parent=125 // pred_fallthru
          _
        %s487 = sand.u32 %s51, 1
        %s488 = sand.u32 %s51, 1
        %s489 = smul.addr %s488, 8
        %s490 = scalar_lea.vmem [#allocation3], %s489
        %p491 = pneg %p64
        %p492 = pneg %p61
        %s493 = smul.u32 2, %s26
        %p494 = scmp.lt.s32.totalorder %s25, 1
        %s495 = scalar_select %p494, %s25, 1
        %p496 = scmp.lt.s32.totalorder %s493, 1
        %s497 = scalar_select %p496, %s493, 1
        %s498 = smul.addr %s495, 4
        %s499 = sadd.s32 %s497, %s498
        %s500 = smul.addr %s499, 4
        %s501 = scalar_lea.vmem %s1, %s500
        %p502 = pneg %p92
        %p503 = pneg %p89
        %s504 = sand.u32 %s115, 1
        %s505 = sand.u32 %s115, 1
        %s506 = smul.addr %s505, 8
        %s507 = scalar_lea.vmem [#allocation4], %s506
        %p508 = pneg %p128
        %p509 = pneg %p125
        %p510 = pneg %p154
        %p511 = pneg %p151
        %p512 = pneg %p175
        %p513 = pneg %p172
        %p514 = pneg %p196
        %p515 = pneg %p193
        %p516 = pneg %p217
        %p517 = pneg %p214
        %p518 = pneg %p238
        %p519 = pneg %p235
        %p520 = pneg %p266
        %p521 = pneg %p263
        %s522 = smul.u32 2, %s26
        %p523 = scmp.lt.s32.totalorder %s25, 1
        %s524 = scalar_select %p523, %s25, 1
        %p525 = scmp.lt.s32.totalorder %s522, 1
        %s526 = scalar_select %p525, %s522, 1
        %s527 = smul.addr %s524, 16
        %s528 = sadd.s32 %s526, %s527
        %s529 = smul.addr %s528, 8
        %s530 = scalar_lea.vmem %s8, %s529
        %s531 = smul.u32 %s26, 2
        %s532 = ssub.s32 %s531, 1
        %p533 = scmp.gt.s32.totalorder %s532, 0
        %s534 = scalar_select %p533, %s532, 0
        %s535 = smul.u32 2, %s26
        %p536 = scmp.lt.s32.totalorder %s25, 1
        %s537 = scalar_select %p536, %s25, 1
        %p538 = scmp.lt.s32.totalorder %s535, 1
        %s539 = scalar_select %p538, %s535, 1
        %s540 = smul.addr %s537, 4
        %s541 = sadd.s32 %s539, %s540
        %s542 = smul.addr %s541, 4
        %s543 = scalar_lea.vmem %s1, %s542
        %s544 = smul.u32 2, %s26
        %s545 = smul.u32 %s26, 2
        %s546 = sadd.s32 %s545, 2
        %p547 = scmp.lt.s32.totalorder %s546, 1
        %s548 = scalar_select %p547, %s546, 1
        %s549 = smul.u32 2, %s26
        %s550 = smul.u32 2, %s26
        %p551 = scmp.lt.s32.totalorder %s25, 1
        %s552 = scalar_select %p551, %s25, 1
        %p553 = scmp.lt.s32.totalorder %s550, 1
        %s554 = scalar_select %p553, %s550, 1
        %s555 = smul.addr %s552, 16
        %s556 = sadd.s32 %s554, %s555
        %s557 = smul.addr %s556, 8
        %s558 = scalar_lea.vmem %s8, %s557
        %s559 = smul.u32 2, %s26
        %v563 = vld [vmem:[%s466] sm:$0xf]
        %v564 = vld [vmem:[%s466 + $0x4] sm:$0xf]
        %v565 = vld [vmem:[%s543] sm:$0xff]
        %v566 = vld [vmem:[%s543 + $0x8] sm:$0xff]
        %v567 = vld [vmem:[%s473] sm:$0xf]
        %v568 = vld [vmem:[%s473 + $0x4] sm:$0xf]
        %v571 = vunpack.c.l.b16 %v563
        %v572 = vunpack.c.l.b16 %v564
        %v573 = vpack.c.b16 %v572, %v571
        %v577 = vunpack.c.l.b16 %v565
        %v578 = vunpack.c.h.b16 %v565
        %v579 = vunpack.c.l.b16 %v566
        %v580 = vunpack.c.h.b16 %v566
        %v581 = vpack.c.b16 %v579, %v577
        %v582 = vpack.c.b16 %v580, %v578
        %v587 = vunpack.c.l.b16 %v567
        %v588 = vunpack.c.l.b16 %v568
        %v589 = vpack.c.b16 %v588, %v587
        %v591 = vld [vmem:[#allocation5] ss:$2 sm:$0x3]
        %s592 = scalar_lea.vmem [#allocation5], 1
        %v593 = vld [vmem:[%s592] ss:$2 sm:$0x3]
        %v594 = vadd.s32 %v591, 4294967295
        %vm595 = vcmp.ge.s32.totalorder %v594, 0
        %vm596 = vcmp.lt.s32.totalorder %v594, 16
        %vm597 = vmand %vm595, %vm596
        %v598 = vadd.s32 %v593, 4294967295
        %vm599 = vcmp.ge.s32.totalorder %v598, 0
        %vm600 = vmand %vm597, %vm599
        %vm601 = vcmp.lt.s32.totalorder %v598, 16
        %vm602 = vmand %vm600, %vm601
        %v603 = vsel %vm602, 1, 0
        %v604 = vperm.slane %v603, 0
        %v605 = vperm.slane %v603, 1
        %vm606 = vcmp.eq.s32.totalorder %v604, 1
        %vm607 = vcmp.eq.s32.totalorder %v605, 1
        %vm608 = vmpackc.low %vm607, %vm606
        %v609 = vsel %vm608, 65537, 0
        %v610 = vperm.slane %v609, 0
        %v611 = vperm.slane %v609, 4
        %612 = vrot.lane.b32.xlu0 %v610, 111
        %v613 = vpop.permute.xlu0 %612
        %614 = vrot.lane.b32.xlu0 %v611, 111
        %v615 = vpop.permute.xlu0 %614
        %vm616 = vcmask 908288
        %v617 = vsel %vm616, %v613, %v615
        %v618 = vunpack.c.l.b16 %v613
        %v619 = vunpack.c.h.b16 %v613
        %v620 = vunpack.c.l.b16 0
        %v621 = vunpack.c.h.b16 0
        %vm622 = vcmp.ne.s32.totalorder %v618, %v620
        %vm623 = vcmp.ne.s32.totalorder %v619, %v621
        %vm624 = vmpackc.low %vm623, %vm622
        %v625 = vunpack.c.l.b16 %v617
        %v626 = vunpack.c.h.b16 %v617
        %v627 = vunpack.c.l.b16 0
        %v628 = vunpack.c.h.b16 0
        %vm629 = vcmp.ne.s32.totalorder %v625, %v627
        %vm630 = vcmp.ne.s32.totalorder %v626, %v628
        %vm631 = vmpackc.low %vm630, %vm629
        %v632 = vunpack.c.l.b16 %v615
        %v633 = vunpack.c.h.b16 %v615
        %v634 = vunpack.c.l.b16 0
        %v635 = vunpack.c.h.b16 0
        %vm636 = vcmp.ne.s32.totalorder %v632, %v634
        %vm637 = vcmp.ne.s32.totalorder %v633, %v635
        %vm638 = vmpackc.low %vm637, %vm636
        %v639 = vsel %vm624, %v573, 0
        %v640 = vsel %vm631, %v581, 0
        %v641 = vsel %vm638, %v582, 0
        %v645 = vunpack.c.l.b16 %v639
        %v646 = vunpack.c.l.b16 %v640
        %v647 = vunpack.c.l.b16 %v641
        %v648 = vunpack.c.h.b16 %v639
        %v649 = vunpack.c.h.b16 %v640
        %v650 = vunpack.c.h.b16 %v641
        %v651 = vpack.c.b16 %v646, %v645
        %v652 = vpack.c.b16 %v647, %v647
        %v653 = vpack.c.b16 %v649, %v648
        %v654 = vpack.c.b16 %v650, %v650
        %655 = vrot.lane.b32.xlu0 %v651, 17
        %v656 = vpop.permute.xlu0 %655
        %657 = vrot.lane.b32.xlu0 %v652, 17
        %v658 = vpop.permute.xlu0 %657
        %659 = vrot.lane.b32.xlu0 %v653, 17
        %v660 = vpop.permute.xlu0 %659
        %661 = vrot.lane.b32.xlu0 %v654, 17
        %v662 = vpop.permute.xlu0 %661
        %v663 = vrot.slane %v656, 4
        %v664 = vrot.slane %v658, 4
        %v665 = vrot.slane %v660, 4
        %v666 = vrot.slane %v662, 4
        %vm667 = vcmask 1043456
        %v668 = vsel %vm667, %v663, %v664
        %vm669 = vcmask 138240
        %v670 = vsel %vm669, %v656, %v668
        %v671 = vsel %vm667, %v665, %v666
        %v672 = vsel %vm669, %v660, %v671
        %675 = vst [vmem:[#allocation2] sm:$0xff] %v670
        %676 = vst [vmem:[#allocation2 + $0x8] sm:$0xff] %v672
        %vm677 = vcmp.ge.s32.totalorder %v593, 0
        %vm678 = vmand %vm597, %vm677
        %vm679 = vcmp.lt.s32.totalorder %v593, 16
        %vm680 = vmand %vm678, %vm679
        %v681 = vsel %vm680, 1, 0
        %v682 = vperm.slane %v681, 0
        %v683 = vperm.slane %v681, 1
        %vm684 = vcmp.eq.s32.totalorder %v682, 1
        %vm685 = vcmp.eq.s32.totalorder %v683, 1
        %vm686 = vmpackc.low %vm685, %vm684
        %v687 = vsel %vm686, 65537, 0
        %v688 = vperm.slane %v687, 0
        %v689 = vperm.slane %v687, 4
        %690 = vrot.lane.b32.xlu0 %v688, 112
        %v691 = vpop.permute.xlu0 %690
        %692 = vrot.lane.b32.xlu0 %v689, 112
        %v693 = vpop.permute.xlu0 %692
        %vm694 = vcmask 916480
        %v695 = vsel %vm694, %v691, %v693
        %v696 = vunpack.c.l.b16 %v691
        %v697 = vunpack.c.h.b16 %v691
        %v698 = vunpack.c.l.b16 0
        %v699 = vunpack.c.h.b16 0
        %vm700 = vcmp.ne.s32.totalorder %v696, %v698
        %vm701 = vcmp.ne.s32.totalorder %v697, %v699
        %vm702 = vmpackc.low %vm701, %vm700
        %v703 = vunpack.c.l.b16 %v695
        %v704 = vunpack.c.h.b16 %v695
        %v705 = vunpack.c.l.b16 0
        %v706 = vunpack.c.h.b16 0
        %vm707 = vcmp.ne.s32.totalorder %v703, %v705
        %vm708 = vcmp.ne.s32.totalorder %v704, %v706
        %vm709 = vmpackc.low %vm708, %vm707
        %v710 = vunpack.c.l.b16 %v693
        %v711 = vunpack.c.h.b16 %v693
        %v712 = vunpack.c.l.b16 0
        %v713 = vunpack.c.h.b16 0
        %vm714 = vcmp.ne.s32.totalorder %v710, %v712
        %vm715 = vcmp.ne.s32.totalorder %v711, %v713
        %vm716 = vmpackc.low %vm715, %vm714
        %v717 = vsel %vm702, %v573, 0
        %v718 = vsel %vm709, %v581, 0
        %v719 = vsel %vm716, %v582, 0
        %v723 = vunpack.c.l.b16 %v717
        %v724 = vunpack.c.l.b16 %v718
        %v725 = vunpack.c.l.b16 %v719
        %v726 = vunpack.c.h.b16 %v717
        %v727 = vunpack.c.h.b16 %v718
        %v728 = vunpack.c.h.b16 %v719
        %v729 = vpack.c.b16 %v724, %v723
        %v730 = vpack.c.b16 %v725, %v725
        %v731 = vpack.c.b16 %v727, %v726
        %v732 = vpack.c.b16 %v728, %v728
        %733 = vrot.lane.b32.xlu0 %v729, 16
        %v734 = vpop.permute.xlu0 %733
        %735 = vrot.lane.b32.xlu0 %v730, 16
        %v736 = vpop.permute.xlu0 %735
        %737 = vrot.lane.b32.xlu0 %v731, 16
        %v738 = vpop.permute.xlu0 %737
        %739 = vrot.lane.b32.xlu0 %v732, 16
        %v740 = vpop.permute.xlu0 %739
        %v741 = vrot.slane %v734, 4
        %v742 = vrot.slane %v736, 4
        %v743 = vrot.slane %v738, 4
        %v744 = vrot.slane %v740, 4
        %v745 = vsel %vm667, %v741, %v742
        %vm746 = vcmask 130048
        %v747 = vsel %vm746, %v734, %v745
        %v748 = vsel %vm667, %v743, %v744
        %v749 = vsel %vm746, %v738, %v748
        %752 = vst [vmem:[#allocation2 + $0x10] sm:$0xff] %v747
        %753 = vst [vmem:[#allocation2 + $0x18] sm:$0xff] %v749
        %v754 = vadd.s32 %v593, 1
        %vm755 = vcmp.ge.s32.totalorder %v754, 0
        %vm756 = vmand %vm597, %vm755
        %vm757 = vcmp.lt.s32.totalorder %v754, 16
        %vm758 = vmand %vm756, %vm757
        %v759 = vsel %vm758, 1, 0
        %v760 = vperm.slane %v759, 0
        %v761 = vperm.slane %v759, 1
        %vm762 = vcmp.eq.s32.totalorder %v760, 1
        %vm763 = vcmp.eq.s32.totalorder %v761, 1
        %vm764 = vmpackc.low %vm763, %vm762
        %v765 = vsel %vm764, 65537, 0
        %v766 = vperm.slane %v765, 0
        %v767 = vperm.slane %v765, 4
        %768 = vrot.lane.b32.xlu0 %v766, 113
        %v769 = vpop.permute.xlu0 %768
        %770 = vrot.lane.b32.xlu0 %v767, 113
        %v771 = vpop.permute.xlu0 %770
        %vm772 = vcmask 924672
        %v773 = vsel %vm772, %v769, %v771
        %v774 = vunpack.c.l.b16 %v769
        %v775 = vunpack.c.h.b16 %v769
        %v776 = vunpack.c.l.b16 0
        %v777 = vunpack.c.h.b16 0
        %vm778 = vcmp.ne.s32.totalorder %v774, %v776
        %vm779 = vcmp.ne.s32.totalorder %v775, %v777
        %vm780 = vmpackc.low %vm779, %vm778
        %v781 = vunpack.c.l.b16 %v773
        %v782 = vunpack.c.h.b16 %v773
        %v783 = vunpack.c.l.b16 0
        %v784 = vunpack.c.h.b16 0
        %vm785 = vcmp.ne.s32.totalorder %v781, %v783
        %vm786 = vcmp.ne.s32.totalorder %v782, %v784
        %vm787 = vmpackc.low %vm786, %vm785
        %v788 = vunpack.c.l.b16 %v771
        %v789 = vunpack.c.h.b16 %v771
        %v790 = vunpack.c.l.b16 0
        %v791 = vunpack.c.h.b16 0
        %vm792 = vcmp.ne.s32.totalorder %v788, %v790
        %vm793 = vcmp.ne.s32.totalorder %v789, %v791
        %vm794 = vmpackc.low %vm793, %vm792
        %v795 = vsel %vm780, %v573, 0
        %v796 = vsel %vm787, %v581, 0
        %v797 = vsel %vm794, %v582, 0
        %v801 = vunpack.c.l.b16 %v795
        %v802 = vunpack.c.l.b16 %v796
        %v803 = vunpack.c.l.b16 %v797
        %v804 = vunpack.c.h.b16 %v795
        %v805 = vunpack.c.h.b16 %v796
        %v806 = vunpack.c.h.b16 %v797
        %v807 = vpack.c.b16 %v802, %v801
        %v808 = vpack.c.b16 %v803, %v803
        %v809 = vpack.c.b16 %v805, %v804
        %v810 = vpack.c.b16 %v806, %v806
        %811 = vrot.lane.b32.xlu0 %v807, 15
        %v812 = vpop.permute.xlu0 %811
        %813 = vrot.lane.b32.xlu0 %v808, 15
        %v814 = vpop.permute.xlu0 %813
        %815 = vrot.lane.b32.xlu0 %v809, 15
        %v816 = vpop.permute.xlu0 %815
        %817 = vrot.lane.b32.xlu0 %v810, 15
        %v818 = vpop.permute.xlu0 %817
        %v819 = vrot.slane %v812, 4
        %v820 = vrot.slane %v814, 4
        %v821 = vrot.slane %v816, 4
        %v822 = vrot.slane %v818, 4
        %v823 = vsel %vm667, %v819, %v820
        %vm824 = vcmask 121856
        %v825 = vsel %vm824, %v812, %v823
        %v826 = vsel %vm667, %v821, %v822
        %v827 = vsel %vm824, %v816, %v826
        %830 = vst [vmem:[#allocation2 + $0x20] sm:$0xff] %v825
        %831 = vst [vmem:[#allocation2 + $0x28] sm:$0xff] %v827
        %vm832 = vcmp.ge.s32.totalorder %v591, 0
        %vm833 = vcmp.lt.s32.totalorder %v591, 16
        %vm834 = vmand %vm832, %vm833
        %vm835 = vmand %vm834, %vm599
        %vm836 = vmand %vm835, %vm601
        %v837 = vsel %vm836, 1, 0
        %v838 = vperm.slane %v837, 0
        %v839 = vperm.slane %v837, 1
        %vm840 = vcmp.eq.s32.totalorder %v838, 1
        %vm841 = vcmp.eq.s32.totalorder %v839, 1
        %vm842 = vmpackc.low %vm841, %vm840
        %v843 = vsel %vm842, 65537, 0
        %v844 = vperm.slane %v843, 0
        %v845 = vperm.slane %v843, 4
        %846 = vrot.lane.b32.xlu0 %v844, 127
        %v847 = vpop.permute.xlu0 %846
        %848 = vrot.lane.b32.xlu0 %v845, 127
        %v849 = vpop.permute.xlu0 %848
        %vm850 = vcmask 1039360
        %v851 = vsel %vm850, %v847, %v849
        %v852 = vunpack.c.l.b16 %v847
        %v853 = vunpack.c.h.b16 %v847
        %v854 = vunpack.c.l.b16 0
        %v855 = vunpack.c.h.b16 0
        %vm856 = vcmp.ne.s32.totalorder %v852, %v854
        %vm857 = vcmp.ne.s32.totalorder %v853, %v855
        %vm858 = vmpackc.low %vm857, %vm856
        %v859 = vunpack.c.l.b16 %v851
        %v860 = vunpack.c.h.b16 %v851
        %v861 = vunpack.c.l.b16 0
        %v862 = vunpack.c.h.b16 0
        %vm863 = vcmp.ne.s32.totalorder %v859, %v861
        %vm864 = vcmp.ne.s32.totalorder %v860, %v862
        %vm865 = vmpackc.low %vm864, %vm863
        %v866 = vunpack.c.l.b16 %v849
        %v867 = vunpack.c.h.b16 %v849
        %v868 = vunpack.c.l.b16 0
        %v869 = vunpack.c.h.b16 0
        %vm870 = vcmp.ne.s32.totalorder %v866, %v868
        %vm871 = vcmp.ne.s32.totalorder %v867, %v869
        %vm872 = vmpackc.low %vm871, %vm870
        %v873 = vsel %vm858, %v573, 0
        %v874 = vsel %vm865, %v581, 0
        %v875 = vsel %vm872, %v582, 0
        %v879 = vunpack.c.l.b16 %v873
        %v880 = vunpack.c.l.b16 %v874
        %v881 = vunpack.c.l.b16 %v875
        %v882 = vunpack.c.h.b16 %v873
        %v883 = vunpack.c.h.b16 %v874
        %v884 = vunpack.c.h.b16 %v875
        %v885 = vpack.c.b16 %v880, %v879
        %v886 = vpack.c.b16 %v881, %v881
        %v887 = vpack.c.b16 %v883, %v882
        %v888 = vpack.c.b16 %v884, %v884
        %889 = vrot.lane.b32.xlu0 %v885, 1
        %v890 = vpop.permute.xlu0 %889
        %891 = vrot.lane.b32.xlu0 %v886, 1
        %v892 = vpop.permute.xlu0 %891
        %893 = vrot.lane.b32.xlu0 %v887, 1
        %v894 = vpop.permute.xlu0 %893
        %895 = vrot.lane.b32.xlu0 %v888, 1
        %v896 = vpop.permute.xlu0 %895
        %v897 = vrot.slane %v890, 4
        %v898 = vrot.slane %v892, 4
        %v899 = vrot.slane %v894, 4
        %v900 = vrot.slane %v896, 4
        %v901 = vsel %vm667, %v897, %v898
        %vm902 = vcmask 7168
        %v903 = vsel %vm902, %v890, %v901
        %v904 = vsel %vm667, %v899, %v900
        %v905 = vsel %vm902, %v894, %v904
        %908 = vst [vmem:[#allocation2 + $0x30] sm:$0xff] %v903
        %909 = vst [vmem:[#allocation2 + $0x38] sm:$0xff] %v905
        %vm910 = vmand %vm834, %vm677
        %vm911 = vmand %vm910, %vm679
        %v912 = vsel %vm911, 1, 0
        %v913 = vperm.slane %v912, 0
        %v914 = vperm.slane %v912, 1
        %vm915 = vcmp.eq.s32.totalorder %v913, 1
        %vm916 = vcmp.eq.s32.totalorder %v914, 1
        %vm917 = vmpackc.low %vm916, %vm915
        %v918 = vsel %vm917, 65537, 0
        %v919 = vperm.slane %v918, 0
        %v920 = vperm.slane %v918, 4
        %v921 = vunpack.c.l.b16 %v919
        %v922 = vunpack.c.h.b16 %v919
        %v923 = vunpack.c.l.b16 0
        %v924 = vunpack.c.h.b16 0
        %vm925 = vcmp.ne.s32.totalorder %v921, %v923
        %vm926 = vcmp.ne.s32.totalorder %v922, %v924
        %vm927 = vmpackc.low %vm926, %vm925
        %v928 = vunpack.c.l.b16 %v920
        %v929 = vunpack.c.h.b16 %v920
        %v930 = vunpack.c.l.b16 0
        %v931 = vunpack.c.h.b16 0
        %vm932 = vcmp.ne.s32.totalorder %v928, %v930
        %vm933 = vcmp.ne.s32.totalorder %v929, %v931
        %vm934 = vmpackc.low %vm933, %vm932
        %v935 = vsel %vm927, %v581, 0
        %v936 = vsel %vm934, %v582, 0
        %v939 = vunpack.c.l.b16 %v935
        %v940 = vunpack.c.l.b16 %v936
        %v941 = vunpack.c.h.b16 %v935
        %v942 = vunpack.c.h.b16 %v936
        %v943 = vpack.c.b16 %v940, %v939
        %v944 = vpack.c.b16 %v942, %v941
        %947 = vst [vmem:[#allocation2 + $0x40] sm:$0xff] %v943
        %948 = vst [vmem:[#allocation2 + $0x48] sm:$0xff] %v944
        %vm949 = vmand %vm834, %vm755
        %vm950 = vmand %vm949, %vm757
        %v951 = vsel %vm950, 1, 0
        %v952 = vperm.slane %v951, 0
        %v953 = vperm.slane %v951, 1
        %vm954 = vcmp.eq.s32.totalorder %v952, 1
        %vm955 = vcmp.eq.s32.totalorder %v953, 1
        %vm956 = vmpackc.low %vm955, %vm954
        %v957 = vsel %vm956, 65537, 0
        %v958 = vperm.slane %v957, 0
        %v959 = vperm.slane %v957, 4
        %960 = vrot.lane.b32.xlu0 %v958, 1
        %v961 = vpop.permute.xlu0 %960
        %962 = vrot.lane.b32.xlu0 %v959, 1
        %v963 = vpop.permute.xlu0 %962
        %v964 = vsel %vm902, %v961, %v963
        %v965 = vunpack.c.l.b16 %v961
        %v966 = vunpack.c.h.b16 %v961
        %v967 = vunpack.c.l.b16 0
        %v968 = vunpack.c.h.b16 0
        %vm969 = vcmp.ne.s32.totalorder %v965, %v967
        %vm970 = vcmp.ne.s32.totalorder %v966, %v968
        %vm971 = vmpackc.low %vm970, %vm969
        %v972 = vunpack.c.l.b16 %v964
        %v973 = vunpack.c.h.b16 %v964
        %v974 = vunpack.c.l.b16 0
        %v975 = vunpack.c.h.b16 0
        %vm976 = vcmp.ne.s32.totalorder %v972, %v974
        %vm977 = vcmp.ne.s32.totalorder %v973, %v975
        %vm978 = vmpackc.low %vm977, %vm976
        %v979 = vunpack.c.l.b16 %v963
        %v980 = vunpack.c.h.b16 %v963
        %v981 = vunpack.c.l.b16 0
        %v982 = vunpack.c.h.b16 0
        %vm983 = vcmp.ne.s32.totalorder %v979, %v981
        %vm984 = vcmp.ne.s32.totalorder %v980, %v982
        %vm985 = vmpackc.low %vm984, %vm983
        %v986 = vsel %vm971, %v581, 0
        %v987 = vsel %vm978, %v582, 0
        %v988 = vsel %vm985, %v589, 0
        %v992 = vunpack.c.l.b16 %v986
        %v993 = vunpack.c.l.b16 %v987
        %v994 = vunpack.c.l.b16 %v988
        %v995 = vunpack.c.h.b16 %v986
        %v996 = vunpack.c.h.b16 %v987
        %v997 = vunpack.c.h.b16 %v988
        %v998 = vpack.c.b16 %v993, %v992
        %v999 = vpack.c.b16 %v994, %v994
        %v1000 = vpack.c.b16 %v996, %v995
        %v1001 = vpack.c.b16 %v997, %v997
        %1002 = vrot.lane.b32.xlu0 %v998, 127
        %v1003 = vpop.permute.xlu0 %1002
        %1004 = vrot.lane.b32.xlu0 %v999, 127
        %v1005 = vpop.permute.xlu0 %1004
        %1006 = vrot.lane.b32.xlu0 %v1000, 127
        %v1007 = vpop.permute.xlu0 %1006
        %1008 = vrot.lane.b32.xlu0 %v1001, 127
        %v1009 = vpop.permute.xlu0 %1008
        %v1010 = vrot.slane %v1003, 4
        %v1011 = vrot.slane %v1005, 4
        %v1012 = vrot.slane %v1007, 4
        %v1013 = vrot.slane %v1009, 4
        %v1014 = vsel %vm667, %v1010, %v1011
        %v1015 = vsel %vm850, %v1003, %v1014
        %v1016 = vsel %vm667, %v1012, %v1013
        %v1017 = vsel %vm850, %v1007, %v1016
        %1020 = vst [vmem:[#allocation2 + $0x50] sm:$0xff] %v1015
        %1021 = vst [vmem:[#allocation2 + $0x58] sm:$0xff] %v1017
        %v1022 = vadd.s32 %v591, 1
        %vm1023 = vcmp.ge.s32.totalorder %v1022, 0
        %vm1024 = vcmp.lt.s32.totalorder %v1022, 16
        %vm1025 = vmand %vm1023, %vm1024
        %vm1026 = vmand %vm1025, %vm599
        %vm1027 = vmand %vm1026, %vm601
        %v1028 = vsel %vm1027, 1, 0
        %v1029 = vperm.slane %v1028, 0
        %v1030 = vperm.slane %v1028, 1
        %vm1031 = vcmp.eq.s32.totalorder %v1029, 1
        %vm1032 = vcmp.eq.s32.totalorder %v1030, 1
        %vm1033 = vmpackc.low %vm1032, %vm1031
        %v1034 = vsel %vm1033, 65537, 0
        %v1035 = vperm.slane %v1034, 0
        %v1036 = vperm.slane %v1034, 4
        %1037 = vrot.lane.b32.xlu0 %v1035, 15
        %v1038 = vpop.permute.xlu0 %1037
        %1039 = vrot.lane.b32.xlu0 %v1036, 15
        %v1040 = vpop.permute.xlu0 %1039
        %v1041 = vsel %vm824, %v1038, %v1040
        %v1042 = vunpack.c.l.b16 %v1038
        %v1043 = vunpack.c.h.b16 %v1038
        %v1044 = vunpack.c.l.b16 0
        %v1045 = vunpack.c.h.b16 0
        %vm1046 = vcmp.ne.s32.totalorder %v1042, %v1044
        %vm1047 = vcmp.ne.s32.totalorder %v1043, %v1045
        %vm1048 = vmpackc.low %vm1047, %vm1046
        %v1049 = vunpack.c.l.b16 %v1041
        %v1050 = vunpack.c.h.b16 %v1041
        %v1051 = vunpack.c.l.b16 0
        %v1052 = vunpack.c.h.b16 0
        %vm1053 = vcmp.ne.s32.totalorder %v1049, %v1051
        %vm1054 = vcmp.ne.s32.totalorder %v1050, %v1052
        %vm1055 = vmpackc.low %vm1054, %vm1053
        %v1056 = vunpack.c.l.b16 %v1040
        %v1057 = vunpack.c.h.b16 %v1040
        %v1058 = vunpack.c.l.b16 0
        %v1059 = vunpack.c.h.b16 0
        %vm1060 = vcmp.ne.s32.totalorder %v1056, %v1058
        %vm1061 = vcmp.ne.s32.totalorder %v1057, %v1059
        %vm1062 = vmpackc.low %vm1061, %vm1060
        %v1063 = vsel %vm1048, %v581, 0
        %v1064 = vsel %vm1055, %v582, 0
        %v1065 = vsel %vm1062, %v589, 0
        %v1069 = vunpack.c.l.b16 %v1063
        %v1070 = vunpack.c.l.b16 %v1064
        %v1071 = vunpack.c.l.b16 %v1065
        %v1072 = vunpack.c.h.b16 %v1063
        %v1073 = vunpack.c.h.b16 %v1064
        %v1074 = vunpack.c.h.b16 %v1065
        %v1075 = vpack.c.b16 %v1070, %v1069
        %v1076 = vpack.c.b16 %v1071, %v1071
        %v1077 = vpack.c.b16 %v1073, %v1072
        %v1078 = vpack.c.b16 %v1074, %v1074
        %1079 = vrot.lane.b32.xlu0 %v1075, 113
        %v1080 = vpop.permute.xlu0 %1079
        %1081 = vrot.lane.b32.xlu0 %v1076, 113
        %v1082 = vpop.permute.xlu0 %1081
        %1083 = vrot.lane.b32.xlu0 %v1077, 113
        %v1084 = vpop.permute.xlu0 %1083
        %1085 = vrot.lane.b32.xlu0 %v1078, 113
        %v1086 = vpop.permute.xlu0 %1085
        %v1087 = vrot.slane %v1080, 4
        %v1088 = vrot.slane %v1082, 4
        %v1089 = vrot.slane %v1084, 4
        %v1090 = vrot.slane %v1086, 4
        %v1091 = vsel %vm667, %v1087, %v1088
        %v1092 = vsel %vm772, %v1080, %v1091
        %v1093 = vsel %vm667, %v1089, %v1090
        %v1094 = vsel %vm772, %v1084, %v1093
        %1097 = vst [vmem:[#allocation2 + $0x60] sm:$0xff] %v1092
        %1098 = vst [vmem:[#allocation2 + $0x68] sm:$0xff] %v1094
        %vm1099 = vmand %vm1025, %vm677
        %vm1100 = vmand %vm1099, %vm679
        %v1101 = vsel %vm1100, 1, 0
        %v1102 = vperm.slane %v1101, 0
        %v1103 = vperm.slane %v1101, 1
        %vm1104 = vcmp.eq.s32.totalorder %v1102, 1
        %vm1105 = vcmp.eq.s32.totalorder %v1103, 1
        %vm1106 = vmpackc.low %vm1105, %vm1104
        %v1107 = vsel %vm1106, 65537, 0
        %v1108 = vperm.slane %v1107, 0
        %v1109 = vperm.slane %v1107, 4
        %1110 = vrot.lane.b32.xlu0 %v1108, 16
        %v1111 = vpop.permute.xlu0 %1110
        %1112 = vrot.lane.b32.xlu0 %v1109, 16
        %v1113 = vpop.permute.xlu0 %1112
        %v1114 = vsel %vm746, %v1111, %v1113
        %v1115 = vunpack.c.l.b16 %v1111
        %v1116 = vunpack.c.h.b16 %v1111
        %v1117 = vunpack.c.l.b16 0
        %v1118 = vunpack.c.h.b16 0
        %vm1119 = vcmp.ne.s32.totalorder %v1115, %v1117
        %vm1120 = vcmp.ne.s32.totalorder %v1116, %v1118
        %vm1121 = vmpackc.low %vm1120, %vm1119
        %v1122 = vunpack.c.l.b16 %v1114
        %v1123 = vunpack.c.h.b16 %v1114
        %v1124 = vunpack.c.l.b16 0
        %v1125 = vunpack.c.h.b16 0
        %vm1126 = vcmp.ne.s32.totalorder %v1122, %v1124
        %vm1127 = vcmp.ne.s32.totalorder %v1123, %v1125
        %vm1128 = vmpackc.low %vm1127, %vm1126
        %v1129 = vunpack.c.l.b16 %v1113
        %v1130 = vunpack.c.h.b16 %v1113
        %v1131 = vunpack.c.l.b16 0
        %v1132 = vunpack.c.h.b16 0
        %vm1133 = vcmp.ne.s32.totalorder %v1129, %v1131
        %vm1134 = vcmp.ne.s32.totalorder %v1130, %v1132
        %vm1135 = vmpackc.low %vm1134, %vm1133
        %v1136 = vsel %vm1121, %v581, 0
        %v1137 = vsel %vm1128, %v582, 0
        %v1138 = vsel %vm1135, %v589, 0
        %v1142 = vunpack.c.l.b16 %v1136
        %v1143 = vunpack.c.l.b16 %v1137
        %v1144 = vunpack.c.l.b16 %v1138
        %v1145 = vunpack.c.h.b16 %v1136
        %v1146 = vunpack.c.h.b16 %v1137
        %v1147 = vunpack.c.h.b16 %v1138
        %v1148 = vpack.c.b16 %v1143, %v1142
        %v1149 = vpack.c.b16 %v1144, %v1144
        %v1150 = vpack.c.b16 %v1146, %v1145
        %v1151 = vpack.c.b16 %v1147, %v1147
        %1152 = vrot.lane.b32.xlu0 %v1148, 112
        %v1153 = vpop.permute.xlu0 %1152
        %1154 = vrot.lane.b32.xlu0 %v1149, 112
        %v1155 = vpop.permute.xlu0 %1154
        %1156 = vrot.lane.b32.xlu0 %v1150, 112
        %v1157 = vpop.permute.xlu0 %1156
        %1158 = vrot.lane.b32.xlu0 %v1151, 112
        %v1159 = vpop.permute.xlu0 %1158
        %v1160 = vrot.slane %v1153, 4
        %v1161 = vrot.slane %v1155, 4
        %v1162 = vrot.slane %v1157, 4
        %v1163 = vrot.slane %v1159, 4
        %v1164 = vsel %vm667, %v1160, %v1161
        %v1165 = vsel %vm694, %v1153, %v1164
        %v1166 = vsel %vm667, %v1162, %v1163
        %v1167 = vsel %vm694, %v1157, %v1166
        %1170 = vst [vmem:[#allocation2 + $0x70] sm:$0xff] %v1165
        %1171 = vst [vmem:[#allocation2 + $0x78] sm:$0xff] %v1167
        %vm1172 = vmand %vm1025, %vm755
        %vm1173 = vmand %vm1172, %vm757
        %v1174 = vsel %vm1173, 1, 0
        %v1175 = vperm.slane %v1174, 0
        %v1176 = vperm.slane %v1174, 1
        %vm1177 = vcmp.eq.s32.totalorder %v1175, 1
        %vm1178 = vcmp.eq.s32.totalorder %v1176, 1
        %vm1179 = vmpackc.low %vm1178, %vm1177
        %v1180 = vsel %vm1179, 65537, 0
        %v1181 = vperm.slane %v1180, 0
        %v1182 = vperm.slane %v1180, 4
        %1183 = vrot.lane.b32.xlu0 %v1181, 17
        %v1184 = vpop.permute.xlu0 %1183
        %1185 = vrot.lane.b32.xlu0 %v1182, 17
        %v1186 = vpop.permute.xlu0 %1185
        %v1187 = vsel %vm669, %v1184, %v1186
        %v1188 = vunpack.c.l.b16 %v1184
        %v1189 = vunpack.c.h.b16 %v1184
        %v1190 = vunpack.c.l.b16 0
        %v1191 = vunpack.c.h.b16 0
        %vm1192 = vcmp.ne.s32.totalorder %v1188, %v1190
        %vm1193 = vcmp.ne.s32.totalorder %v1189, %v1191
        %vm1194 = vmpackc.low %vm1193, %vm1192
        %v1195 = vunpack.c.l.b16 %v1187
        %v1196 = vunpack.c.h.b16 %v1187
        %v1197 = vunpack.c.l.b16 0
        %v1198 = vunpack.c.h.b16 0
        %vm1199 = vcmp.ne.s32.totalorder %v1195, %v1197
        %vm1200 = vcmp.ne.s32.totalorder %v1196, %v1198
        %vm1201 = vmpackc.low %vm1200, %vm1199
        %v1202 = vunpack.c.l.b16 %v1186
        %v1203 = vunpack.c.h.b16 %v1186
        %v1204 = vunpack.c.l.b16 0
        %v1205 = vunpack.c.h.b16 0
        %vm1206 = vcmp.ne.s32.totalorder %v1202, %v1204
        %vm1207 = vcmp.ne.s32.totalorder %v1203, %v1205
        %vm1208 = vmpackc.low %vm1207, %vm1206
        %v1209 = vsel %vm1194, %v581, 0
        %v1210 = vsel %vm1201, %v582, 0
        %v1211 = vsel %vm1208, %v589, 0
        %v1215 = vunpack.c.l.b16 %v1209
        %v1216 = vunpack.c.l.b16 %v1210
        %v1217 = vunpack.c.l.b16 %v1211
        %v1218 = vunpack.c.h.b16 %v1209
        %v1219 = vunpack.c.h.b16 %v1210
        %v1220 = vunpack.c.h.b16 %v1211
        %v1221 = vpack.c.b16 %v1216, %v1215
        %v1222 = vpack.c.b16 %v1217, %v1217
        %v1223 = vpack.c.b16 %v1219, %v1218
        %v1224 = vpack.c.b16 %v1220, %v1220
        %1225 = vrot.lane.b32.xlu0 %v1221, 111
        %v1226 = vpop.permute.xlu0 %1225
        %1227 = vrot.lane.b32.xlu0 %v1222, 111
        %v1228 = vpop.permute.xlu0 %1227
        %1229 = vrot.lane.b32.xlu0 %v1223, 111
        %v1230 = vpop.permute.xlu0 %1229
        %1231 = vrot.lane.b32.xlu0 %v1224, 111
        %v1232 = vpop.permute.xlu0 %1231
        %v1233 = vrot.slane %v1226, 4
        %v1234 = vrot.slane %v1228, 4
        %v1235 = vrot.slane %v1230, 4
        %v1236 = vrot.slane %v1232, 4
        %v1237 = vsel %vm667, %v1233, %v1234
        %v1238 = vsel %vm616, %v1226, %v1237
        %v1239 = vsel %vm667, %v1235, %v1236
        %v1240 = vsel %vm616, %v1230, %v1239
        %1243 = vst [vmem:[#allocation2 + $0x80] sm:$0xff] %v1238
        %1244 = vst [vmem:[#allocation2 + $0x88] sm:$0xff] %v1240
        %v1245 = vld [vmem:[#allocation7] sm:$0xff]
        %v1246 = vld [vmem:[#allocation7 + $0x8] sm:$0xff]
        %v1247 = vld [vmem:[#allocation7 + $0x10] sm:$0xff]
        %v1248 = vld [vmem:[#allocation7 + $0x18] sm:$0xff]
        %v1249 = vld [vmem:[#allocation2] sm:$0xff]
        %v1250 = vld [vmem:[#allocation2 + $0x8] sm:$0xff]
        %v1251 = vld [vmem:[#allocation2 + $0x10] sm:$0xff]
        %v1252 = vld [vmem:[#allocation2 + $0x18] sm:$0xff]
        %v1253 = vld [vmem:[#allocation2 + $0x20] sm:$0xff]
        %v1254 = vld [vmem:[#allocation2 + $0x28] sm:$0xff]
        %v1255 = vld [vmem:[#allocation2 + $0x30] sm:$0xff]
        %v1256 = vld [vmem:[#allocation2 + $0x38] sm:$0xff]
        %v1257 = vld [vmem:[#allocation2 + $0x40] sm:$0xff]
        %v1258 = vld [vmem:[#allocation2 + $0x48] sm:$0xff]
        %v1259 = vld [vmem:[#allocation2 + $0x50] sm:$0xff]
        %v1260 = vld [vmem:[#allocation2 + $0x58] sm:$0xff]
        %v1261 = vld [vmem:[#allocation2 + $0x60] sm:$0xff]
        %v1262 = vld [vmem:[#allocation2 + $0x68] sm:$0xff]
        %v1263 = vld [vmem:[#allocation2 + $0x70] sm:$0xff]
        %v1264 = vld [vmem:[#allocation2 + $0x78] sm:$0xff]
        %v1265 = vld [vmem:[#allocation2 + $0x80] sm:$0xff]
        %v1266 = vld [vmem:[#allocation2 + $0x88] sm:$0xff]
        %v1267 = vld [vmem:[%s5] sm:$0xff]
        %v1268 = vld [vmem:[%s5 + $0x8] sm:$0xff]
        %v1269 = vld [vmem:[%s5 + $0x10] sm:$0xff]
        %v1270 = vld [vmem:[%s5 + $0x18] sm:$0xff]
        %1272 = vset.pattern.permute.xlu0 0
        %1273 = vperm.xlu0 %1272, %v1267
        %v1274 = vpop.permute.xlu0 %1273
        %1277 = vset.pattern.permute.xlu0 0
        %1278 = vperm.xlu0 %1277, %v1268
        %v1279 = vpop.permute.xlu0 %1278
        %1282 = vset.pattern.permute.xlu0 0
        %1283 = vperm.xlu0 %1282, %v1269
        %v1284 = vpop.permute.xlu0 %1283
        %1287 = vset.pattern.permute.xlu0 0
        %1288 = vperm.xlu0 %1287, %v1270
        %v1289 = vpop.permute.xlu0 %1288
        %v1295 = vunpack.c.l.b16 %v1245
        %v1296 = vunpack.c.h.b16 %v1245
        %v1297 = vunpack.c.l.b16 %v1246
        %v1298 = vunpack.c.h.b16 %v1246
        %v1299 = vunpack.c.l.b16 %v1247
        %v1300 = vunpack.c.h.b16 %v1247
        %v1301 = vunpack.c.l.b16 %v1248
        %v1302 = vunpack.c.h.b16 %v1248
        %v1303 = vpack.c.b16 %v1297, %v1295
        %v1304 = vpack.c.b16 %v1298, %v1296
        %v1305 = vpack.c.b16 %v1301, %v1299
        %v1306 = vpack.c.b16 %v1302, %v1300
        %v1327 = vunpack.c.l.b16 %v1249
        %v1328 = vunpack.c.h.b16 %v1249
        %v1329 = vunpack.c.l.b16 %v1250
        %v1330 = vunpack.c.h.b16 %v1250
        %v1331 = vunpack.c.l.b16 %v1251
        %v1332 = vunpack.c.h.b16 %v1251
        %v1333 = vunpack.c.l.b16 %v1252
        %v1334 = vunpack.c.h.b16 %v1252
        %v1335 = vunpack.c.l.b16 %v1253
        %v1336 = vunpack.c.h.b16 %v1253
        %v1337 = vunpack.c.l.b16 %v1254
        %v1338 = vunpack.c.h.b16 %v1254
        %v1339 = vunpack.c.l.b16 %v1255
        %v1340 = vunpack.c.h.b16 %v1255
        %v1341 = vunpack.c.l.b16 %v1256
        %v1342 = vunpack.c.h.b16 %v1256
        %v1343 = vunpack.c.l.b16 %v1257
        %v1344 = vunpack.c.h.b16 %v1257
        %v1345 = vunpack.c.l.b16 %v1258
        %v1346 = vunpack.c.h.b16 %v1258
        %v1347 = vunpack.c.l.b16 %v1259
        %v1348 = vunpack.c.h.b16 %v1259
        %v1349 = vunpack.c.l.b16 %v1260
        %v1350 = vunpack.c.h.b16 %v1260
        %v1351 = vunpack.c.l.b16 %v1261
        %v1352 = vunpack.c.h.b16 %v1261
        %v1353 = vunpack.c.l.b16 %v1262
        %v1354 = vunpack.c.h.b16 %v1262
        %v1355 = vunpack.c.l.b16 %v1263
        %v1356 = vunpack.c.h.b16 %v1263
        %v1357 = vunpack.c.l.b16 %v1264
        %v1358 = vunpack.c.h.b16 %v1264
        %v1359 = vunpack.c.l.b16 %v1265
        %v1360 = vunpack.c.h.b16 %v1265
        %v1361 = vunpack.c.l.b16 %v1266
        %v1362 = vunpack.c.h.b16 %v1266
        %v1363 = vpack.c.b16 %v1329, %v1327
        %v1364 = vpack.c.b16 %v1330, %v1328
        %v1365 = vpack.c.b16 %v1333, %v1331
        %v1366 = vpack.c.b16 %v1334, %v1332
        %v1367 = vpack.c.b16 %v1337, %v1335
        %v1368 = vpack.c.b16 %v1338, %v1336
        %v1369 = vpack.c.b16 %v1341, %v1339
        %v1370 = vpack.c.b16 %v1342, %v1340
        %v1371 = vpack.c.b16 %v1345, %v1343
        %v1372 = vpack.c.b16 %v1346, %v1344
        %v1373 = vpack.c.b16 %v1349, %v1347
        %v1374 = vpack.c.b16 %v1350, %v1348
        %v1375 = vpack.c.b16 %v1353, %v1351
        %v1376 = vpack.c.b16 %v1354, %v1352
        %v1377 = vpack.c.b16 %v1357, %v1355
        %v1378 = vpack.c.b16 %v1358, %v1356
        %v1379 = vpack.c.b16 %v1361, %v1359
        %v1380 = vpack.c.b16 %v1362, %v1360
        %vm1399 = vcmask 130048
        %v1401 = vsel %vm1399, %v1304, 0
        %v1404 = vsel %vm1399, %v1306, 0
        %1406 = vmatpush.bf16.msra.mxu0 %v1377
        %1407 = vmatpush.bf16.msra.mxu0 %v1375
        %1408 = vmatpush.bf16.msra.mxu0 %v1373
        %1409 = vmatpush.bf16.msra.mxu0 %v1371
        %1410 = vmatpush.bf16.msra.mxu0 %v1369
        %1411 = vmatpush.bf16.msra.mxu0 %v1367
        %1412 = vmatpush.bf16.msra.mxu0 %v1365
        %1413 = vmatpush.bf16.msra.mxu0 %v1363
        %1414 = vmatmul.bf16.gmra.mxu0 %v1303
        %v1415 = vpop.f32.mrf.mxu0
        %v1416 = vadd.f32 %v1274, %v1415
        %v1417 = vpop.f32.mrf.mxu0
        %v1418 = vadd.f32 %v1279, %v1417
        %1419 = vmatmul.bf16.gmra.mxu0 %v1305
        %v1420 = vpop.f32.mrf.mxu0
        %v1421 = vadd.f32 %v1284, %v1420
        %v1422 = vpop.f32.mrf.mxu0
        %v1423 = vadd.f32 %v1289, %v1422
        %1424 = vdwg.mxu0
        %1425 = vmatpush.bf16.msra.mxu0 0
        %1426 = vmatpush.bf16.msra.mxu0 0
        %1427 = vmatpush.bf16.msra.mxu0 0
        %1428 = vmatpush.bf16.msra.mxu0 0
        %1429 = vmatpush.bf16.msra.mxu0 0
        %1430 = vmatpush.bf16.msra.mxu0 0
        %1431 = vmatpush.bf16.msra.mxu0 0
        %1432 = vmatpush.bf16.msra.mxu0 %v1379
        %1433 = vmatmul.bf16.gmra.mxu0 %v1401
        %v1434 = vpop.f32.mrf.mxu0
        %v1435 = vadd.f32 %v1416, %v1434
        %v1436 = vpop.f32.mrf.mxu0
        %v1437 = vadd.f32 %v1418, %v1436
        %1438 = vmatmul.bf16.gmra.mxu0 %v1404
        %v1439 = vpop.f32.mrf.mxu0
        %v1440 = vadd.f32 %v1421, %v1439
        %v1441 = vpop.f32.mrf.mxu0
        %v1442 = vadd.f32 %v1423, %v1441
        %1443 = vdwg.mxu0
        %1444 = vmatpush.bf16.msra.mxu0 %v1378
        %1445 = vmatpush.bf16.msra.mxu0 %v1376
        %1446 = vmatpush.bf16.msra.mxu0 %v1374
        %1447 = vmatpush.bf16.msra.mxu0 %v1372
        %1448 = vmatpush.bf16.msra.mxu0 %v1370
        %1449 = vmatpush.bf16.msra.mxu0 %v1368
        %1450 = vmatpush.bf16.msra.mxu0 %v1366
        %1451 = vmatpush.bf16.msra.mxu0 %v1364
        %1452 = vmatmul.bf16.gmra.mxu0 %v1303
        %v1453 = vpop.f32.mrf.mxu0
        %v1454 = vadd.f32 %v1274, %v1453
        %v1455 = vpop.f32.mrf.mxu0
        %v1456 = vadd.f32 %v1279, %v1455
        %1457 = vmatmul.bf16.gmra.mxu0 %v1305
        %v1458 = vpop.f32.mrf.mxu0
        %v1459 = vadd.f32 %v1284, %v1458
        %v1460 = vpop.f32.mrf.mxu0
        %v1461 = vadd.f32 %v1289, %v1460
        %1462 = vdwg.mxu0
        %1463 = vmatpush.bf16.msra.mxu0 0
        %1464 = vmatpush.bf16.msra.mxu0 0
        %1465 = vmatpush.bf16.msra.mxu0 0
        %1466 = vmatpush.bf16.msra.mxu0 0
        %1467 = vmatpush.bf16.msra.mxu0 0
        %1468 = vmatpush.bf16.msra.mxu0 0
        %1469 = vmatpush.bf16.msra.mxu0 0
        %1470 = vmatpush.bf16.msra.mxu0 %v1380
        %1471 = vmatmul.bf16.gmra.mxu0 %v1401
        %v1472 = vpop.f32.mrf.mxu0
        %v1473 = vadd.f32 %v1454, %v1472
        %v1474 = vpop.f32.mrf.mxu0
        %v1475 = vadd.f32 %v1456, %v1474
        %1476 = vmatmul.bf16.gmra.mxu0 %v1404
        %v1477 = vpop.f32.mrf.mxu0
        %v1478 = vadd.f32 %v1459, %v1477
        %v1479 = vpop.f32.mrf.mxu0
        %v1480 = vadd.f32 %v1461, %v1479
        %1481 = vdwg.mxu0
        %v1482 = vmax.f32 %v1435, 0.0
        %v1483 = vmax.f32 %v1473, 0.0
        %v1484 = vmax.f32 %v1437, 0.0
        %v1485 = vmax.f32 %v1475, 0.0
        %v1486 = vmax.f32 %v1440, 0.0
        %v1487 = vmax.f32 %v1478, 0.0
        %v1488 = vmax.f32 %v1442, 0.0
        %v1489 = vmax.f32 %v1480, 0.0
        %v1490 = vld [vmem:[%s6] sm:$0xf]
        %v1491 = vld [vmem:[%s6 + $0x4] sm:$0xf]
        %v1492 = vld [vmem:[%s6 + $0x8] sm:$0xf]
        %v1493 = vld [vmem:[%s6 + $0xc] sm:$0xf]
        %v1494 = vld [vmem:[%s6 + $0x10] sm:$0xf]
        %v1495 = vld [vmem:[%s6 + $0x14] sm:$0xf]
        %v1496 = vld [vmem:[%s6 + $0x18] sm:$0xf]
        %v1497 = vld [vmem:[%s6 + $0x1c] sm:$0xf]
        %v1498 = vpack.c.bf16 %v1484, %v1482
        %v1499 = vpack.c.bf16 %v1485, %v1483
        %v1500 = vpack.c.bf16 %v1488, %v1486
        %v1501 = vpack.c.bf16 %v1489, %v1487
        %v1502 = vld [vmem:[%s7] sm:$0xff]
        %v1503 = vld [vmem:[%s7 + $0x8] sm:$0xff]
        %v1504 = vld [vmem:[%s7 + $0x10] sm:$0xff]
        %v1505 = vld [vmem:[%s7 + $0x18] sm:$0xff]
        %v1506 = vld [vmem:[%s7 + $0x20] sm:$0xff]
        %v1507 = vld [vmem:[%s7 + $0x28] sm:$0xff]
        %v1508 = vld [vmem:[%s7 + $0x30] sm:$0xff]
        %v1509 = vld [vmem:[%s7 + $0x38] sm:$0xff]
        %1511 = vset.pattern.permute.xlu0 0
        %1512 = vperm.xlu0 %1511, %v1502
        %v1513 = vpop.permute.xlu0 %1512
        %1516 = vset.pattern.permute.xlu0 0
        %1517 = vperm.xlu0 %1516, %v1503
        %v1518 = vpop.permute.xlu0 %1517
        %1521 = vset.pattern.permute.xlu0 0
        %1522 = vperm.xlu0 %1521, %v1504
        %v1523 = vpop.permute.xlu0 %1522
        %1526 = vset.pattern.permute.xlu0 0
        %1527 = vperm.xlu0 %1526, %v1505
        %v1528 = vpop.permute.xlu0 %1527
        %1531 = vset.pattern.permute.xlu0 0
        %1532 = vperm.xlu0 %1531, %v1506
        %v1533 = vpop.permute.xlu0 %1532
        %1536 = vset.pattern.permute.xlu0 0
        %1537 = vperm.xlu0 %1536, %v1507
        %v1538 = vpop.permute.xlu0 %1537
        %1541 = vset.pattern.permute.xlu0 0
        %1542 = vperm.xlu0 %1541, %v1508
        %v1543 = vpop.permute.xlu0 %1542
        %1546 = vset.pattern.permute.xlu0 0
        %1547 = vperm.xlu0 %1546, %v1509
        %v1548 = vpop.permute.xlu0 %1547
        %v1558 = vunpack.c.l.b16 %v1490
        %v1559 = vunpack.c.l.b16 %v1491
        %v1560 = vunpack.c.l.b16 %v1492
        %v1561 = vunpack.c.l.b16 %v1493
        %v1562 = vunpack.c.l.b16 %v1494
        %v1563 = vunpack.c.l.b16 %v1495
        %v1564 = vunpack.c.l.b16 %v1496
        %v1565 = vunpack.c.l.b16 %v1497
        %v1566 = vpack.c.b16 %v1559, %v1558
        %v1567 = vpack.c.b16 %v1561, %v1560
        %v1568 = vpack.c.b16 %v1563, %v1562
        %v1569 = vpack.c.b16 %v1565, %v1564
        %vm1570 = vcmask 261120
        %v1572 = vsel %vm1570, %v1566, 0
        %v1575 = vsel %vm1570, %v1567, 0
        %v1578 = vsel %vm1570, %v1568, 0
        %v1581 = vsel %vm1570, %v1569, 0
        %1583 = vmatpush.bf16.msra.mxu0 0
        %1584 = vmatpush.bf16.msra.mxu0 0
        %1585 = vmatpush.bf16.msra.mxu0 0
        %1586 = vmatpush.bf16.msra.mxu0 0
        %1587 = vmatpush.bf16.msra.mxu0 0
        %1588 = vmatpush.bf16.msra.mxu0 0
        %1589 = vmatpush.bf16.msra.mxu0 %v1500
        %1590 = vmatpush.bf16.msra.mxu0 %v1498
        %1591 = vmatmul.bf16.gmra.mxu0 %v1572
        %v1592 = vpop.f32.mrf.mxu0
        %v1593 = vadd.f32 %v1513, %v1592
        %v1594 = vpop.f32.mrf.mxu0
        %v1595 = vadd.f32 %v1518, %v1594
        %1596 = vmatmul.bf16.gmra.mxu0 %v1575
        %v1597 = vpop.f32.mrf.mxu0
        %v1598 = vadd.f32 %v1523, %v1597
        %v1599 = vpop.f32.mrf.mxu0
        %v1600 = vadd.f32 %v1528, %v1599
        %1601 = vmatmul.bf16.gmra.mxu0 %v1578
        %v1602 = vpop.f32.mrf.mxu0
        %v1603 = vadd.f32 %v1533, %v1602
        %v1604 = vpop.f32.mrf.mxu0
        %v1605 = vadd.f32 %v1538, %v1604
        %1606 = vmatmul.bf16.gmra.mxu0 %v1581
        %v1607 = vpop.f32.mrf.mxu0
        %v1608 = vadd.f32 %v1543, %v1607
        %v1609 = vpop.f32.mrf.mxu0
        %v1610 = vadd.f32 %v1548, %v1609
        %1611 = vdwg.mxu0
        %1612 = vmatpush.bf16.msra.mxu0 0
        %1613 = vmatpush.bf16.msra.mxu0 0
        %1614 = vmatpush.bf16.msra.mxu0 0
        %1615 = vmatpush.bf16.msra.mxu0 0
        %1616 = vmatpush.bf16.msra.mxu0 0
        %1617 = vmatpush.bf16.msra.mxu0 0
        %1618 = vmatpush.bf16.msra.mxu0 %v1501
        %1619 = vmatpush.bf16.msra.mxu0 %v1499
        %1620 = vmatmul.bf16.gmra.mxu0 %v1572
        %v1621 = vpop.f32.mrf.mxu0
        %v1622 = vadd.f32 %v1513, %v1621
        %v1623 = vpop.f32.mrf.mxu0
        %v1624 = vadd.f32 %v1518, %v1623
        %1625 = vmatmul.bf16.gmra.mxu0 %v1575
        %v1626 = vpop.f32.mrf.mxu0
        %v1627 = vadd.f32 %v1523, %v1626
        %v1628 = vpop.f32.mrf.mxu0
        %v1629 = vadd.f32 %v1528, %v1628
        %1630 = vmatmul.bf16.gmra.mxu0 %v1578
        %v1631 = vpop.f32.mrf.mxu0
        %v1632 = vadd.f32 %v1533, %v1631
        %v1633 = vpop.f32.mrf.mxu0
        %v1634 = vadd.f32 %v1538, %v1633
        %1635 = vmatmul.bf16.gmra.mxu0 %v1581
        %v1636 = vpop.f32.mrf.mxu0
        %v1637 = vadd.f32 %v1543, %v1636
        %v1638 = vpop.f32.mrf.mxu0
        %v1639 = vadd.f32 %v1548, %v1638
        %1640 = vdwg.mxu0
        %1641 = vst [vmem:[%s558] sm:$0xff] %v1593
        %1642 = vst [vmem:[%s558 + $0x8] sm:$0xff] %v1622
        %1643 = vst [vmem:[%s558 + $0x10] sm:$0xff] %v1595
        %1644 = vst [vmem:[%s558 + $0x18] sm:$0xff] %v1624
        %1645 = vst [vmem:[%s558 + $0x20] sm:$0xff] %v1598
        %1646 = vst [vmem:[%s558 + $0x28] sm:$0xff] %v1627
        %1647 = vst [vmem:[%s558 + $0x30] sm:$0xff] %v1600
        %1648 = vst [vmem:[%s558 + $0x38] sm:$0xff] %v1629
        %1649 = vst [vmem:[%s558 + $0x40] sm:$0xff] %v1603
        %1650 = vst [vmem:[%s558 + $0x48] sm:$0xff] %v1632
        %1651 = vst [vmem:[%s558 + $0x50] sm:$0xff] %v1605
        %1652 = vst [vmem:[%s558 + $0x58] sm:$0xff] %v1634
        %1653 = vst [vmem:[%s558 + $0x60] sm:$0xff] %v1608
        %1654 = vst [vmem:[%s558 + $0x68] sm:$0xff] %v1637
        %1655 = vst [vmem:[%s558 + $0x70] sm:$0xff] %v1610
        %1656 = vst [vmem:[%s558 + $0x78] sm:$0xff] %v1639
        %s1657 = smul.u32 2, %s26
        %p1658 = scmp.lt.s32.totalorder %s25, 1
        %s1659 = scalar_select %p1658, %s25, 1
        %p1660 = scmp.lt.s32.totalorder %s1657, 1
        %s1661 = scalar_select %p1660, %s1657, 1
        %s1662 = smul.addr %s1659, 16
        %s1663 = sadd.s32 %s1661, %s1662
        %s1664 = smul.addr %s1663, 8
        %s1665 = scalar_lea.vmem %s8, %s1664
        // Predicated region
        $region143: #{_forward_impl.2} parent=125 // pred_check
          %p1666 = pneg %p263
        $region144: #{_forward_impl.2} parent=125 // pred_check_branch
          %1668 = sbr.rel (%p1666) target = $region146
        $region145: #{_forward_impl.2} parent=125 // pred_region
          %s1669 = smul.u32 2, %s26
        $region146: #{_forward_impl.2} parent=125 // pred_fallthru
          _
      $region126: #{_forward_impl.2} parent=5 // pred_fallthru
        _
      %p1670 = scmp.le.s32.totalorder 2, %s16
      // Predicated region
      $region147: #{_forward_impl.2} parent=5 // pred_check
        %p1671 = pneg %p1670
      $region148: #{_forward_impl.2} parent=5 // pred_check_branch
        %1673 = sbr.rel (%p1671) target = $region150
      $region149: #{_forward_impl.2} parent=5 // pred_region
        %s1674 = ssub.s32 %s16, 2
        // Predicated region
        $region151: #{_forward_impl.2} parent=149 // pred_check
          %p1675 = pneg %p269
        $region152: #{_forward_impl.2} parent=149 // pred_check_branch
          %1677 = sbr.rel (%p1675) target = $region154
        $region153: #{_forward_impl.2} parent=149 // pred_region
          %s1678 = smul.u32 2, %s28
          %p1679 = scmp.lt.s32.totalorder %s27, 1
          %s1680 = scalar_select %p1679, %s27, 1
          %p1681 = scmp.lt.s32.totalorder %s1678, 1
          %s1682 = scalar_select %p1681, %s1678, 1
          %s1683 = smul.addr %s1680, 16
          %s1684 = sadd.s32 %s1682, %s1683
          %s1685 = smul.addr %s1684, 8
          %s1686 = scalar_lea.vmem %s8, %s1685
        $region154: #{_forward_impl.2} parent=149 // pred_fallthru
          _
      $region150: #{_forward_impl.2} parent=5 // pred_fallthru
        _
    $region6: #{_forward_impl.2} parent=1 // loop_footer
      %s20 = sadd.s32 1, %s16
    $region7: #{_forward_impl.2} parent=1 // loop_footer_branch
      %15 = sbr.rel target = $region3
    $region8: #{_forward_impl.2} parent=1 // loop_exit
      _
    %1687 = vsyncpa [#allocation6], 1
    %s1688 = scalar_lea.sflag [#allocation6], 1
    %1689 = vsyncpa %s1688, 1
    %1690 = vsyncpa [#allocation8], 1

// kernel: _forward_impl.3
$region0: #{_forward_impl.3}
  #allocation0 [shape = 'u32[]', space=smem, size = 0x4, offset = 0x4, fixed_abs, tag = 'smem constant byte address 0x4 - core index']
  #allocation1 [shape = 'u32[72,128]{1,0:T(1,128)}', space=vmem, size = 0x9000, scoped, tag = 'internal scratch']
  #allocation2 [shape = 'bf16[144,128]{1,0:T(8,128)(2,1)}', space=vmem, size = 0x9000, scoped, tag = 'scratch operand']
  %s0 = inlined_call_operand.vmem [shape: bf16[2,16,128], index: 0, kind: input, shape index: {}, may-alias: {0,1,2}]
  %s1 = inlined_call_operand.vmem [shape: bf16[2,16,128], index: 1, kind: input, shape index: {}, may-alias: {0,1,2}]
  %s2 = inlined_call_operand.vmem [shape: bf16[2,16,128], index: 2, kind: input, shape index: {}, may-alias: {0,1,2}]
  %s3 = inlined_call_operand.vmem [shape: s32[2,128], index: 3, kind: input, shape index: {}]
  %s4 = inlined_call_operand.vmem [shape: bf16[32,144], index: 4, kind: input, shape index: {}]
  %s5 = inlined_call_operand.vmem [shape: f32[32,1], index: 5, kind: input, shape index: {}]
  %s6 = inlined_call_operand.vmem [shape: bf16[64,32], index: 6, kind: input, shape index: {}]
  %s7 = inlined_call_operand.vmem [shape: f32[64,1], index: 7, kind: input, shape index: {}]
  %s8 = inlined_call_operand.vmem [shape: f32[2,64,128], index: 8, kind: output, shape index: {}]
  %s9 = sld [smem:[#allocation0]]
  $region65: #{_forward_impl.3} parent=0
    _
  %s11 = ssub.s32 1, %s9
  %s12 = scalar_select 0, %s11, %s9
  loop: start=0, step=1, limit=4
  $region2: #{_forward_impl.3} parent=0 // loop_pre_header
    _
  $region3: #{_forward_impl.3} parent=0 // loop_header
    %s14 = sphi 0, %s18
    %p15 = scmp.ge.s32.totalorder %s14, 4
    %s21 = sphi 0, %s33
    %s22 = sphi 0, %s29
    %s23 = sphi 0, %s21
    %s24 = sphi 0, %s22
    %s25 = sphi 0, %s23
    %s26 = sphi 0, %s24
    %s44 = sphi 0, %s46
    %s47 = sphi 0, %s44
    %s48 = sphi 0, %s47
    %s64 = sphi 0, %s48
    %s72 = sphi 0, %s74
    %s75 = sphi 0, %s72
    %s76 = sphi 0, %s75
    %s92 = sphi 0, %s76
    %s106 = sphi 0, %s108
    %s109 = sphi 0, %s106
    %s110 = sphi 0, %s109
    %s126 = sphi 0, %s110
    %s132 = sphi 0, %s134
    %s135 = sphi 0, %s132
    %s136 = sphi 0, %s135
    %s152 = sphi 0, %s136
    %s156 = sphi 0, %s156
    %s158 = sphi 0, %s156
    %s159 = sphi 0, %s158
    %s173 = sphi 0, %s159
    %s177 = sphi 0, %s177
    %s179 = sphi 0, %s177
    %s180 = sphi 0, %s179
    %s194 = sphi 0, %s180
    %s198 = sphi 0, %s198
    %s200 = sphi 0, %s198
    %s201 = sphi 0, %s200
    %s215 = sphi 0, %s201
    %s219 = sphi 0, %s219
    %s221 = sphi 0, %s219
    %s222 = sphi 0, %s221
    %s236 = sphi 0, %s222
    %s244 = sphi 0, %s246
    %s247 = sphi 0, %s244
    %s248 = sphi 0, %s247
    %s264 = sphi 0, %s248
  $region4: #{_forward_impl.3} parent=0 // loop_header_branch
    %17 = sbr.rel (%p15) target = $region8
  $region5: #{_forward_impl.3} parent=0 // loop_body
    %s19 = ssub.s32 %s14, 1
    %s20 = ssub.s32 %s14, 2
    %s27 = sadd.s32 1, %s22
    %p28 = scmp.ge.s32.totalorder %s27, 1
    %s29 = scalar_select %p28, 0, %s27
    %s30 = sadd.s32 1, %s21
    %s31 = scalar_select %p28, %s30, %s21
    %p32 = scmp.ge.s32.totalorder %s31, 2
    %s33 = scalar_select %p32, 0, %s31
    %s34 = ssub.s32 %s22, 1
    %p35 = scmp.gt.s32.totalorder %s34, 0
    %s36 = scalar_select %p35, %s34, 0
    %s37 = ssub.s32 %s29, 1
    %p38 = scmp.gt.s32.totalorder %s37, 0
    %s39 = scalar_select %p38, %s37, 0
    %s40 = ssub.s32 %s21, %s33
    %s41 = ssub.s32 %s36, %s39
    %s42 = sor.u32 %s40, %s41
    %p43 = scmp.eq.s32.totalorder %s42, 0
    %s45 = sadd.s32 %s44, 1
    %s46 = scalar_select %p43, %s44, %s45
    %p49 = pneg %p43
    %p50 = scmp.eq.s32.totalorder %s14, 1
    %p51 = por %p49, %p50
    %p52 = scmp.ne.s32.totalorder %s44, %s47
    %p53 = scmp.eq.s32.totalorder %s14, 0
    %p54 = por %p52, %p53
    %p55 = scmp.ne.s32.totalorder %s44, %s47
    %p56 = scmp.eq.s32.totalorder %s19, 1
    %p57 = por %p55, %p56
    %p58 = scmp.ne.s32.totalorder %s47, %s48
    %p59 = scmp.eq.s32.totalorder %s19, 0
    %p60 = por %p58, %p59
    %p61 = scmp.ne.s32.totalorder %s47, %s48
    %p62 = scmp.eq.s32.totalorder %s20, 1
    %p63 = por %p61, %p62
    %p65 = scmp.ne.s32.totalorder %s48, %s64
    %p66 = scmp.eq.s32.totalorder %s20, 0
    %p67 = por %p65, %p66
    %s68 = ssub.s32 %s21, %s33
    %s69 = ssub.s32 %s22, %s29
    %s70 = sor.u32 %s68, %s69
    %p71 = scmp.eq.s32.totalorder %s70, 0
    %s73 = sadd.s32 %s72, 1
    %s74 = scalar_select %p71, %s72, %s73
    %p77 = pneg %p71
    %p78 = scmp.eq.s32.totalorder %s14, 1
    %p79 = por %p77, %p78
    %p80 = scmp.ne.s32.totalorder %s72, %s75
    %p81 = scmp.eq.s32.totalorder %s14, 0
    %p82 = por %p80, %p81
    %p83 = scmp.ne.s32.totalorder %s72, %s75
    %p84 = scmp.eq.s32.totalorder %s19, 1
    %p85 = por %p83, %p84
    %p86 = scmp.ne.s32.totalorder %s75, %s76
    %p87 = scmp.eq.s32.totalorder %s19, 0
    %p88 = por %p86, %p87
    %p89 = scmp.ne.s32.totalorder %s75, %s76
    %p90 = scmp.eq.s32.totalorder %s20, 1
    %p91 = por %p89, %p90
    %p93 = scmp.ne.s32.totalorder %s76, %s92
    %p94 = scmp.eq.s32.totalorder %s20, 0
    %p95 = por %p93, %p94
    %s96 = sadd.s32 %s22, 1
    %p97 = scmp.lt.s32.totalorder %s96, 0
    %s98 = scalar_select %p97, %s96, 0
    %s99 = sadd.s32 %s29, 1
    %p100 = scmp.lt.s32.totalorder %s99, 0
    %s101 = scalar_select %p100, %s99, 0
    %s102 = ssub.s32 %s21, %s33
    %s103 = ssub.s32 %s98, %s101
    %s104 = sor.u32 %s102, %s103
    %p105 = scmp.eq.s32.totalorder %s104, 0
    %s107 = sadd.s32 %s106, 1
    %s108 = scalar_select %p105, %s106, %s107
    %p111 = pneg %p105
    %p112 = scmp.eq.s32.totalorder %s14, 1
    %p113 = por %p111, %p112
    %p114 = scmp.ne.s32.totalorder %s106, %s109
    %p115 = scmp.eq.s32.totalorder %s14, 0
    %p116 = por %p114, %p115
    %p117 = scmp.ne.s32.totalorder %s106, %s109
    %p118 = scmp.eq.s32.totalorder %s19, 1
    %p119 = por %p117, %p118
    %p120 = scmp.ne.s32.totalorder %s109, %s110
    %p121 = scmp.eq.s32.totalorder %s19, 0
    %p122 = por %p120, %p121
    %p123 = scmp.ne.s32.totalorder %s109, %s110
    %p124 = scmp.eq.s32.totalorder %s20, 1
    %p125 = por %p123, %p124
    %p127 = scmp.ne.s32.totalorder %s110, %s126
    %p128 = scmp.eq.s32.totalorder %s20, 0
    %p129 = por %p127, %p128
    %s130 = ssub.s32 %s22, %s29
    %p131 = scmp.eq.s32.totalorder %s130, 0
    %s133 = sadd.s32 %s132, 1
    %s134 = scalar_select %p131, %s132, %s133
    %p137 = pneg %p131
    %p138 = scmp.eq.s32.totalorder %s14, 1
    %p139 = por %p137, %p138
    %p140 = scmp.ne.s32.totalorder %s132, %s135
    %p141 = scmp.eq.s32.totalorder %s14, 0
    %p142 = por %p140, %p141
    %p143 = scmp.ne.s32.totalorder %s132, %s135
    %p144 = scmp.eq.s32.totalorder %s19, 1
    %p145 = por %p143, %p144
    %p146 = scmp.ne.s32.totalorder %s135, %s136
    %p147 = scmp.eq.s32.totalorder %s19, 0
    %p148 = por %p146, %p147
    %p149 = scmp.ne.s32.totalorder %s135, %s136
    %p150 = scmp.eq.s32.totalorder %s20, 1
    %p151 = por %p149, %p150
    %p153 = scmp.ne.s32.totalorder %s136, %s152
    %p154 = scmp.eq.s32.totalorder %s20, 0
    %p155 = por %p153, %p154
    %s157 = sadd.s32 %s156, 1
    %p160 = scmp.eq.s32.totalorder %s14, 1
    %p161 = scmp.ne.s32.totalorder %s156, %s158
    %p162 = scmp.eq.s32.totalorder %s14, 0
    %p163 = por %p161, %p162
    %p164 = scmp.ne.s32.totalorder %s156, %s158
    %p165 = scmp.eq.s32.totalorder %s19, 1
    %p166 = por %p164, %p165
    %p167 = scmp.ne.s32.totalorder %s158, %s159
    %p168 = scmp.eq.s32.totalorder %s19, 0
    %p169 = por %p167, %p168
    %p170 = scmp.ne.s32.totalorder %s158, %s159
    %p171 = scmp.eq.s32.totalorder %s20, 1
    %p172 = por %p170, %p171
    %p174 = scmp.ne.s32.totalorder %s159, %s173
    %p175 = scmp.eq.s32.totalorder %s20, 0
    %p176 = por %p174, %p175
    %s178 = sadd.s32 %s177, 1
    %p181 = scmp.eq.s32.totalorder %s14, 1
    %p182 = scmp.ne.s32.totalorder %s177, %s179
    %p183 = scmp.eq.s32.totalorder %s14, 0
    %p184 = por %p182, %p183
    %p185 = scmp.ne.s32.totalorder %s177, %s179
    %p186 = scmp.eq.s32.totalorder %s19, 1
    %p187 = por %p185, %p186
    %p188 = scmp.ne.s32.totalorder %s179, %s180
    %p189 = scmp.eq.s32.totalorder %s19, 0
    %p190 = por %p188, %p189
    %p191 = scmp.ne.s32.totalorder %s179, %s180
    %p192 = scmp.eq.s32.totalorder %s20, 1
    %p193 = por %p191, %p192
    %p195 = scmp.ne.s32.totalorder %s180, %s194
    %p196 = scmp.eq.s32.totalorder %s20, 0
    %p197 = por %p195, %p196
    %s199 = sadd.s32 %s198, 1
    %p202 = scmp.eq.s32.totalorder %s14, 1
    %p203 = scmp.ne.s32.totalorder %s198, %s200
    %p204 = scmp.eq.s32.totalorder %s14, 0
    %p205 = por %p203, %p204
    %p206 = scmp.ne.s32.totalorder %s198, %s200
    %p207 = scmp.eq.s32.totalorder %s19, 1
    %p208 = por %p206, %p207
    %p209 = scmp.ne.s32.totalorder %s200, %s201
    %p210 = scmp.eq.s32.totalorder %s19, 0
    %p211 = por %p209, %p210
    %p212 = scmp.ne.s32.totalorder %s200, %s201
    %p213 = scmp.eq.s32.totalorder %s20, 1
    %p214 = por %p212, %p213
    %p216 = scmp.ne.s32.totalorder %s201, %s215
    %p217 = scmp.eq.s32.totalorder %s20, 0
    %p218 = por %p216, %p217
    %s220 = sadd.s32 %s219, 1
    %p223 = scmp.eq.s32.totalorder %s14, 1
    %p224 = scmp.ne.s32.totalorder %s219, %s221
    %p225 = scmp.eq.s32.totalorder %s14, 0
    %p226 = por %p224, %p225
    %p227 = scmp.ne.s32.totalorder %s219, %s221
    %p228 = scmp.eq.s32.totalorder %s19, 1
    %p229 = por %p227, %p228
    %p230 = scmp.ne.s32.totalorder %s221, %s222
    %p231 = scmp.eq.s32.totalorder %s19, 0
    %p232 = por %p230, %p231
    %p233 = scmp.ne.s32.totalorder %s221, %s222
    %p234 = scmp.eq.s32.totalorder %s20, 1
    %p235 = por %p233, %p234
    %p237 = scmp.ne.s32.totalorder %s222, %s236
    %p238 = scmp.eq.s32.totalorder %s20, 0
    %p239 = por %p237, %p238
    %s240 = ssub.s32 %s21, %s33
    %s241 = ssub.s32 %s22, %s29
    %s242 = sor.u32 %s240, %s241
    %p243 = scmp.eq.s32.totalorder %s242, 0
    %s245 = sadd.s32 %s244, 1
    %s246 = scalar_select %p243, %s244, %s245
    %p249 = pneg %p243
    %p250 = scmp.eq.s32.totalorder %s14, 1
    %p251 = por %p249, %p250
    %p252 = scmp.ne.s32.totalorder %s244, %s247
    %p253 = scmp.eq.s32.totalorder %s14, 0
    %p254 = por %p252, %p253
    %p255 = scmp.ne.s32.totalorder %s244, %s247
    %p256 = scmp.eq.s32.totalorder %s19, 1
    %p257 = por %p255, %p256
    %p258 = scmp.ne.s32.totalorder %s247, %s248
    %p259 = scmp.eq.s32.totalorder %s19, 0
    %p260 = por %p258, %p259
    %p261 = scmp.ne.s32.totalorder %s247, %s248
    %p262 = scmp.eq.s32.totalorder %s20, 1
    %p263 = por %p261, %p262
    %p265 = scmp.ne.s32.totalorder %s248, %s264
    %p266 = scmp.eq.s32.totalorder %s20, 0
    %p267 = por %p265, %p266
    %p268 = scmp.le.s32.totalorder 1, %s14
    %p269 = scmp.lt.s32.totalorder %s14, 3
    %p270 = pnand %p268, %p269
    %p271 = pneg %p270
    // Predicated region
    $region9: #{_forward_impl.3} parent=5 // pred_check
      _
    $region10: #{_forward_impl.3} parent=5 // pred_check_branch
      %273 = sbr.rel (%p270) target = $region12
    $region11: #{_forward_impl.3} parent=5 // pred_region
      %s274 = ssub.s32 %s14, 1
      // Predicated region
      $region13: #{_forward_impl.3} parent=11 // pred_check
        %p275 = pneg %p148
      $region14: #{_forward_impl.3} parent=11 // pred_check_branch
        %277 = sbr.rel (%p275) target = $region16
      $region15: #{_forward_impl.3} parent=11 // pred_region
        %p278 = scmp.lt.s32.totalorder %s24, 0
        %s279 = scalar_select %p278, %s24, 0
        %s280 = smul.addr %s279, 2
        %s281 = scalar_lea.vmem %s3, %s280
      $region16: #{_forward_impl.3} parent=11 // pred_fallthru
        _
      // Predicated region
      $region17: #{_forward_impl.3} parent=11 // pred_check
        %p282 = pneg %p169
      $region18: #{_forward_impl.3} parent=11 // pred_check_branch
        %284 = sbr.rel (%p282) target = $region20
      $region19: #{_forward_impl.3} parent=11 // pred_region
        _
      $region20: #{_forward_impl.3} parent=11 // pred_fallthru
        _
      // Predicated region
      $region21: #{_forward_impl.3} parent=11 // pred_check
        %p285 = pneg %p190
      $region22: #{_forward_impl.3} parent=11 // pred_check_branch
        %287 = sbr.rel (%p285) target = $region24
      $region23: #{_forward_impl.3} parent=11 // pred_region
        _
      $region24: #{_forward_impl.3} parent=11 // pred_fallthru
        _
      // Predicated region
      $region25: #{_forward_impl.3} parent=11 // pred_check
        %p288 = pneg %p211
      $region26: #{_forward_impl.3} parent=11 // pred_check_branch
        %290 = sbr.rel (%p288) target = $region28
      $region27: #{_forward_impl.3} parent=11 // pred_region
        _
      $region28: #{_forward_impl.3} parent=11 // pred_fallthru
        _
      // Predicated region
      $region29: #{_forward_impl.3} parent=11 // pred_check
        %p291 = pneg %p232
      $region30: #{_forward_impl.3} parent=11 // pred_check_branch
        %293 = sbr.rel (%p291) target = $region32
      $region31: #{_forward_impl.3} parent=11 // pred_region
        _
      $region32: #{_forward_impl.3} parent=11 // pred_fallthru
        _
    $region12: #{_forward_impl.3} parent=5 // pred_fallthru
      _
    %p294 = scmp.lt.s32.totalorder %s14, 2
    // Predicated region
    $region33: #{_forward_impl.3} parent=5 // pred_check
      %p295 = pneg %p294
    $region34: #{_forward_impl.3} parent=5 // pred_check_branch
      %297 = sbr.rel (%p295) target = $region36
    $region35: #{_forward_impl.3} parent=5 // pred_region
      // Predicated region
      $region37: #{_forward_impl.3} parent=35 // pred_check
        %p298 = pneg %p54
      $region38: #{_forward_impl.3} parent=35 // pred_check_branch
        %300 = sbr.rel (%p298) target = $region40
      $region39: #{_forward_impl.3} parent=35 // pred_region
        %s301 = ssub.s32 %s22, 1
        %p302 = scmp.gt.s32.totalorder %s301, 0
        %s303 = scalar_select %p302, %s301, 0
        %p304 = scmp.lt.s32.totalorder %s21, 1
        %s305 = scalar_select %p304, %s21, 1
        %p306 = scmp.lt.s32.totalorder %s303, 0
        %s307 = scalar_select %p306, %s303, 0
        %s308 = smul.addr %s305, 2
        %s309 = sadd.s32 %s307, %s308
        %s310 = smul.addr %s309, 4
        %s311 = scalar_lea.vmem %s0, %s310
        %s312 = ssub.s32 %s22, 1
        %p313 = scmp.gt.s32.totalorder %s312, 0
        %s314 = scalar_select %p313, %s312, 0
      $region40: #{_forward_impl.3} parent=35 // pred_fallthru
        _
      // Predicated region
      $region41: #{_forward_impl.3} parent=35 // pred_check
        %p315 = pneg %p82
      $region42: #{_forward_impl.3} parent=35 // pred_check_branch
        %317 = sbr.rel (%p315) target = $region44
      $region43: #{_forward_impl.3} parent=35 // pred_region
        %p318 = scmp.lt.s32.totalorder %s21, 1
        %s319 = scalar_select %p318, %s21, 1
        %p320 = scmp.lt.s32.totalorder %s22, 0
        %s321 = scalar_select %p320, %s22, 0
        %s322 = smul.addr %s319, 2
        %s323 = sadd.s32 %s321, %s322
        %s324 = smul.addr %s323, 4
        %s325 = scalar_lea.vmem %s1, %s324
      $region44: #{_forward_impl.3} parent=35 // pred_fallthru
        _
      // Predicated region
      $region45: #{_forward_impl.3} parent=35 // pred_check
        %p326 = pneg %p116
      $region46: #{_forward_impl.3} parent=35 // pred_check_branch
        %328 = sbr.rel (%p326) target = $region48
      $region47: #{_forward_impl.3} parent=35 // pred_region
        %s329 = sadd.s32 %s22, 1
        %p330 = scmp.lt.s32.totalorder %s329, 0
        %s331 = scalar_select %p330, %s329, 0
        %p332 = scmp.lt.s32.totalorder %s21, 1
        %s333 = scalar_select %p332, %s21, 1
        %p334 = scmp.lt.s32.totalorder %s331, 0
        %s335 = scalar_select %p334, %s331, 0
        %s336 = smul.addr %s333, 2
        %s337 = sadd.s32 %s335, %s336
        %s338 = smul.addr %s337, 4
        %s339 = scalar_lea.vmem %s2, %s338
        %s340 = sadd.s32 %s22, 1
        %p341 = scmp.lt.s32.totalorder %s340, 0
        %s342 = scalar_select %p341, %s340, 0
      $region48: #{_forward_impl.3} parent=35 // pred_fallthru
        _
    $region36: #{_forward_impl.3} parent=5 // pred_fallthru
      _
    %p343 = scmp.le.s32.totalorder 1, %s14
    %p344 = scmp.lt.s32.totalorder %s14, 3
    %p345 = pnand %p343, %p344
    %p346 = pneg %p345
    // Predicated region
    $region49: #{_forward_impl.3} parent=5 // pred_check
      _
    $region50: #{_forward_impl.3} parent=5 // pred_check_branch
      %348 = sbr.rel (%p345) target = $region52
    $region51: #{_forward_impl.3} parent=5 // pred_region
      %s349 = ssub.s32 %s14, 1
      %s350 = ssub.s32 %s24, 1
      %p351 = scmp.gt.s32.totalorder %s350, 0
      %s352 = scalar_select %p351, %s350, 0
      %p353 = scmp.lt.s32.totalorder %s23, 1
      %s354 = scalar_select %p353, %s23, 1
      %p355 = scmp.lt.s32.totalorder %s352, 0
      %s356 = scalar_select %p355, %s352, 0
      %s357 = smul.addr %s354, 2
      %s358 = sadd.s32 %s356, %s357
      %s359 = smul.addr %s358, 4
      %s360 = scalar_lea.vmem %s0, %s359
      %p361 = pneg %p60
      %p362 = pneg %p57
      %p363 = scmp.lt.s32.totalorder %s23, 1
      %s364 = scalar_select %p363, %s23, 1
      %p365 = scmp.lt.s32.totalorder %s24, 0
      %s366 = scalar_select %p365, %s24, 0
      %s367 = smul.addr %s364, 2
      %s368 = sadd.s32 %s366, %s367
      %s369 = smul.addr %s368, 4
      %s370 = scalar_lea.vmem %s1, %s369
      %p371 = pneg %p88
      %p372 = pneg %p85
      %s373 = sadd.s32 %s24, 1
      %p374 = scmp.lt.s32.totalorder %s373, 0
      %s375 = scalar_select %p374, %s373, 0
      %p376 = scmp.lt.s32.totalorder %s23, 1
      %s377 = scalar_select %p376, %s23, 1
      %p378 = scmp.lt.s32.totalorder %s375, 0
      %s379 = scalar_select %p378, %s375, 0
      %s380 = smul.addr %s377, 2
      %s381 = sadd.s32 %s379, %s380
      %s382 = smul.addr %s381, 4
      %s383 = scalar_lea.vmem %s2, %s382
      %p384 = pneg %p122
      %p385 = pneg %p119
      %p386 = scmp.lt.s32.totalorder %s24, 0
      %s387 = scalar_select %p386, %s24, 0
      %s388 = smul.addr %s387, 2
      %s389 = scalar_lea.vmem %s3, %s388
      %p390 = pneg %p148
      %p391 = pneg %p145
      %p392 = pneg %p169
      %p393 = pneg %p166
      %p394 = pneg %p190
      %p395 = pneg %p187
      %p396 = pneg %p211
      %p397 = pneg %p208
      %p398 = pneg %p232
      %p399 = pneg %p229
      %p400 = pneg %p260
      %p401 = pneg %p257
      %p402 = scmp.lt.s32.totalorder %s23, 1
      %s403 = scalar_select %p402, %s23, 1
      %p404 = scmp.lt.s32.totalorder %s24, 0
      %s405 = scalar_select %p404, %s24, 0
      %s406 = smul.addr %s403, 8
      %s407 = sadd.s32 %s405, %s406
      %s408 = smul.addr %s407, 8
      %s409 = scalar_lea.vmem %s8, %s408
      %s410 = ssub.s32 %s24, 1
      %p411 = scmp.gt.s32.totalorder %s410, 0
      %s412 = scalar_select %p411, %s410, 0
      %p413 = scmp.lt.s32.totalorder %s23, 1
      %s414 = scalar_select %p413, %s23, 1
      %p415 = scmp.lt.s32.totalorder %s412, 0
      %s416 = scalar_select %p415, %s412, 0
      %s417 = smul.addr %s414, 2
      %s418 = sadd.s32 %s416, %s417
      %s419 = smul.addr %s418, 4
      %s420 = scalar_lea.vmem %s0, %s419
      %s421 = ssub.s32 %s24, 1
      %p422 = scmp.gt.s32.totalorder %s421, 0
      %s423 = scalar_select %p422, %s421, 0
      %p424 = scmp.lt.s32.totalorder %s23, 1
      %s425 = scalar_select %p424, %s23, 1
      %p426 = scmp.lt.s32.totalorder %s24, 0
      %s427 = scalar_select %p426, %s24, 0
      %s428 = smul.addr %s425, 2
      %s429 = sadd.s32 %s427, %s428
      %s430 = smul.addr %s429, 4
      %s431 = scalar_lea.vmem %s1, %s430
      %s432 = sadd.s32 %s24, 1
      %p433 = scmp.lt.s32.totalorder %s432, 0
      %s434 = scalar_select %p433, %s432, 0
      %p435 = scmp.lt.s32.totalorder %s23, 1
      %s436 = scalar_select %p435, %s23, 1
      %p437 = scmp.lt.s32.totalorder %s434, 0
      %s438 = scalar_select %p437, %s434, 0
      %s439 = smul.addr %s436, 2
      %s440 = sadd.s32 %s438, %s439
      %s441 = smul.addr %s440, 4
      %s442 = scalar_lea.vmem %s2, %s441
      %s443 = sadd.s32 %s24, 1
      %p444 = scmp.lt.s32.totalorder %s443, 0
      %s445 = scalar_select %p444, %s443, 0
      %p446 = scmp.lt.s32.totalorder %s24, 0
      %s447 = scalar_select %p446, %s24, 0
      %s448 = smul.addr %s447, 2
      %s449 = scalar_lea.vmem %s3, %s448
      %p450 = scmp.lt.s32.totalorder %s23, 1
      %s451 = scalar_select %p450, %s23, 1
      %p452 = scmp.lt.s32.totalorder %s24, 0
      %s453 = scalar_select %p452, %s24, 0
      %s454 = smul.addr %s451, 8
      %s455 = sadd.s32 %s453, %s454
      %s456 = smul.addr %s455, 8
      %s457 = scalar_lea.vmem %s8, %s456
      %v461 = vld [vmem:[%s420] sm:$0xf]
      %v462 = vld [vmem:[%s420 + $0x4] sm:$0xf]
      %v463 = vld [vmem:[%s431] sm:$0xf]
      %v464 = vld [vmem:[%s431 + $0x4] sm:$0xf]
      %v465 = vld [vmem:[%s442] sm:$0xf]
      %v466 = vld [vmem:[%s442 + $0x4] sm:$0xf]
      %v469 = vunpack.c.l.b16 %v461
      %v470 = vunpack.c.l.b16 %v462
      %v471 = vpack.c.b16 %v470, %v469
      %v475 = vunpack.c.l.b16 %v463
      %v476 = vunpack.c.l.b16 %v464
      %v477 = vpack.c.b16 %v476, %v475
      %v481 = vunpack.c.l.b16 %v465
      %v482 = vunpack.c.l.b16 %v466
      %v483 = vpack.c.b16 %v482, %v481
      %v485 = vld [vmem:[%s449] sm:$0x1]
      %v486 = vld [vmem:[%s449 + $0x1] sm:$0x1]
      %v487 = vadd.s32 %v485, 4294967295
      %vm488 = vcmp.ge.s32.totalorder %v487, 0
      %vm489 = vcmp.lt.s32.totalorder %v487, 8
      %vm490 = vmand %vm488, %vm489
      %v491 = vadd.s32 %v486, 4294967295
      %vm492 = vcmp.ge.s32.totalorder %v491, 0
      %vm493 = vmand %vm490, %vm492
      %vm494 = vcmp.lt.s32.totalorder %v491, 8
      %vm495 = vmand %vm493, %vm494
      %v496 = vsel %vm495, 1, 0
      %v497 = vperm.slane %v496, 0
      %vm498 = vcmp.eq.s32.totalorder %v497, 1
      %vm499 = vmpackc.low %vm498, %vm498
      %v500 = vsel %vm499, 65537, 0
      %v501 = vperm.slane %v500, 0
      %502 = vrot.lane.b32.xlu0 %v501, 119
      %v503 = vpop.permute.xlu0 %502
      %v504 = vunpack.c.l.b16 %v503
      %v505 = vunpack.c.h.b16 %v503
      %v506 = vunpack.c.l.b16 0
      %v507 = vunpack.c.h.b16 0
      %vm508 = vcmp.ne.s32.totalorder %v504, %v506
      %vm509 = vcmp.ne.s32.totalorder %v505, %v507
      %vm510 = vmpackc.low %vm509, %vm508
      %v511 = vsel %vm510, %v471, 0
      %v512 = vsel %vm510, %v477, 0
      %v515 = vunpack.c.l.b16 %v511
      %v516 = vunpack.c.l.b16 %v512
      %v517 = vunpack.c.h.b16 %v511
      %v518 = vunpack.c.h.b16 %v512
      %v519 = vpack.c.b16 %v516, %v515
      %v520 = vpack.c.b16 %v518, %v517
      %521 = vrot.lane.b32.xlu0 %v519, 9
      %v522 = vpop.permute.xlu0 %521
      %523 = vrot.lane.b32.xlu0 %v520, 9
      %v524 = vpop.permute.xlu0 %523
      %v525 = vrot.slane %v522, 4
      %v526 = vrot.slane %v524, 4
      %vm527 = vcmask 72704
      %v528 = vsel %vm527, %v522, %v525
      %v529 = vsel %vm527, %v524, %v526
      %532 = vst [vmem:[#allocation2] sm:$0xf] %v528
      %533 = vst [vmem:[#allocation2 + $0x4] sm:$0xf] %v529
      %vm534 = vcmp.ge.s32.totalorder %v486, 0
      %vm535 = vmand %vm490, %vm534
      %vm536 = vcmp.lt.s32.totalorder %v486, 8
      %vm537 = vmand %vm535, %vm536
      %v538 = vsel %vm537, 1, 0
      %v539 = vperm.slane %v538, 0
      %vm540 = vcmp.eq.s32.totalorder %v539, 1
      %vm541 = vmpackc.low %vm540, %vm540
      %v542 = vsel %vm541, 65537, 0
      %v543 = vperm.slane %v542, 0
      %544 = vrot.lane.b32.xlu0 %v543, 120
      %v545 = vpop.permute.xlu0 %544
      %v546 = vunpack.c.l.b16 %v545
      %v547 = vunpack.c.h.b16 %v545
      %v548 = vunpack.c.l.b16 0
      %v549 = vunpack.c.h.b16 0
      %vm550 = vcmp.ne.s32.totalorder %v546, %v548
      %vm551 = vcmp.ne.s32.totalorder %v547, %v549
      %vm552 = vmpackc.low %vm551, %vm550
      %v553 = vsel %vm552, %v471, 0
      %v554 = vsel %vm552, %v477, 0
      %v557 = vunpack.c.l.b16 %v553
      %v558 = vunpack.c.l.b16 %v554
      %v559 = vunpack.c.h.b16 %v553
      %v560 = vunpack.c.h.b16 %v554
      %v561 = vpack.c.b16 %v558, %v557
      %v562 = vpack.c.b16 %v560, %v559
      %563 = vrot.lane.b32.xlu0 %v561, 8
      %v564 = vpop.permute.xlu0 %563
      %565 = vrot.lane.b32.xlu0 %v562, 8
      %v566 = vpop.permute.xlu0 %565
      %v567 = vrot.slane %v564, 4
      %v568 = vrot.slane %v566, 4
      %vm569 = vcmask 64512
      %v570 = vsel %vm569, %v564, %v567
      %v571 = vsel %vm569, %v566, %v568
      %574 = vst [vmem:[#allocation2 + $0x8] sm:$0xf] %v570
      %575 = vst [vmem:[#allocation2 + $0xc] sm:$0xf] %v571
      %v576 = vadd.s32 %v486, 1
      %vm577 = vcmp.ge.s32.totalorder %v576, 0
      %vm578 = vmand %vm490, %vm577
      %vm579 = vcmp.lt.s32.totalorder %v576, 8
      %vm580 = vmand %vm578, %vm579
      %v581 = vsel %vm580, 1, 0
      %v582 = vperm.slane %v581, 0
      %vm583 = vcmp.eq.s32.totalorder %v582, 1
      %vm584 = vmpackc.low %vm583, %vm583
      %v585 = vsel %vm584, 65537, 0
      %v586 = vperm.slane %v585, 0
      %587 = vrot.lane.b32.xlu0 %v586, 121
      %v588 = vpop.permute.xlu0 %587
      %v589 = vunpack.c.l.b16 %v588
      %v590 = vunpack.c.h.b16 %v588
      %v591 = vunpack.c.l.b16 0
      %v592 = vunpack.c.h.b16 0
      %vm593 = vcmp.ne.s32.totalorder %v589, %v591
      %vm594 = vcmp.ne.s32.totalorder %v590, %v592
      %vm595 = vmpackc.low %vm594, %vm593
      %v596 = vsel %vm595, %v471, 0
      %v597 = vsel %vm595, %v477, 0
      %v600 = vunpack.c.l.b16 %v596
      %v601 = vunpack.c.l.b16 %v597
      %v602 = vunpack.c.h.b16 %v596
      %v603 = vunpack.c.h.b16 %v597
      %v604 = vpack.c.b16 %v601, %v600
      %v605 = vpack.c.b16 %v603, %v602
      %606 = vrot.lane.b32.xlu0 %v604, 7
      %v607 = vpop.permute.xlu0 %606
      %608 = vrot.lane.b32.xlu0 %v605, 7
      %v609 = vpop.permute.xlu0 %608
      %v610 = vrot.slane %v607, 4
      %v611 = vrot.slane %v609, 4
      %vm612 = vcmask 56320
      %v613 = vsel %vm612, %v607, %v610
      %v614 = vsel %vm612, %v609, %v611
      %617 = vst [vmem:[#allocation2 + $0x10] sm:$0xf] %v613
      %618 = vst [vmem:[#allocation2 + $0x14] sm:$0xf] %v614
      %vm619 = vcmp.ge.s32.totalorder %v485, 0
      %vm620 = vcmp.lt.s32.totalorder %v485, 8
      %vm621 = vmand %vm619, %vm620
      %vm622 = vmand %vm621, %vm492
      %vm623 = vmand %vm622, %vm494
      %v624 = vsel %vm623, 1, 0
      %v625 = vperm.slane %v624, 0
      %vm626 = vcmp.eq.s32.totalorder %v625, 1
      %vm627 = vmpackc.low %vm626, %vm626
      %v628 = vsel %vm627, 65537, 0
      %v629 = vperm.slane %v628, 0
      %630 = vrot.lane.b32.xlu0 %v629, 127
      %v631 = vpop.permute.xlu0 %630
      %v632 = vunpack.c.l.b16 %v631
      %v633 = vunpack.c.h.b16 %v631
      %v634 = vunpack.c.l.b16 0
      %v635 = vunpack.c.h.b16 0
      %vm636 = vcmp.ne.s32.totalorder %v632, %v634
      %vm637 = vcmp.ne.s32.totalorder %v633, %v635
      %vm638 = vmpackc.low %vm637, %vm636
      %v639 = vsel %vm638, %v471, 0
      %v640 = vsel %vm638, %v477, 0
      %v643 = vunpack.c.l.b16 %v639
      %v644 = vunpack.c.l.b16 %v640
      %v645 = vunpack.c.h.b16 %v639
      %v646 = vunpack.c.h.b16 %v640
      %v647 = vpack.c.b16 %v644, %v643
      %v648 = vpack.c.b16 %v646, %v645
      %649 = vrot.lane.b32.xlu0 %v647, 1
      %v650 = vpop.permute.xlu0 %649
      %651 = vrot.lane.b32.xlu0 %v648, 1
      %v652 = vpop.permute.xlu0 %651
      %v653 = vrot.slane %v650, 4
      %v654 = vrot.slane %v652, 4
      %vm655 = vcmask 7168
      %v656 = vsel %vm655, %v650, %v653
      %v657 = vsel %vm655, %v652, %v654
      %660 = vst [vmem:[#allocation2 + $0x18] sm:$0xf] %v656
      %661 = vst [vmem:[#allocation2 + $0x1c] sm:$0xf] %v657
      %vm662 = vmand %vm621, %vm534
      %vm663 = vmand %vm662, %vm536
      %v664 = vsel %vm663, 1, 0
      %v665 = vperm.slane %v664, 0
      %vm666 = vcmp.eq.s32.totalorder %v665, 1
      %vm667 = vmpackc.low %vm666, %vm666
      %v668 = vsel %vm667, 65537, 0
      %v669 = vperm.slane %v668, 0
      %v670 = vunpack.c.l.b16 %v669
      %v671 = vunpack.c.h.b16 %v669
      %v672 = vunpack.c.l.b16 0
      %v673 = vunpack.c.h.b16 0
      %vm674 = vcmp.ne.s32.totalorder %v670, %v672
      %vm675 = vcmp.ne.s32.totalorder %v671, %v673
      %vm676 = vmpackc.low %vm675, %vm674
      %v677 = vsel %vm676, %v477, 0
      %v679 = vunpack.c.l.b16 %v677
      %v680 = vunpack.c.h.b16 %v677
      %v681 = vpack.c.b16 %v679, %v679
      %v682 = vpack.c.b16 %v680, %v680
      %685 = vst [vmem:[#allocation2 + $0x20] sm:$0xf] %v681
      %686 = vst [vmem:[#allocation2 + $0x24] sm:$0xf] %v682
      %vm687 = vmand %vm621, %vm577
      %vm688 = vmand %vm687, %vm579
      %v689 = vsel %vm688, 1, 0
      %v690 = vperm.slane %v689, 0
      %vm691 = vcmp.eq.s32.totalorder %v690, 1
      %vm692 = vmpackc.low %vm691, %vm691
      %v693 = vsel %vm692, 65537, 0
      %v694 = vperm.slane %v693, 0
      %695 = vrot.lane.b32.xlu0 %v694, 1
      %v696 = vpop.permute.xlu0 %695
      %v697 = vunpack.c.l.b16 %v696
      %v698 = vunpack.c.h.b16 %v696
      %v699 = vunpack.c.l.b16 0
      %v700 = vunpack.c.h.b16 0
      %vm701 = vcmp.ne.s32.totalorder %v697, %v699
      %vm702 = vcmp.ne.s32.totalorder %v698, %v700
      %vm703 = vmpackc.low %vm702, %vm701
      %v704 = vsel %vm703, %v477, 0
      %v705 = vsel %vm703, %v483, 0
      %v708 = vunpack.c.l.b16 %v704
      %v709 = vunpack.c.l.b16 %v705
      %v710 = vunpack.c.h.b16 %v704
      %v711 = vunpack.c.h.b16 %v705
      %v712 = vpack.c.b16 %v709, %v708
      %v713 = vpack.c.b16 %v711, %v710
      %714 = vrot.lane.b32.xlu0 %v712, 127
      %v715 = vpop.permute.xlu0 %714
      %716 = vrot.lane.b32.xlu0 %v713, 127
      %v717 = vpop.permute.xlu0 %716
      %v718 = vrot.slane %v715, 4
      %v719 = vrot.slane %v717, 4
      %vm720 = vcmask 1039360
      %v721 = vsel %vm720, %v715, %v718
      %v722 = vsel %vm720, %v717, %v719
      %725 = vst [vmem:[#allocation2 + $0x28] sm:$0xf] %v721
      %726 = vst [vmem:[#allocation2 + $0x2c] sm:$0xf] %v722
      %v727 = vadd.s32 %v485, 1
      %vm728 = vcmp.ge.s32.totalorder %v727, 0
      %vm729 = vcmp.lt.s32.totalorder %v727, 8
      %vm730 = vmand %vm728, %vm729
      %vm731 = vmand %vm730, %vm492
      %vm732 = vmand %vm731, %vm494
      %v733 = vsel %vm732, 1, 0
      %v734 = vperm.slane %v733, 0
      %vm735 = vcmp.eq.s32.totalorder %v734, 1
      %vm736 = vmpackc.low %vm735, %vm735
      %v737 = vsel %vm736, 65537, 0
      %v738 = vperm.slane %v737, 0
      %739 = vrot.lane.b32.xlu0 %v738, 7
      %v740 = vpop.permute.xlu0 %739
      %v741 = vunpack.c.l.b16 %v740
      %v742 = vunpack.c.h.b16 %v740
      %v743 = vunpack.c.l.b16 0
      %v744 = vunpack.c.h.b16 0
      %vm745 = vcmp.ne.s32.totalorder %v741, %v743
      %vm746 = vcmp.ne.s32.totalorder %v742, %v744
      %vm747 = vmpackc.low %vm746, %vm745
      %v748 = vsel %vm747, %v477, 0
      %v749 = vsel %vm747, %v483, 0
      %v752 = vunpack.c.l.b16 %v748
      %v753 = vunpack.c.l.b16 %v749
      %v754 = vunpack.c.h.b16 %v748
      %v755 = vunpack.c.h.b16 %v749
      %v756 = vpack.c.b16 %v753, %v752
      %v757 = vpack.c.b16 %v755, %v754
      %758 = vrot.lane.b32.xlu0 %v756, 121
      %v759 = vpop.permute.xlu0 %758
      %760 = vrot.lane.b32.xlu0 %v757, 121
      %v761 = vpop.permute.xlu0 %760
      %v762 = vrot.slane %v759, 4
      %v763 = vrot.slane %v761, 4
      %vm764 = vcmask 990208
      %v765 = vsel %vm764, %v759, %v762
      %v766 = vsel %vm764, %v761, %v763
      %769 = vst [vmem:[#allocation2 + $0x30] sm:$0xf] %v765
      %770 = vst [vmem:[#allocation2 + $0x34] sm:$0xf] %v766
      %vm771 = vmand %vm730, %vm534
      %vm772 = vmand %vm771, %vm536
      %v773 = vsel %vm772, 1, 0
      %v774 = vperm.slane %v773, 0
      %vm775 = vcmp.eq.s32.totalorder %v774, 1
      %vm776 = vmpackc.low %vm775, %vm775
      %v777 = vsel %vm776, 65537, 0
      %v778 = vperm.slane %v777, 0
      %779 = vrot.lane.b32.xlu0 %v778, 8
      %v780 = vpop.permute.xlu0 %779
      %v781 = vunpack.c.l.b16 %v780
      %v782 = vunpack.c.h.b16 %v780
      %v783 = vunpack.c.l.b16 0
      %v784 = vunpack.c.h.b16 0
      %vm785 = vcmp.ne.s32.totalorder %v781, %v783
      %vm786 = vcmp.ne.s32.totalorder %v782, %v784
      %vm787 = vmpackc.low %vm786, %vm785
      %v788 = vsel %vm787, %v477, 0
      %v789 = vsel %vm787, %v483, 0
      %v792 = vunpack.c.l.b16 %v788
      %v793 = vunpack.c.l.b16 %v789
      %v794 = vunpack.c.h.b16 %v788
      %v795 = vunpack.c.h.b16 %v789
      %v796 = vpack.c.b16 %v793, %v792
      %v797 = vpack.c.b16 %v795, %v794
      %798 = vrot.lane.b32.xlu0 %v796, 120
      %v799 = vpop.permute.xlu0 %798
      %800 = vrot.lane.b32.xlu0 %v797, 120
      %v801 = vpop.permute.xlu0 %800
      %v802 = vrot.slane %v799, 4
      %v803 = vrot.slane %v801, 4
      %vm804 = vcmask 982016
      %v805 = vsel %vm804, %v799, %v802
      %v806 = vsel %vm804, %v801, %v803
      %809 = vst [vmem:[#allocation2 + $0x38] sm:$0xf] %v805
      %810 = vst [vmem:[#allocation2 + $0x3c] sm:$0xf] %v806
      %vm811 = vmand %vm730, %vm577
      %vm812 = vmand %vm811, %vm579
      %v813 = vsel %vm812, 1, 0
      %v814 = vperm.slane %v813, 0
      %vm815 = vcmp.eq.s32.totalorder %v814, 1
      %vm816 = vmpackc.low %vm815, %vm815
      %v817 = vsel %vm816, 65537, 0
      %v818 = vperm.slane %v817, 0
      %819 = vrot.lane.b32.xlu0 %v818, 9
      %v820 = vpop.permute.xlu0 %819
      %v821 = vunpack.c.l.b16 %v820
      %v822 = vunpack.c.h.b16 %v820
      %v823 = vunpack.c.l.b16 0
      %v824 = vunpack.c.h.b16 0
      %vm825 = vcmp.ne.s32.totalorder %v821, %v823
      %vm826 = vcmp.ne.s32.totalorder %v822, %v824
      %vm827 = vmpackc.low %vm826, %vm825
      %v828 = vsel %vm827, %v477, 0
      %v829 = vsel %vm827, %v483, 0
      %v832 = vunpack.c.l.b16 %v828
      %v833 = vunpack.c.l.b16 %v829
      %v834 = vunpack.c.h.b16 %v828
      %v835 = vunpack.c.h.b16 %v829
      %v836 = vpack.c.b16 %v833, %v832
      %v837 = vpack.c.b16 %v835, %v834
      %838 = vrot.lane.b32.xlu0 %v836, 119
      %v839 = vpop.permute.xlu0 %838
      %840 = vrot.lane.b32.xlu0 %v837, 119
      %v841 = vpop.permute.xlu0 %840
      %v842 = vrot.slane %v839, 4
      %v843 = vrot.slane %v841, 4
      %vm844 = vcmask 973824
      %v845 = vsel %vm844, %v839, %v842
      %v846 = vsel %vm844, %v841, %v843
      %849 = vst [vmem:[#allocation2 + $0x40] sm:$0xf] %v845
      %850 = vst [vmem:[#allocation2 + $0x44] sm:$0xf] %v846
      %v851 = vld [vmem:[%s4] sm:$0xff]
      %v852 = vld [vmem:[%s4 + $0x8] sm:$0xff]
      %v853 = vld [vmem:[%s4 + $0x10] sm:$0xff]
      %v854 = vld [vmem:[%s4 + $0x18] sm:$0xff]
      %v855 = vld [vmem:[#allocation2] sm:$0xf]
      %v856 = vld [vmem:[#allocation2 + $0x4] sm:$0xf]
      %v857 = vld [vmem:[#allocation2 + $0x8] sm:$0xf]
      %v858 = vld [vmem:[#allocation2 + $0xc] sm:$0xf]
      %v859 = vld [vmem:[#allocation2 + $0x10] sm:$0xf]
      %v860 = vld [vmem:[#allocation2 + $0x14] sm:$0xf]
      %v861 = vld [vmem:[#allocation2 + $0x18] sm:$0xf]
      %v862 = vld [vmem:[#allocation2 + $0x1c] sm:$0xf]
      %v863 = vld [vmem:[#allocation2 + $0x20] sm:$0xf]
      %v864 = vld [vmem:[#allocation2 + $0x24] sm:$0xf]
      %v865 = vld [vmem:[#allocation2 + $0x28] sm:$0xf]
      %v866 = vld [vmem:[#allocation2 + $0x2c] sm:$0xf]
      %v867 = vld [vmem:[#allocation2 + $0x30] sm:$0xf]
      %v868 = vld [vmem:[#allocation2 + $0x34] sm:$0xf]
      %v869 = vld [vmem:[#allocation2 + $0x38] sm:$0xf]
      %v870 = vld [vmem:[#allocation2 + $0x3c] sm:$0xf]
      %v871 = vld [vmem:[#allocation2 + $0x40] sm:$0xf]
      %v872 = vld [vmem:[#allocation2 + $0x44] sm:$0xf]
      %v873 = vld [vmem:[%s5] sm:$0xff]
      %v874 = vld [vmem:[%s5 + $0x8] sm:$0xff]
      %v875 = vld [vmem:[%s5 + $0x10] sm:$0xff]
      %v876 = vld [vmem:[%s5 + $0x18] sm:$0xff]
      %878 = vset.pattern.permute.xlu0 0
      %879 = vperm.xlu0 %878, %v873
      %v880 = vpop.permute.xlu0 %879
      %883 = vset.pattern.permute.xlu0 0
      %884 = vperm.xlu0 %883, %v874
      %v885 = vpop.permute.xlu0 %884
      %888 = vset.pattern.permute.xlu0 0
      %889 = vperm.xlu0 %888, %v875
      %v890 = vpop.permute.xlu0 %889
      %893 = vset.pattern.permute.xlu0 0
      %894 = vperm.xlu0 %893, %v876
      %v895 = vpop.permute.xlu0 %894
      %v901 = vunpack.c.l.b16 %v851
      %v902 = vunpack.c.h.b16 %v851
      %v903 = vunpack.c.l.b16 %v852
      %v904 = vunpack.c.h.b16 %v852
      %v905 = vunpack.c.l.b16 %v853
      %v906 = vunpack.c.h.b16 %v853
      %v907 = vunpack.c.l.b16 %v854
      %v908 = vunpack.c.h.b16 %v854
      %v909 = vpack.c.b16 %v903, %v901
      %v910 = vpack.c.b16 %v904, %v902
      %v911 = vpack.c.b16 %v907, %v905
      %v912 = vpack.c.b16 %v908, %v906
      %v933 = vunpack.c.l.b16 %v855
      %v934 = vunpack.c.l.b16 %v856
      %v935 = vunpack.c.l.b16 %v857
      %v936 = vunpack.c.l.b16 %v858
      %v937 = vunpack.c.l.b16 %v859
      %v938 = vunpack.c.l.b16 %v860
      %v939 = vunpack.c.l.b16 %v861
      %v940 = vunpack.c.l.b16 %v862
      %v941 = vunpack.c.l.b16 %v863
      %v942 = vunpack.c.l.b16 %v864
      %v943 = vunpack.c.l.b16 %v865
      %v944 = vunpack.c.l.b16 %v866
      %v945 = vunpack.c.l.b16 %v867
      %v946 = vunpack.c.l.b16 %v868
      %v947 = vunpack.c.l.b16 %v869
      %v948 = vunpack.c.l.b16 %v870
      %v949 = vunpack.c.l.b16 %v871
      %v950 = vunpack.c.l.b16 %v872
      %v951 = vpack.c.b16 %v934, %v933
      %v952 = vpack.c.b16 %v936, %v935
      %v953 = vpack.c.b16 %v938, %v937
      %v954 = vpack.c.b16 %v940, %v939
      %v955 = vpack.c.b16 %v942, %v941
      %v956 = vpack.c.b16 %v944, %v943
      %v957 = vpack.c.b16 %v946, %v945
      %v958 = vpack.c.b16 %v948, %v947
      %v959 = vpack.c.b16 %v950, %v949
      %vm969 = vcmask 130048
      %v971 = vsel %vm969, %v910, 0
      %v974 = vsel %vm969, %v912, 0
      %976 = vmatpush.bf16.msra.mxu0 %v958
      %977 = vmatpush.bf16.msra.mxu0 %v957
      %978 = vmatpush.bf16.msra.mxu0 %v956
      %979 = vmatpush.bf16.msra.mxu0 %v955
      %980 = vmatpush.bf16.msra.mxu0 %v954
      %981 = vmatpush.bf16.msra.mxu0 %v953
      %982 = vmatpush.bf16.msra.mxu0 %v952
      %983 = vmatpush.bf16.msra.mxu0 %v951
      %984 = vmatmul.bf16.gmra.mxu0 %v909
      %v985 = vpop.f32.mrf.mxu0
      %v986 = vadd.f32 %v880, %v985
      %v987 = vpop.f32.mrf.mxu0
      %v988 = vadd.f32 %v885, %v987
      %989 = vmatmul.bf16.gmra.mxu0 %v911
      %v990 = vpop.f32.mrf.mxu0
      %v991 = vadd.f32 %v890, %v990
      %v992 = vpop.f32.mrf.mxu0
      %v993 = vadd.f32 %v895, %v992
      %994 = vdwg.mxu0
      %995 = vmatpush.bf16.msra.mxu0 0
      %996 = vmatpush.bf16.msra.mxu0 0
      %997 = vmatpush.bf16.msra.mxu0 0
      %998 = vmatpush.bf16.msra.mxu0 0
      %999 = vmatpush.bf16.msra.mxu0 0
      %1000 = vmatpush.bf16.msra.mxu0 0
      %1001 = vmatpush.bf16.msra.mxu0 0
      %1002 = vmatpush.bf16.msra.mxu0 %v959
      %1003 = vmatmul.bf16.gmra.mxu0 %v971
      %v1004 = vpop.f32.mrf.mxu0
      %v1005 = vadd.f32 %v986, %v1004
      %v1006 = vpop.f32.mrf.mxu0
      %v1007 = vadd.f32 %v988, %v1006
      %1008 = vmatmul.bf16.gmra.mxu0 %v974
      %v1009 = vpop.f32.mrf.mxu0
      %v1010 = vadd.f32 %v991, %v1009
      %v1011 = vpop.f32.mrf.mxu0
      %v1012 = vadd.f32 %v993, %v1011
      %1013 = vdwg.mxu0
      %v1014 = vmax.f32 %v1005, 0.0
      %v1015 = vmax.f32 %v1007, 0.0
      %v1016 = vmax.f32 %v1010, 0.0
      %v1017 = vmax.f32 %v1012, 0.0
      %v1018 = vld [vmem:[%s6] sm:$0xf]
      %v1019 = vld [vmem:[%s6 + $0x4] sm:$0xf]
      %v1020 = vld [vmem:[%s6 + $0x8] sm:$0xf]
      %v1021 = vld [vmem:[%s6 + $0xc] sm:$0xf]
      %v1022 = vld [vmem:[%s6 + $0x10] sm:$0xf]
      %v1023 = vld [vmem:[%s6 + $0x14] sm:$0xf]
      %v1024 = vld [vmem:[%s6 + $0x18] sm:$0xf]
      %v1025 = vld [vmem:[%s6 + $0x1c] sm:$0xf]
      %v1026 = vpack.c.bf16 %v1015, %v1014
      %v1027 = vpack.c.bf16 %v1017, %v1016
      %v1028 = vld [vmem:[%s7] sm:$0xff]
      %v1029 = vld [vmem:[%s7 + $0x8] sm:$0xff]
      %v1030 = vld [vmem:[%s7 + $0x10] sm:$0xff]
      %v1031 = vld [vmem:[%s7 + $0x18] sm:$0xff]
      %v1032 = vld [vmem:[%s7 + $0x20] sm:$0xff]
      %v1033 = vld [vmem:[%s7 + $0x28] sm:$0xff]
      %v1034 = vld [vmem:[%s7 + $0x30] sm:$0xff]
      %v1035 = vld [vmem:[%s7 + $0x38] sm:$0xff]
      %1037 = vset.pattern.permute.xlu0 0
      %1038 = vperm.xlu0 %1037, %v1028
      %v1039 = vpop.permute.xlu0 %1038
      %1042 = vset.pattern.permute.xlu0 0
      %1043 = vperm.xlu0 %1042, %v1029
      %v1044 = vpop.permute.xlu0 %1043
      %1047 = vset.pattern.permute.xlu0 0
      %1048 = vperm.xlu0 %1047, %v1030
      %v1049 = vpop.permute.xlu0 %1048
      %1052 = vset.pattern.permute.xlu0 0
      %1053 = vperm.xlu0 %1052, %v1031
      %v1054 = vpop.permute.xlu0 %1053
      %1057 = vset.pattern.permute.xlu0 0
      %1058 = vperm.xlu0 %1057, %v1032
      %v1059 = vpop.permute.xlu0 %1058
      %1062 = vset.pattern.permute.xlu0 0
      %1063 = vperm.xlu0 %1062, %v1033
      %v1064 = vpop.permute.xlu0 %1063
      %1067 = vset.pattern.permute.xlu0 0
      %1068 = vperm.xlu0 %1067, %v1034
      %v1069 = vpop.permute.xlu0 %1068
      %1072 = vset.pattern.permute.xlu0 0
      %1073 = vperm.xlu0 %1072, %v1035
      %v1074 = vpop.permute.xlu0 %1073
      %v1084 = vunpack.c.l.b16 %v1018
      %v1085 = vunpack.c.l.b16 %v1019
      %v1086 = vunpack.c.l.b16 %v1020
      %v1087 = vunpack.c.l.b16 %v1021
      %v1088 = vunpack.c.l.b16 %v1022
      %v1089 = vunpack.c.l.b16 %v1023
      %v1090 = vunpack.c.l.b16 %v1024
      %v1091 = vunpack.c.l.b16 %v1025
      %v1092 = vpack.c.b16 %v1085, %v1084
      %v1093 = vpack.c.b16 %v1087, %v1086
      %v1094 = vpack.c.b16 %v1089, %v1088
      %v1095 = vpack.c.b16 %v1091, %v1090
      %vm1096 = vcmask 261120
      %v1098 = vsel %vm1096, %v1092, 0
      %v1101 = vsel %vm1096, %v1093, 0
      %v1104 = vsel %vm1096, %v1094, 0
      %v1107 = vsel %vm1096, %v1095, 0
      %1109 = vmatpush.bf16.msra.mxu0 0
      %1110 = vmatpush.bf16.msra.mxu0 0
      %1111 = vmatpush.bf16.msra.mxu0 0
      %1112 = vmatpush.bf16.msra.mxu0 0
      %1113 = vmatpush.bf16.msra.mxu0 0
      %1114 = vmatpush.bf16.msra.mxu0 0
      %1115 = vmatpush.bf16.msra.mxu0 %v1027
      %1116 = vmatpush.bf16.msra.mxu0 %v1026
      %1117 = vmatmul.bf16.gmra.mxu0 %v1098
      %v1118 = vpop.f32.mrf.mxu0
      %v1119 = vadd.f32 %v1039, %v1118
      %v1120 = vpop.f32.mrf.mxu0
      %v1121 = vadd.f32 %v1044, %v1120
      %1122 = vmatmul.bf16.gmra.mxu0 %v1101
      %v1123 = vpop.f32.mrf.mxu0
      %v1124 = vadd.f32 %v1049, %v1123
      %v1125 = vpop.f32.mrf.mxu0
      %v1126 = vadd.f32 %v1054, %v1125
      %1127 = vmatmul.bf16.gmra.mxu0 %v1104
      %v1128 = vpop.f32.mrf.mxu0
      %v1129 = vadd.f32 %v1059, %v1128
      %v1130 = vpop.f32.mrf.mxu0
      %v1131 = vadd.f32 %v1064, %v1130
      %1132 = vmatmul.bf16.gmra.mxu0 %v1107
      %v1133 = vpop.f32.mrf.mxu0
      %v1134 = vadd.f32 %v1069, %v1133
      %v1135 = vpop.f32.mrf.mxu0
      %v1136 = vadd.f32 %v1074, %v1135
      %1137 = vdwg.mxu0
      %1138 = vst [vmem:[%s457] sm:$0xff] %v1119
      %1139 = vst [vmem:[%s457 + $0x8] sm:$0xff] %v1121
      %1140 = vst [vmem:[%s457 + $0x10] sm:$0xff] %v1124
      %1141 = vst [vmem:[%s457 + $0x18] sm:$0xff] %v1126
      %1142 = vst [vmem:[%s457 + $0x20] sm:$0xff] %v1129
      %1143 = vst [vmem:[%s457 + $0x28] sm:$0xff] %v1131
      %1144 = vst [vmem:[%s457 + $0x30] sm:$0xff] %v1134
      %1145 = vst [vmem:[%s457 + $0x38] sm:$0xff] %v1136
      %p1146 = scmp.lt.s32.totalorder %s23, 1
      %s1147 = scalar_select %p1146, %s23, 1
      %p1148 = scmp.lt.s32.totalorder %s24, 0
      %s1149 = scalar_select %p1148, %s24, 0
      %s1150 = smul.addr %s1147, 8
      %s1151 = sadd.s32 %s1149, %s1150
      %s1152 = smul.addr %s1151, 8
      %s1153 = scalar_lea.vmem %s8, %s1152
      // Predicated region
      $region53: #{_forward_impl.3} parent=51 // pred_check
        %p1154 = pneg %p257
      $region54: #{_forward_impl.3} parent=51 // pred_check_branch
        %1156 = sbr.rel (%p1154) target = $region56
      $region55: #{_forward_impl.3} parent=51 // pred_region
        _
      $region56: #{_forward_impl.3} parent=51 // pred_fallthru
        _
    $region52: #{_forward_impl.3} parent=5 // pred_fallthru
      _
    %p1157 = scmp.le.s32.totalorder 2, %s14
    // Predicated region
    $region57: #{_forward_impl.3} parent=5 // pred_check
      %p1158 = pneg %p1157
    $region58: #{_forward_impl.3} parent=5 // pred_check_branch
      %1160 = sbr.rel (%p1158) target = $region60
    $region59: #{_forward_impl.3} parent=5 // pred_region
      %s1161 = ssub.s32 %s14, 2
      // Predicated region
      $region61: #{_forward_impl.3} parent=59 // pred_check
        %p1162 = pneg %p263
      $region62: #{_forward_impl.3} parent=59 // pred_check_branch
        %1164 = sbr.rel (%p1162) target = $region64
      $region63: #{_forward_impl.3} parent=59 // pred_region
        %p1165 = scmp.lt.s32.totalorder %s25, 1
        %s1166 = scalar_select %p1165, %s25, 1
        %p1167 = scmp.lt.s32.totalorder %s26, 0
        %s1168 = scalar_select %p1167, %s26, 0
        %s1169 = smul.addr %s1166, 8
        %s1170 = sadd.s32 %s1168, %s1169
        %s1171 = smul.addr %s1170, 8
        %s1172 = scalar_lea.vmem %s8, %s1171
      $region64: #{_forward_impl.3} parent=59 // pred_fallthru
        _
    $region60: #{_forward_impl.3} parent=5 // pred_fallthru
      _
  $region6: #{_forward_impl.3} parent=0 // loop_footer
    %s18 = sadd.s32 1, %s14
  $region7: #{_forward_impl.3} parent=0 // loop_footer_branch
    %13 = sbr.rel target = $region3
  $region8: #{_forward_impl.3} parent=0 // loop_exit
    _

</llo_original>
